<compile_context>
chip_gen: v5e
topology: v5e:2x2
jax: 0.10.0
libtpu: 0.0.40
codegen_flags: <defaults>
</compile_context>

<pallas_src>
import math
import functools

import jax
import jax.numpy as jnp
from jax.experimental import pallas as pl
from jax.experimental.pallas import tpu as pltpu


_LAPLACE_MU = 0.707107
_LAPLACE_SIGMA = 0.282095
_NEG_BIAS = -1.0e4            # laplace(x) -> 0 ; representable in bf16


# ----------------------------------------------------------------------------
# helpers
# ----------------------------------------------------------------------------

def _round_up(x, m):
    return ((x + m - 1) // m) * m


def _layernorm(x, g, b):
    mu = jnp.mean(x, axis=-1, keepdims=True)
    var = jnp.mean(jnp.square(x - mu), axis=-1, keepdims=True)
    return (x - mu) * jax.lax.rsqrt(var + 1e-5) * g + b


def _erf_approx(x):
    # Abramowitz-Stegun 7.1.26 (|err| < 1.5e-7); exact divide (EUP) for accuracy.
    a1, a2, a3, a4, a5 = (0.254829592, -0.284496736, 1.421413741,
                          -1.453152027, 1.061405429)
    p = 0.3275911
    s = jnp.where(x >= 0.0, 1.0, -1.0)
    ax = jnp.abs(x)
    t = 1.0 / (1.0 + p * ax)
    poly = ((((a5 * t + a4) * t + a3) * t + a2) * t + a1) * t
    return s * (1.0 - poly * jnp.exp(-ax * ax))


def _probe_single_buffering():
    """pipeline_mode=pl.Buffered(1) lets grid-constant operands (weights)
    be single-buffered, halving their VMEM.  Probe once; fall back cleanly
    if this Pallas build rejects it."""
    try:
        def k(x_ref, o_ref):
            o_ref[...] = x_ref[...] + 1.0
        spec = pl.BlockSpec((8, 128), lambda i: (0, 0),
                            pipeline_mode=pl.Buffered(1))
        f = pl.pallas_call(
            k, out_shape=jax.ShapeDtypeStruct((8, 128), jnp.float32),
            grid=(1,), in_specs=[spec],
            out_specs=pl.BlockSpec((8, 128), lambda i: (0, 0)))
        out = jax.block_until_ready(f(jnp.zeros((8, 128), jnp.float32)))
        return bool(jnp.all(out == 1.0))
    except Exception:
        return False


_SINGLE_BUF = _probe_single_buffering()


def _const_spec(shape):
    """BlockSpec for a grid-constant operand (weights / biases / tables)."""
    index_map = lambda *_: (0,) * len(shape)
    if _SINGLE_BUF:
        return pl.BlockSpec(shape, index_map, pipeline_mode=pl.Buffered(1))
    return pl.BlockSpec(shape, index_map)


# ----------------------------------------------------------------------------
# row-tiled matmul kernels (patch embed, final norm + out_proj)
# ----------------------------------------------------------------------------

def _matmul_bias_kernel(x_ref, w_ref, b_ref, o_ref):
    y = jnp.dot(x_ref[...].astype(jnp.bfloat16), w_ref[...],
                preferred_element_type=jnp.float32) + b_ref[...]
    o_ref[...] = y.astype(o_ref.dtype)


def _ln_proj_silu_kernel(x_ref, g_ref, b_ref, w_ref, bw_ref, o_ref):
    x = x_ref[...].astype(jnp.float32)
    xn = _layernorm(x, g_ref[...], b_ref[...])
    y = jnp.dot(xn.astype(jnp.bfloat16), w_ref[...],
                preferred_element_type=jnp.float32) + bw_ref[...]
    o_ref[...] = (y * jax.nn.sigmoid(y)).astype(o_ref.dtype)


def _row_tile(M):
    # 256-row tiles fill the 256x256 MXU on v6e / v7x; v5e's 4x128x128 MXUs
    # are already full at 128, 256 is merely neutral at these weight sizes.
    if M >= 256:
        return 256
    return _round_up(max(M, 8), 8)


def _pad_rows(x2, tile):
    M = x2.shape[0]
    Mp = _round_up(M, tile)
    if Mp != M:
        x2 = jnp.pad(x2, ((0, Mp - M), (0, 0)))
    return x2


def linear_rows(x2, w, b, out_dtype=jnp.float32):
    M0, K = x2.shape
    N = w.shape[1]
    tile = _row_tile(M0)
    x2 = _pad_rows(x2, tile)
    M = x2.shape[0]
    y = pl.pallas_call(
        _matmul_bias_kernel,
        out_shape=jax.ShapeDtypeStruct((M, N), out_dtype),
        grid=(M // tile,),
        in_specs=[pl.BlockSpec((tile, K), lambda i: (i, 0)),
                  _const_spec((K, N)), _const_spec((1, N))],
        out_specs=pl.BlockSpec((tile, N), lambda i: (i, 0)),
        compiler_params=pltpu.CompilerParams(
            dimension_semantics=("parallel",),
            vmem_limit_bytes=32 * 1024 * 1024),
    )(x2, w, b.reshape(1, N))
    return y[:M0]


def ln_proj_silu(x2, g, b, w, bw, out_dtype=jnp.float32):
    M0, D = x2.shape
    N = w.shape[1]
    tile = _row_tile(M0)
    x2 = _pad_rows(x2, tile)
    M = x2.shape[0]
    y = pl.pallas_call(
        _ln_proj_silu_kernel,
        out_shape=jax.ShapeDtypeStruct((M, N), out_dtype),
        grid=(M // tile,),
        in_specs=[pl.BlockSpec((tile, D), lambda i: (i, 0)),
                  _const_spec((1, D)), _const_spec((1, D)),
                  _const_spec((D, N)), _const_spec((1, N))],
        out_specs=pl.BlockSpec((tile, N), lambda i: (i, 0)),
        compiler_params=pltpu.CompilerParams(
            dimension_semantics=("parallel",),
            vmem_limit_bytes=32 * 1024 * 1024),
    )(x2, g.reshape(1, D), b.reshape(1, D), w, bw.reshape(1, N))
    return y[:M0]


# ----------------------------------------------------------------------------
# fused MEGA layer kernel (gated attention + NFFN), one batch element / step
# ----------------------------------------------------------------------------

def _mega_layer_kernel(x_ref, mx_ref, lng_ref, lnb_ref,
                       vw_ref, vb_ref, uw_ref, ub_ref, zw_ref, zb_ref,
                       rw_ref, rb_ref, hxw_ref, hxb_ref,
                       gam_ref, bet_ref, hw_ref, hb_ref, bias_ref,
                       fng_ref, fnb_ref, w1_ref, b1_ref, w2_ref, b2_ref,
                       o_ref):
    """MovingAverageGatedAttention + NFFN (both prenorm) for one batch
    element.  The EMA gate silu(conv + xn*omega) arrives precomputed as
    mx_ref; everything else stays in VMEM."""
    f32 = jnp.float32
    bf16 = jnp.bfloat16

    x = x_ref[0].astype(f32)                                   # (L, D) residual
    xn = _layernorm(x, lng_ref[...], lnb_ref[...])
    xnb = xn.astype(bf16)
    mxb = mx_ref[0]                                            # (L, D) bf16

    # value projection (silu)
    v = jnp.dot(xnb, vw_ref[...], preferred_element_type=f32) + vb_ref[...]
    v = v * jax.nn.sigmoid(v)                                  # (L, H)

    # mx projection, pre-split into lane-dense chunks: u | z | r | hx
    # TODO(synk): on v6e/v7x the sigmoid/silu chains feeding bf16 matmul
    # operands could run in bf16 (not on v5e: no bf16 VPU/EUP).
    u = jax.nn.sigmoid(
        jnp.dot(mxb, uw_ref[...], preferred_element_type=f32) + ub_ref[...])
    z = jnp.dot(mxb, zw_ref[...], preferred_element_type=f32) + zb_ref[...]
    z = z * jax.nn.sigmoid(z)                                  # (L, Z)
    r = jnp.dot(mxb, rw_ref[...], preferred_element_type=f32) + rb_ref[...]
    r = r * jax.nn.sigmoid(r)                                  # (L, H)
    hx = jnp.dot(mxb, hxw_ref[...], preferred_element_type=f32) + hxb_ref[...]

    # laplace attention; 1/(L*sigma*sqrt2) is folded into gamma/beta row 0,
    # (bias - mu)/(sigma*sqrt2) is precomputed (and masks padded key columns).
    q = z * gam_ref[0:1, :] + bet_ref[0:1, :]
    k = z * gam_ref[1:2, :] + bet_ref[1:2, :]
    qk = jax.lax.dot_general(q.astype(bf16), k.astype(bf16),
                             (((1,), (1,)), ((), ())),
                             preferred_element_type=f32)       # (L, L)
    attn = 0.5 * (1.0 + _erf_approx(qk + bias_ref[...].astype(f32)))

    h = jnp.dot(attn.astype(bf16), v.astype(bf16),
                preferred_element_type=f32)                    # (L, H)
    h = jnp.dot((h * r).astype(bf16), hw_ref[...],
                preferred_element_type=f32) + hb_ref[...]      # (L, D)
    h = hx + h
    h = h * jax.nn.sigmoid(h)
    y = x + u * (h - x)                                        # torch.addcmul

    # fused NFFN (prenorm): y + fc2(silu(fc1(LN(y))))
    yn = _layernorm(y, fng_ref[...], fnb_ref[...])
    t = jnp.dot(yn.astype(bf16), w1_ref[...],
                preferred_element_type=f32) + b1_ref[...]
    t = t * jax.nn.sigmoid(t)
    ff = jnp.dot(t.astype(bf16), w2_ref[...],
                 preferred_element_type=f32) + b2_ref[...]
    o_ref[0] = (y + ff).astype(o_ref.dtype)


def mega_layer(x, mx, bias, qg, qb, p, cfg):
    """Fused MEGA gated-attention + NFFN layer.  x, mx: (B, Lp, D) bf16."""
    B, Lp, D = x.shape
    Z, H, F_ = cfg["zdim"], cfg["hdim"], cfg["ffn_dim"]
    blk = lambda b: (b, 0, 0)
    in_specs = [
        pl.BlockSpec((1, Lp, D), blk),                        # x (residual)
        pl.BlockSpec((1, Lp, D), blk),                        # mx (EMA gate)
        _const_spec((1, D)), _const_spec((1, D)),             # attn LN g/b
        _const_spec((D, H)), _const_spec((1, H)),             # v proj
        _const_spec((D, D)), _const_spec((1, D)),             # u proj
        _const_spec((D, Z)), _const_spec((1, Z)),             # z proj
        _const_spec((D, H)), _const_spec((1, H)),             # r proj
        _const_spec((D, D)), _const_spec((1, D)),             # hx proj
        _const_spec((2, Z)), _const_spec((2, Z)),             # qk gamma/beta (pre-scaled)
        _const_spec((H, D)), _const_spec((1, D)),             # h proj
        _const_spec((Lp, Lp)),                                # laplace-shifted bias
        _const_spec((1, D)), _const_spec((1, D)),             # ffn LN g/b
        _const_spec((D, F_)), _const_spec((1, F_)),           # fc1
        _const_spec((F_, D)), _const_spec((1, D)),            # fc2
    ]
    # TODO(synk): on v7x with B == 1 add a second parallel grid axis (or a
    # tensorcore core_map) so both TensorCores get work.
    return pl.pallas_call(
        _mega_layer_kernel,
        out_shape=jax.ShapeDtypeStruct((B, Lp, D), jnp.bfloat16),
        grid=(B,),
        in_specs=in_specs,
        out_specs=pl.BlockSpec((1, Lp, D), blk),
        compiler_params=pltpu.CompilerParams(
            dimension_semantics=("parallel",),
            vmem_limit_bytes=48 * 1024 * 1024),
    )(x, mx,
      p["attn_ln_g"].reshape(1, D), p["attn_ln_b"].reshape(1, D),
      p["v_w"], p["v_b"].reshape(1, H),
      p["u_w"], p["u_b"].reshape(1, D),
      p["z_w"], p["z_b"].reshape(1, Z),
      p["r_w"], p["r_b"].reshape(1, H),
      p["hx_w"], p["hx_b"].reshape(1, D),
      qg, qb,
      p["h_w"], p["h_b"].reshape(1, D),
      bias,
      p["ffn_ln_g"].reshape(1, D), p["ffn_ln_b"].reshape(1, D),
      p["fc1_w"], p["fc1_b"].reshape(1, F_),
      p["fc2_w"], p["fc2_b"].reshape(1, D))


# ----------------------------------------------------------------------------
# XLA-side per-layer prep: bidirectional multi-head EMA as an FFT conv
# ----------------------------------------------------------------------------

def ema_gate(x, p, cfg, row_mask):
    """LayerNorm + bidirectional multi-head EMA as an FFT linear convolution
    (O(D*L*logL), plain XLA per the perf review) + omega residual + silu.
    Returns the mx_proj input, (B, Lp, D) bf16."""
    B, Lp, D = x.shape
    N = cfg["ndim"]
    xf = x.astype(jnp.float32)
    xn = _layernorm(xf, p["attn_ln_g"].reshape(1, 1, D),
                    p["attn_ln_b"].reshape(1, 1, D))
    xn = xn * row_mask[None, :, None]        # zero padded tokens before the conv

    # EMA kernels (2D channels: fwd | bwd), length Lp (extra taps hit zeros).
    pc = jax.nn.sigmoid(p["ema_delta"])                                  # (2D,N,1)
    al = jax.nn.sigmoid(p["ema_alpha"])
    qd = 1.0 - pc * al
    vander = jnp.arange(Lp, dtype=jnp.float32)[None, None, :] * jnp.log(qd)
    kern = (pc * p["ema_beta"]) * jnp.exp(vander)                        # (2D,N,Lp)
    scale = math.sqrt(1.0 / N)
    kk = jnp.einsum("dnl,dn->dl", kern, p["ema_gamma"] * scale)          # (2D, Lp)
    k1, k2 = kk[:D], kk[D:]                              # causal / anti-causal

    n = 2 * Lp
    xt = jnp.transpose(xn, (0, 2, 1))                                    # (B,D,Lp)
    x_f = jnp.fft.rfft(xt, n=n)
    causal = jnp.fft.irfft(x_f * jnp.fft.rfft(k1, n=n)[None], n=n)[..., :Lp]
    anti = jnp.fft.irfft(x_f * jnp.fft.rfft(k2[:, ::-1], n=n)[None],
                         n=n)[..., Lp - 1:2 * Lp - 1]
    conv = jnp.transpose(causal + anti, (0, 2, 1))                       # (B,Lp,D)

    mx = conv + xn * p["ema_omega"][None, None, :]
    mx = mx * jax.nn.sigmoid(mx)
    return mx.astype(jnp.bfloat16)


def attn_bias(p, cfg, L, Lp):
    """(rel_pos bias - mu) / (sigma*sqrt2); padded key columns get a large
    negative value so the laplace attention of padded tokens is ~0."""
    max_pos = cfg["max_positions"]
    i = jnp.arange(L)
    idx = (max_pos - 1) + (i[None, :] - i[:, None])
    lap_c = 1.0 / (_LAPLACE_SIGMA * math.sqrt(2.0))
    core = (p["rel_pos"][idx] - _LAPLACE_MU) * lap_c
    bias = jnp.full((Lp, Lp), _NEG_BIAS, jnp.float32)
    bias = bias.at[:L, :L].set(core)
    return bias.astype(jnp.bfloat16)


# ----------------------------------------------------------------------------
# full forward
# ----------------------------------------------------------------------------

def vision_mega_forward(x_nchw, params, cfg):
    B, C, Hi, Wi = x_nchw.shape
    P, D = cfg["patch_size"], cfg["embed_dim"]
    nH, nW = Hi // P, Wi // P
    L = nH * nW
    Lp = _round_up(L, 8)       # sublane-aligned token count (128/256 at ViT scale)

    # Patch embed: Conv2d(C, D, kernel=P, stride=P) == per-patch linear.
    patches = x_nchw.reshape(B, C, nH, P, nW, P)
    patches = jnp.transpose(patches, (0, 2, 4, 1, 3, 5)).reshape(B * L, C * P * P)
    xe = linear_rows(patches, params["patch_w"], params["patch_b"]).reshape(B, L, D)
    xe = xe + params["pos_embed"]                              # tiny: plain XLA
    if Lp != L:
        xe = jnp.pad(xe, ((0, 0), (0, Lp - L), (0, 0)))
    x = xe.astype(jnp.bfloat16)                                # bf16 residual stream

    row_mask = (jnp.arange(Lp) < L).astype(jnp.float32)
    lap_c = 1.0 / (_LAPLACE_SIGMA * math.sqrt(2.0))
    qk_scale = jnp.array([[lap_c / float(L)], [1.0]], jnp.float32)   # fold into q row

    for lp in params["layers"]:
        mx = ema_gate(x, lp, cfg, row_mask)
        bias = attn_bias(lp, cfg, L, Lp)
        x = mega_layer(x, mx, bias,
                       lp["qk_gamma"] * qk_scale, lp["qk_beta"] * qk_scale,
                       lp, cfg)

    xo = ln_proj_silu(x.reshape(B * Lp, D), params["final_ln_g"],
                      params["final_ln_b"], params["out_w"], params["out_b"])
    xo = xo.reshape(B, Lp, D)[:, :L, :]
    feat = jnp.mean(xo, axis=1)                                # (B, D) -- plain XLA
    return feat @ params["head_w"] + params["head_b"]          # tiny head -- plain XLA


# ----------------------------------------------------------------------------
# deterministic synthetic parameters (shapes match the module __init__)
# ----------------------------------------------------------------------------

def init_params(key, cfg):
    D, H, Z, N = cfg["embed_dim"], cfg["hdim"], cfg["zdim"], cfg["ndim"]
    F_, C, P = cfg["ffn_dim"], cfg["in_chans"], cfg["patch_size"]
    L, depth, NC = cfg["max_positions"], cfg["depth"], cfg["num_classes"]
    keys = iter(jax.random.split(key, 32 + depth * 32))
    bf = jnp.bfloat16

    def nrm(shape, std=0.02, dtype=jnp.float32):
        return (std * jax.random.normal(next(keys), shape)).astype(dtype)

    params = {
        "patch_w": nrm((C * P * P, D), dtype=bf),
        "patch_b": jnp.zeros((D,), jnp.float32),
        "pos_embed": nrm((1, L, D), std=D ** (-0.5)),
        "final_ln_g": jnp.ones((D,), jnp.float32),
        "final_ln_b": jnp.zeros((D,), jnp.float32),
        "out_w": nrm((D, D), dtype=bf),
        "out_b": jnp.zeros((D,), jnp.float32),
        "head_w": nrm((D, NC)),
        "head_b": jnp.zeros((NC,), jnp.float32),
        "layers": [],
    }
    for _ in range(depth):
        lp = {
            "attn_ln_g": jnp.ones((D,), jnp.float32),
            "attn_ln_b": jnp.zeros((D,), jnp.float32),
            "v_w": nrm((D, H), dtype=bf), "v_b": jnp.zeros((H,), jnp.float32),
            # mx_proj stored pre-split into lane-dense column chunks u|z|r|hx
            "u_w": nrm((D, D), dtype=bf), "u_b": jnp.zeros((D,), jnp.float32),
            "z_w": nrm((D, Z), dtype=bf), "z_b": jnp.zeros((Z,), jnp.float32),
            "r_w": nrm((D, H), dtype=bf), "r_b": jnp.zeros((H,), jnp.float32),
            "hx_w": nrm((D, D), dtype=bf), "hx_b": jnp.zeros((D,), jnp.float32),
            "h_w": nrm((H, D), dtype=bf), "h_b": jnp.zeros((D,), jnp.float32),
            "qk_gamma": 1.0 + nrm((2, Z), std=0.1),
            "qk_beta": jnp.zeros((2, Z), jnp.float32),
            "ema_delta": nrm((2 * D, N, 1), std=0.2),
            "ema_alpha": nrm((2 * D, N, 1), std=0.2),
            "ema_beta": nrm((2 * D, N, 1), std=0.02),
            "ema_gamma": nrm((2 * D, N), std=1.0),
            "ema_omega": jnp.ones((D,), jnp.float32),
            "rel_pos": nrm((2 * L - 1,)),
            "ffn_ln_g": jnp.ones((D,), jnp.float32),
            "ffn_ln_b": jnp.zeros((D,), jnp.float32),
            "fc1_w": nrm((D, F_), dtype=bf), "fc1_b": jnp.zeros((F_,), jnp.float32),
            "fc2_w": nrm((F_, D), dtype=bf), "fc2_b": jnp.zeros((D,), jnp.float32),
        }
        params["layers"].append(lp)
    return params


# ----------------------------------------------------------------------------

if __name__ == "__main__":
    # Small VisionMEGA: img 16, patch 4 -> 16 tokens, embed 32, hidden 64,
    # zdim 16, ndim 4, ffn 64, depth 2, 10 classes, batch 2.
    cfg = dict(
        img_size=16, patch_size=4, in_chans=3,
        embed_dim=32, hdim=64, zdim=16, ndim=4, ffn_dim=64,
        depth=2, num_classes=10, max_positions=(16 // 4) ** 2,
    )
    key = jax.random.PRNGKey(0)
    pkey, xkey = jax.random.split(key)
    params = init_params(pkey, cfg)
    x = jax.random.normal(
        xkey, (2, cfg["in_chans"], cfg["img_size"], cfg["img_size"]),
        dtype=jnp.float32)

    fwd = jax.jit(functools.partial(vision_mega_forward, cfg=cfg))
    logits = fwd(x, params)
    jax.block_until_ready(logits)
    assert logits.shape == (2, cfg["num_classes"]), logits.shape
    assert bool(jnp.all(jnp.isfinite(logits)))
    print("KERNEL_OK")
</pallas_src>

<mosaic_0001>
module attributes {stable_mosaic.version = 11 : i64} {
  func.func @k(%arg0: i32, %arg1: memref<8x128xf32, #tpu.memory_space<vmem>>, %arg2: memref<8x128xf32, #tpu.memory_space<vmem>>) attributes {dimension_semantics = [#tpu.dimension_semantics<arbitrary>], iteration_bounds = array<i64: 1>, scalar_prefetch = 0 : i64, scratch_operands = 0 : i64, tpu.core_type = #tpu.core_type<tc>, window_params = [{pipeline_mode = #tpu.pipeline_mode<synchronous>, transform_indices = @transform_0, window_bounds = array<i64: 8, 128>}, {pipeline_mode = #tpu.pipeline_mode<synchronous>, transform_indices = @transform_1, window_bounds = array<i64: 8, 128>}]} {
    %c0 = arith.constant 0 : index
    %c0_0 = arith.constant 0 : index
    %0 = vector.load %arg1[%c0, %c0_0] : memref<8x128xf32, #tpu.memory_space<vmem>>, vector<8x128xf32>
    %cst = arith.constant 1.000000e+00 : f32
    %1 = vector.broadcast %cst : f32 to vector<8x128xf32>
    %2 = arith.addf %0, %1 : vector<8x128xf32>
    %c0_1 = arith.constant 0 : index
    %c0_2 = arith.constant 0 : index
    %3 = vector.load %arg2[%c0_1, %c0_2] : memref<8x128xf32, #tpu.memory_space<vmem>>, vector<8x128xf32>
    tpu.vector_store %arg2[%c0_1, %c0_2], %2 {strides = array<i32>} : memref<8x128xf32, #tpu.memory_space<vmem>>, vector<8x128xf32>,
    return
  }
  func.func @transform_0(%arg0: i32) -> (i32, i32) {
    %c0_i32 = arith.constant 0 : i32
    %c0_i32_0 = arith.constant 0 : i32
    %c0_i32_1 = arith.constant 0 : i32
    return %c0_i32, %c0_i32_0 : i32, i32
  }
  func.func @transform_1(%arg0: i32) -> (i32, i32) {
    %c0_i32 = arith.constant 0 : i32
    %c0_i32_0 = arith.constant 0 : i32
    %c0_i32_1 = arith.constant 0 : i32
    return %c0_i32, %c0_i32_0 : i32, i32
  }
}

module attributes {stable_mosaic.version = 11 : i64} {
  func.func @_matmul_bias_kernel(%arg0: i32, %arg1: memref<32x48xf32, #tpu.memory_space<vmem>>, %arg2: memref<48x32xbf16, #tpu.memory_space<vmem>>, %arg3: memref<1x32xf32, #tpu.memory_space<vmem>>, %arg4: memref<32x32xf32, #tpu.memory_space<vmem>>) attributes {dimension_semantics = [#tpu.dimension_semantics<parallel>], iteration_bounds = array<i64: 1>, scalar_prefetch = 0 : i64, scratch_operands = 0 : i64, tpu.core_type = #tpu.core_type<tc>, window_params = [{transform_indices = @transform_0, window_bounds = array<i64: 32, 48>}, {pipeline_mode = #tpu.pipeline_mode<synchronous>, transform_indices = @transform_1, window_bounds = array<i64: 48, 32>}, {pipeline_mode = #tpu.pipeline_mode<synchronous>, transform_indices = @transform_2, window_bounds = array<i64: 1, 32>}, {transform_indices = @transform_3, window_bounds = array<i64: 32, 32>}]} {
    %c0 = arith.constant 0 : index
    %c0_0 = arith.constant 0 : index
    %0 = vector.load %arg1[%c0, %c0_0] : memref<32x48xf32, #tpu.memory_space<vmem>>, vector<32x48xf32>
    %1 = arith.truncf %0 : vector<32x48xf32> to vector<32x48xbf16>
    %c0_1 = arith.constant 0 : index
    %c0_2 = arith.constant 0 : index
    %2 = vector.load %arg2[%c0_1, %c0_2] : memref<48x32xbf16, #tpu.memory_space<vmem>>, vector<48x32xbf16>
    %cst = arith.constant dense<0.000000e+00> : vector<32x32xf32>
    %3 = tpu.matmul %1, %2, %cst {dimension_numbers = #tpu.dot_dimension_numbers<[1], [0], [0], [1], [0, 0, 1, 1], [], []>} : vector<32x48xbf16>, vector<48x32xbf16>, vector<32x32xf32> -> vector<32x32xf32>
    %c0_3 = arith.constant 0 : index
    %c0_4 = arith.constant 0 : index
    %4 = vector.load %arg3[%c0_3, %c0_4] : memref<1x32xf32, #tpu.memory_space<vmem>>, vector<1x32xf32>
    %5 = vector.broadcast %4 : vector<1x32xf32> to vector<32x32xf32>
    %6 = arith.addf %3, %5 : vector<32x32xf32>
    %c0_5 = arith.constant 0 : index
    %c0_6 = arith.constant 0 : index
    %7 = vector.load %arg4[%c0_5, %c0_6] : memref<32x32xf32, #tpu.memory_space<vmem>>, vector<32x32xf32>
    tpu.vector_store %arg4[%c0_5, %c0_6], %6 {strides = array<i32>} : memref<32x32xf32, #tpu.memory_space<vmem>>, vector<32x32xf32>,
    return
  }
  func.func @transform_0(%arg0: i32) -> (i32, i32) {
    %c0_i32 = arith.constant 0 : i32
    %c0_i32_0 = arith.constant 0 : i32
    return %arg0, %c0_i32 : i32, i32
  }
  func.func @transform_1(%arg0: i32) -> (i32, i32) {
    %c0_i32 = arith.constant 0 : i32
    %c0_i32_0 = arith.constant 0 : i32
    %c0_i32_1 = arith.constant 0 : i32
    return %c0_i32, %c0_i32_0 : i32, i32
  }
  func.func @transform_2(%arg0: i32) -> (i32, i32) {
    %c0_i32 = arith.constant 0 : i32
    %c0_i32_0 = arith.constant 0 : i32
    %c0_i32_1 = arith.constant 0 : i32
    return %c0_i32, %c0_i32_0 : i32, i32
  }
  func.func @transform_3(%arg0: i32) -> (i32, i32) {
    %c0_i32 = arith.constant 0 : i32
    %c0_i32_0 = arith.constant 0 : i32
    return %arg0, %c0_i32 : i32, i32
  }
}

module attributes {stable_mosaic.version = 11 : i64} {
  func.func @_mega_layer_kernel(%arg0: i32, %arg1: memref<1x16x32xbf16, #tpu.memory_space<vmem>>, %arg2: memref<1x16x32xbf16, #tpu.memory_space<vmem>>, %arg3: memref<1x32xf32, #tpu.memory_space<vmem>>, %arg4: memref<1x32xf32, #tpu.memory_space<vmem>>, %arg5: memref<32x64xbf16, #tpu.memory_space<vmem>>, %arg6: memref<1x64xf32, #tpu.memory_space<vmem>>, %arg7: memref<32x32xbf16, #tpu.memory_space<vmem>>, %arg8: memref<1x32xf32, #tpu.memory_space<vmem>>, %arg9: memref<32x16xbf16, #tpu.memory_space<vmem>>, %arg10: memref<1x16xf32, #tpu.memory_space<vmem>>, %arg11: memref<32x64xbf16, #tpu.memory_space<vmem>>, %arg12: memref<1x64xf32, #tpu.memory_space<vmem>>, %arg13: memref<32x32xbf16, #tpu.memory_space<vmem>>, %arg14: memref<1x32xf32, #tpu.memory_space<vmem>>, %arg15: memref<2x16xf32, #tpu.memory_space<vmem>>, %arg16: memref<2x16xf32, #tpu.memory_space<vmem>>, %arg17: memref<64x32xbf16, #tpu.memory_space<vmem>>, %arg18: memref<1x32xf32, #tpu.memory_space<vmem>>, %arg19: memref<16x16xbf16, #tpu.memory_space<vmem>>, %arg20: memref<1x32xf32, #tpu.memory_space<vmem>>, %arg21: memref<1x32xf32, #tpu.memory_space<vmem>>, %arg22: memref<32x64xbf16, #tpu.memory_space<vmem>>, %arg23: memref<1x64xf32, #tpu.memory_space<vmem>>, %arg24: memref<64x32xbf16, #tpu.memory_space<vmem>>, %arg25: memref<1x32xf32, #tpu.memory_space<vmem>>, %arg26: memref<1x16x32xbf16, #tpu.memory_space<vmem>>) attributes {dimension_semantics = [#tpu.dimension_semantics<parallel>], iteration_bounds = array<i64: 2>, scalar_prefetch = 0 : i64, scratch_operands = 0 : i64, tpu.core_type = #tpu.core_type<tc>, window_params = [{transform_indices = @transform_0, window_bounds = array<i64: 1, 16, 32>}, {transform_indices = @transform_1, window_bounds = array<i64: 1, 16, 32>}, {pipeline_mode = #tpu.pipeline_mode<synchronous>, transform_indices = @transform_2, window_bounds = array<i64: 1, 32>}, {pipeline_mode = #tpu.pipeline_mode<synchronous>, transform_indices = @transform_3, window_bounds = array<i64: 1, 32>}, {pipeline_mode = #tpu.pipeline_mode<synchronous>, transform_indices = @transform_4, window_bounds = array<i64: 32, 64>}, {pipeline_mode = #tpu.pipeline_mode<synchronous>, transform_indices = @transform_5, window_bounds = array<i64: 1, 64>}, {pipeline_mode = #tpu.pipeline_mode<synchronous>, transform_indices = @transform_6, window_bounds = array<i64: 32, 32>}, {pipeline_mode = #tpu.pipeline_mode<synchronous>, transform_indices = @transform_7, window_bounds = array<i64: 1, 32>}, {pipeline_mode = #tpu.pipeline_mode<synchronous>, transform_indices = @transform_8, window_bounds = array<i64: 32, 16>}, {pipeline_mode = #tpu.pipeline_mode<synchronous>, transform_indices = @transform_9, window_bounds = array<i64: 1, 16>}, {pipeline_mode = #tpu.pipeline_mode<synchronous>, transform_indices = @transform_10, window_bounds = array<i64: 32, 64>}, {pipeline_mode = #tpu.pipeline_mode<synchronous>, transform_indices = @transform_11, window_bounds = array<i64: 1, 64>}, {pipeline_mode = #tpu.pipeline_mode<synchronous>, transform_indices = @transform_12, window_bounds = array<i64: 32, 32>}, {pipeline_mode = #tpu.pipeline_mode<synchronous>, transform_indices = @transform_13, window_bounds = array<i64: 1, 32>}, {pipeline_mode = #tpu.pipeline_mode<synchronous>, transform_indices = @transform_14, window_bounds = array<i64: 2, 16>}, {pipeline_mode = #tpu.pipeline_mode<synchronous>, transform_indices = @transform_15, window_bounds = array<i64: 2, 16>}, {pipeline_mode = #tpu.pipeline_mode<synchronous>, transform_indices = @transform_16, window_bounds = array<i64: 64, 32>}, {pipeline_mode = #tpu.pipeline_mode<synchronous>, transform_indices = @transform_17, window_bounds = array<i64: 1, 32>}, {pipeline_mode = #tpu.pipeline_mode<synchronous>, transform_indices = @transform_18, window_bounds = array<i64: 16, 16>}, {pipeline_mode = #tpu.pipeline_mode<synchronous>, transform_indices = @transform_19, window_bounds = array<i64: 1, 32>}, {pipeline_mode = #tpu.pipeline_mode<synchronous>, transform_indices = @transform_20, window_bounds = array<i64: 1, 32>}, {pipeline_mode = #tpu.pipeline_mode<synchronous>, transform_indices = @transform_21, window_bounds = array<i64: 32, 64>}, {pipeline_mode = #tpu.pipeline_mode<synchronous>, transform_indices = @transform_22, window_bounds = array<i64: 1, 64>}, {pipeline_mode = #tpu.pipeline_mode<synchronous>, transform_indices = @transform_23, window_bounds = array<i64: 64, 32>}, {pipeline_mode = #tpu.pipeline_mode<synchronous>, transform_indices = @transform_24, window_bounds = array<i64: 1, 32>}, {transform_indices = @transform_25, window_bounds = array<i64: 1, 16, 32>}]} {
    %c0 = arith.constant 0 : index
    %c0_0 = arith.constant 0 : index
    %c0_1 = arith.constant 0 : index
    %0 = vector.load %arg1[%c0, %c0_0, %c0_1] : memref<1x16x32xbf16, #tpu.memory_space<vmem>>, vector<1x16x32xbf16>
    %1 = vector.shape_cast %0 : vector<1x16x32xbf16> to vector<16x32xbf16>
    %2 = arith.extf %1 : vector<16x32xbf16> to vector<16x32xf32>
    %c0_2 = arith.constant 0 : index
    %c0_3 = arith.constant 0 : index
    %3 = vector.load %arg3[%c0_2, %c0_3] : memref<1x32xf32, #tpu.memory_space<vmem>>, vector<1x32xf32>
    %c0_4 = arith.constant 0 : index
    %c0_5 = arith.constant 0 : index
    %4 = vector.load %arg4[%c0_4, %c0_5] : memref<1x32xf32, #tpu.memory_space<vmem>>, vector<1x32xf32>
    %cst = arith.constant dense<0.000000e+00> : vector<16xf32>
    %5 = vector.multi_reduction <add>, %2, %cst [1] : vector<16x32xf32> to vector<16xf32>
    %6 = vector.shape_cast %5 : vector<16xf32> to vector<16x1xf32>
    %cst_6 = arith.constant 3.200000e+01 : f32
    %7 = vector.broadcast %cst_6 : f32 to vector<16x1xf32>
    %8 = arith.divf %6, %7 : vector<16x1xf32>
    %9 = vector.broadcast %8 : vector<16x1xf32> to vector<16x32xf32>
    %10 = arith.subf %2, %9 : vector<16x32xf32>
    %11 = arith.mulf %10, %10 : vector<16x32xf32>
    %cst_7 = arith.constant dense<0.000000e+00> : vector<16xf32>
    %12 = vector.multi_reduction <add>, %11, %cst_7 [1] : vector<16x32xf32> to vector<16xf32>
    %13 = vector.shape_cast %12 : vector<16xf32> to vector<16x1xf32>
    %cst_8 = arith.constant 3.200000e+01 : f32
    %14 = vector.broadcast %cst_8 : f32 to vector<16x1xf32>
    %15 = arith.divf %13, %14 : vector<16x1xf32>
    %16 = vector.broadcast %8 : vector<16x1xf32> to vector<16x32xf32>
    %17 = arith.subf %2, %16 : vector<16x32xf32>
    %cst_9 = arith.constant 9.99999974E-6 : f32
    %18 = vector.broadcast %cst_9 : f32 to vector<16x1xf32>
    %19 = arith.addf %15, %18 : vector<16x1xf32>
    %20 = math.rsqrt %19 : vector<16x1xf32>
    %21 = vector.broadcast %20 : vector<16x1xf32> to vector<16x32xf32>
    %22 = arith.mulf %17, %21 : vector<16x32xf32>
    %23 = vector.broadcast %3 : vector<1x32xf32> to vector<16x32xf32>
    %24 = arith.mulf %22, %23 : vector<16x32xf32>
    %25 = vector.broadcast %4 : vector<1x32xf32> to vector<16x32xf32>
    %26 = arith.addf %24, %25 : vector<16x32xf32>
    %27 = arith.truncf %26 : vector<16x32xf32> to vector<16x32xbf16>
    %c0_10 = arith.constant 0 : index
    %c0_11 = arith.constant 0 : index
    %c0_12 = arith.constant 0 : index
    %28 = vector.load %arg2[%c0_10, %c0_11, %c0_12] : memref<1x16x32xbf16, #tpu.memory_space<vmem>>, vector<1x16x32xbf16>
    %29 = vector.shape_cast %28 : vector<1x16x32xbf16> to vector<16x32xbf16>
    %c0_13 = arith.constant 0 : index
    %c0_14 = arith.constant 0 : index
    %30 = vector.load %arg5[%c0_13, %c0_14] : memref<32x64xbf16, #tpu.memory_space<vmem>>, vector<32x64xbf16>
    %cst_15 = arith.constant dense<0.000000e+00> : vector<16x64xf32>
    %31 = tpu.matmul %27, %30, %cst_15 {dimension_numbers = #tpu.dot_dimension_numbers<[1], [0], [0], [1], [0, 0, 1, 1], [], []>} : vector<16x32xbf16>, vector<32x64xbf16>, vector<16x64xf32> -> vector<16x64xf32>
    %c0_16 = arith.constant 0 : index
    %c0_17 = arith.constant 0 : index
    %32 = vector.load %arg6[%c0_16, %c0_17] : memref<1x64xf32, #tpu.memory_space<vmem>>, vector<1x64xf32>
    %33 = vector.broadcast %32 : vector<1x64xf32> to vector<16x64xf32>
    %34 = arith.addf %31, %33 : vector<16x64xf32>
    %35 = arith.negf %34 : vector<16x64xf32>
    %36 = math.exp %35 : vector<16x64xf32>
    %cst_18 = arith.constant 1.000000e+00 : f32
    %37 = vector.broadcast %cst_18 : f32 to vector<16x64xf32>
    %38 = arith.addf %37, %36 : vector<16x64xf32>
    %39 = arith.divf %37, %38 : vector<16x64xf32>
    %40 = arith.mulf %34, %39 : vector<16x64xf32>
    %c0_19 = arith.constant 0 : index
    %c0_20 = arith.constant 0 : index
    %41 = vector.load %arg7[%c0_19, %c0_20] : memref<32x32xbf16, #tpu.memory_space<vmem>>, vector<32x32xbf16>
    %cst_21 = arith.constant dense<0.000000e+00> : vector<16x32xf32>
    %42 = tpu.matmul %29, %41, %cst_21 {dimension_numbers = #tpu.dot_dimension_numbers<[1], [0], [0], [1], [0, 0, 1, 1], [], []>} : vector<16x32xbf16>, vector<32x32xbf16>, vector<16x32xf32> -> vector<16x32xf32>
    %c0_22 = arith.constant 0 : index
    %c0_23 = arith.constant 0 : index
    %43 = vector.load %arg8[%c0_22, %c0_23] : memref<1x32xf32, #tpu.memory_space<vmem>>, vector<1x32xf32>
    %44 = vector.broadcast %43 : vector<1x32xf32> to vector<16x32xf32>
    %45 = arith.addf %42, %44 : vector<16x32xf32>
    %46 = arith.negf %45 : vector<16x32xf32>
    %47 = math.exp %46 : vector<16x32xf32>
    %cst_24 = arith.constant 1.000000e+00 : f32
    %48 = vector.broadcast %cst_24 : f32 to vector<16x32xf32>
    %49 = arith.addf %48, %47 : vector<16x32xf32>
    %50 = arith.divf %48, %49 : vector<16x32xf32>
    %c0_25 = arith.constant 0 : index
    %c0_26 = arith.constant 0 : index
    %51 = vector.load %arg9[%c0_25, %c0_26] : memref<32x16xbf16, #tpu.memory_space<vmem>>, vector<32x16xbf16>
    %cst_27 = arith.constant dense<0.000000e+00> : vector<16x16xf32>
    %52 = tpu.matmul %29, %51, %cst_27 {dimension_numbers = #tpu.dot_dimension_numbers<[1], [0], [0], [1], [0, 0, 1, 1], [], []>} : vector<16x32xbf16>, vector<32x16xbf16>, vector<16x16xf32> -> vector<16x16xf32>
    %c0_28 = arith.constant 0 : index
    %c0_29 = arith.constant 0 : index
    %53 = vector.load %arg10[%c0_28, %c0_29] : memref<1x16xf32, #tpu.memory_space<vmem>>, vector<1x16xf32>
    %54 = vector.broadcast %53 : vector<1x16xf32> to vector<16x16xf32>
    %55 = arith.addf %52, %54 : vector<16x16xf32>
    %56 = arith.negf %55 : vector<16x16xf32>
    %57 = math.exp %56 : vector<16x16xf32>
    %cst_30 = arith.constant 1.000000e+00 : f32
    %58 = vector.broadcast %cst_30 : f32 to vector<16x16xf32>
    %59 = arith.addf %58, %57 : vector<16x16xf32>
    %60 = arith.divf %58, %59 : vector<16x16xf32>
    %61 = arith.mulf %55, %60 : vector<16x16xf32>
    %c0_31 = arith.constant 0 : index
    %c0_32 = arith.constant 0 : index
    %62 = vector.load %arg11[%c0_31, %c0_32] : memref<32x64xbf16, #tpu.memory_space<vmem>>, vector<32x64xbf16>
    %cst_33 = arith.constant dense<0.000000e+00> : vector<16x64xf32>
    %63 = tpu.matmul %29, %62, %cst_33 {dimension_numbers = #tpu.dot_dimension_numbers<[1], [0], [0], [1], [0, 0, 1, 1], [], []>} : vector<16x32xbf16>, vector<32x64xbf16>, vector<16x64xf32> -> vector<16x64xf32>
    %c0_34 = arith.constant 0 : index
    %c0_35 = arith.constant 0 : index
    %64 = vector.load %arg12[%c0_34, %c0_35] : memref<1x64xf32, #tpu.memory_space<vmem>>, vector<1x64xf32>
    %65 = vector.broadcast %64 : vector<1x64xf32> to vector<16x64xf32>
    %66 = arith.addf %63, %65 : vector<16x64xf32>
    %67 = arith.negf %66 : vector<16x64xf32>
    %68 = math.exp %67 : vector<16x64xf32>
    %cst_36 = arith.constant 1.000000e+00 : f32
    %69 = vector.broadcast %cst_36 : f32 to vector<16x64xf32>
    %70 = arith.addf %69, %68 : vector<16x64xf32>
    %71 = arith.divf %69, %70 : vector<16x64xf32>
    %72 = arith.mulf %66, %71 : vector<16x64xf32>
    %c0_37 = arith.constant 0 : index
    %c0_38 = arith.constant 0 : index
    %73 = vector.load %arg13[%c0_37, %c0_38] : memref<32x32xbf16, #tpu.memory_space<vmem>>, vector<32x32xbf16>
    %cst_39 = arith.constant dense<0.000000e+00> : vector<16x32xf32>
    %74 = tpu.matmul %29, %73, %cst_39 {dimension_numbers = #tpu.dot_dimension_numbers<[1], [0], [0], [1], [0, 0, 1, 1], [], []>} : vector<16x32xbf16>, vector<32x32xbf16>, vector<16x32xf32> -> vector<16x32xf32>
    %c0_40 = arith.constant 0 : index
    %c0_41 = arith.constant 0 : index
    %75 = vector.load %arg14[%c0_40, %c0_41] : memref<1x32xf32, #tpu.memory_space<vmem>>, vector<1x32xf32>
    %76 = vector.broadcast %75 : vector<1x32xf32> to vector<16x32xf32>
    %77 = arith.addf %74, %76 : vector<16x32xf32>
    %c0_42 = arith.constant 0 : index
    %c0_43 = arith.constant 0 : index
    %78 = vector.load %arg15[%c0_42, %c0_43] : memref<2x16xf32, #tpu.memory_space<vmem>>, vector<1x16xf32>
    %79 = vector.broadcast %78 : vector<1x16xf32> to vector<16x16xf32>
    %80 = arith.mulf %61, %79 : vector<16x16xf32>
    %c0_44 = arith.constant 0 : index
    %c0_45 = arith.constant 0 : index
    %81 = vector.load %arg16[%c0_44, %c0_45] : memref<2x16xf32, #tpu.memory_space<vmem>>, vector<1x16xf32>
    %82 = vector.broadcast %81 : vector<1x16xf32> to vector<16x16xf32>
    %83 = arith.addf %80, %82 : vector<16x16xf32>
    %c1 = arith.constant 1 : index
    %c0_46 = arith.constant 0 : index
    %84 = vector.load %arg15[%c1, %c0_46] : memref<2x16xf32, #tpu.memory_space<vmem>>, vector<1x16xf32>
    %85 = vector.broadcast %84 : vector<1x16xf32> to vector<16x16xf32>
    %86 = arith.mulf %61, %85 : vector<16x16xf32>
    %c1_47 = arith.constant 1 : index
    %c0_48 = arith.constant 0 : index
    %87 = vector.load %arg16[%c1_47, %c0_48] : memref<2x16xf32, #tpu.memory_space<vmem>>, vector<1x16xf32>
    %88 = vector.broadcast %87 : vector<1x16xf32> to vector<16x16xf32>
    %89 = arith.addf %86, %88 : vector<16x16xf32>
    %90 = arith.truncf %83 : vector<16x16xf32> to vector<16x16xbf16>
    %91 = arith.truncf %89 : vector<16x16xf32> to vector<16x16xbf16>
    %cst_49 = arith.constant dense<0.000000e+00> : vector<16x16xf32>
    %92 = tpu.matmul %90, %91, %cst_49 {dimension_numbers = #tpu.dot_dimension_numbers<[1], [1], [0], [0], [0, 0, 1, 0], [], []>} : vector<16x16xbf16>, vector<16x16xbf16>, vector<16x16xf32> -> vector<16x16xf32>
    %c0_50 = arith.constant 0 : index
    %c0_51 = arith.constant 0 : index
    %93 = vector.load %arg19[%c0_50, %c0_51] : memref<16x16xbf16, #tpu.memory_space<vmem>>, vector<16x16xbf16>
    %94 = arith.extf %93 : vector<16x16xbf16> to vector<16x16xf32>
    %95 = arith.addf %92, %94 : vector<16x16xf32>
    %cst_52 = arith.constant 0.000000e+00 : f32
    %96 = vector.broadcast %cst_52 : f32 to vector<16x16xf32>
    %97 = arith.cmpf oge, %95, %96 : vector<16x16xf32>
    %cst_53 = arith.constant 1.000000e+00 : f32
    %cst_54 = arith.constant -1.000000e+00 : f32
    %98 = vector.broadcast %cst_53 : f32 to vector<16x16xf32>
    %99 = vector.broadcast %cst_54 : f32 to vector<16x16xf32>
    %100 = arith.select %97, %98, %99 : vector<16x16xi1>, vector<16x16xf32>
    %101 = math.absf %95 : vector<16x16xf32>
    %cst_55 = arith.constant 0.327591091 : f32
    %102 = vector.broadcast %cst_55 : f32 to vector<16x16xf32>
    %103 = arith.mulf %102, %101 : vector<16x16xf32>
    %cst_56 = arith.constant 1.000000e+00 : f32
    %104 = vector.broadcast %cst_56 : f32 to vector<16x16xf32>
    %105 = arith.addf %104, %103 : vector<16x16xf32>
    %cst_57 = arith.constant 1.000000e+00 : f32
    %106 = vector.broadcast %cst_57 : f32 to vector<16x16xf32>
    %107 = arith.divf %106, %105 : vector<16x16xf32>
    %cst_58 = arith.constant 1.06140542 : f32
    %108 = vector.broadcast %cst_58 : f32 to vector<16x16xf32>
    %109 = arith.mulf %108, %107 : vector<16x16xf32>
    %cst_59 = arith.constant -1.45315206 : f32
    %110 = vector.broadcast %cst_59 : f32 to vector<16x16xf32>
    %111 = arith.addf %109, %110 : vector<16x16xf32>
    %112 = arith.mulf %111, %107 : vector<16x16xf32>
    %cst_60 = arith.constant 1.42141378 : f32
    %113 = vector.broadcast %cst_60 : f32 to vector<16x16xf32>
    %114 = arith.addf %112, %113 : vector<16x16xf32>
    %115 = arith.mulf %114, %107 : vector<16x16xf32>
    %cst_61 = arith.constant -0.284496725 : f32
    %116 = vector.broadcast %cst_61 : f32 to vector<16x16xf32>
    %117 = arith.addf %115, %116 : vector<16x16xf32>
    %118 = arith.mulf %117, %107 : vector<16x16xf32>
    %cst_62 = arith.constant 0.254829586 : f32
    %119 = vector.broadcast %cst_62 : f32 to vector<16x16xf32>
    %120 = arith.addf %118, %119 : vector<16x16xf32>
    %121 = arith.mulf %120, %107 : vector<16x16xf32>
    %cst_63 = arith.constant 0.000000e+00 : f32
    %122 = vector.broadcast %cst_63 : f32 to vector<16x16xf32>
    %123 = arith.subf %122, %101 : vector<16x16xf32>
    %124 = arith.mulf %123, %101 : vector<16x16xf32>
    %125 = math.exp %124 : vector<16x16xf32>
    %126 = arith.mulf %121, %125 : vector<16x16xf32>
    %cst_64 = arith.constant 1.000000e+00 : f32
    %127 = vector.broadcast %cst_64 : f32 to vector<16x16xf32>
    %128 = arith.subf %127, %126 : vector<16x16xf32>
    %129 = arith.mulf %100, %128 : vector<16x16xf32>
    %cst_65 = arith.constant 1.000000e+00 : f32
    %130 = vector.broadcast %cst_65 : f32 to vector<16x16xf32>
    %131 = arith.addf %130, %129 : vector<16x16xf32>
    %cst_66 = arith.constant 5.000000e-01 : f32
    %132 = vector.broadcast %cst_66 : f32 to vector<16x16xf32>
    %133 = arith.mulf %132, %131 : vector<16x16xf32>
    %134 = arith.truncf %133 : vector<16x16xf32> to vector<16x16xbf16>
    %135 = arith.truncf %40 : vector<16x64xf32> to vector<16x64xbf16>
    %cst_67 = arith.constant dense<0.000000e+00> : vector<16x64xf32>
    %136 = tpu.matmul %134, %135, %cst_67 {dimension_numbers = #tpu.dot_dimension_numbers<[1], [0], [0], [1], [0, 0, 1, 1], [], []>} : vector<16x16xbf16>, vector<16x64xbf16>, vector<16x64xf32> -> vector<16x64xf32>
    %137 = arith.mulf %136, %72 : vector<16x64xf32>
    %138 = arith.truncf %137 : vector<16x64xf32> to vector<16x64xbf16>
    %c0_68 = arith.constant 0 : index
    %c0_69 = arith.constant 0 : index
    %139 = vector.load %arg17[%c0_68, %c0_69] : memref<64x32xbf16, #tpu.memory_space<vmem>>, vector<64x32xbf16>
    %cst_70 = arith.constant dense<0.000000e+00> : vector<16x32xf32>
    %140 = tpu.matmul %138, %139, %cst_70 {dimension_numbers = #tpu.dot_dimension_numbers<[1], [0], [0], [1], [0, 0, 1, 1], [], []>} : vector<16x64xbf16>, vector<64x32xbf16>, vector<16x32xf32> -> vector<16x32xf32>
    %c0_71 = arith.constant 0 : index
    %c0_72 = arith.constant 0 : index
    %141 = vector.load %arg18[%c0_71, %c0_72] : memref<1x32xf32, #tpu.memory_space<vmem>>, vector<1x32xf32>
    %142 = vector.broadcast %141 : vector<1x32xf32> to vector<16x32xf32>
    %143 = arith.addf %140, %142 : vector<16x32xf32>
    %144 = arith.addf %77, %143 : vector<16x32xf32>
    %145 = arith.negf %144 : vector<16x32xf32>
    %146 = math.exp %145 : vector<16x32xf32>
    %cst_73 = arith.constant 1.000000e+00 : f32
    %147 = vector.broadcast %cst_73 : f32 to vector<16x32xf32>
    %148 = arith.addf %147, %146 : vector<16x32xf32>
    %149 = arith.divf %147, %148 : vector<16x32xf32>
    %150 = arith.mulf %144, %149 : vector<16x32xf32>
    %151 = arith.subf %150, %2 : vector<16x32xf32>
    %152 = arith.mulf %50, %151 : vector<16x32xf32>
    %153 = arith.addf %2, %152 : vector<16x32xf32>
    %c0_74 = arith.constant 0 : index
    %c0_75 = arith.constant 0 : index
    %154 = vector.load %arg20[%c0_74, %c0_75] : memref<1x32xf32, #tpu.memory_space<vmem>>, vector<1x32xf32>
    %c0_76 = arith.constant 0 : index
    %c0_77 = arith.constant 0 : index
    %155 = vector.load %arg21[%c0_76, %c0_77] : memref<1x32xf32, #tpu.memory_space<vmem>>, vector<1x32xf32>
    %cst_78 = arith.constant dense<0.000000e+00> : vector<16xf32>
    %156 = vector.multi_reduction <add>, %153, %cst_78 [1] : vector<16x32xf32> to vector<16xf32>
    %157 = vector.shape_cast %156 : vector<16xf32> to vector<16x1xf32>
    %cst_79 = arith.constant 3.200000e+01 : f32
    %158 = vector.broadcast %cst_79 : f32 to vector<16x1xf32>
    %159 = arith.divf %157, %158 : vector<16x1xf32>
    %160 = vector.broadcast %159 : vector<16x1xf32> to vector<16x32xf32>
    %161 = arith.subf %153, %160 : vector<16x32xf32>
    %162 = arith.mulf %161, %161 : vector<16x32xf32>
    %cst_80 = arith.constant dense<0.000000e+00> : vector<16xf32>
    %163 = vector.multi_reduction <add>, %162, %cst_80 [1] : vector<16x32xf32> to vector<16xf32>
    %164 = vector.shape_cast %163 : vector<16xf32> to vector<16x1xf32>
    %cst_81 = arith.constant 3.200000e+01 : f32
    %165 = vector.broadcast %cst_81 : f32 to vector<16x1xf32>
    %166 = arith.divf %164, %165 : vector<16x1xf32>
    %167 = vector.broadcast %159 : vector<16x1xf32> to vector<16x32xf32>
    %168 = arith.subf %153, %167 : vector<16x32xf32>
    %cst_82 = arith.constant 9.99999974E-6 : f32
    %169 = vector.broadcast %cst_82 : f32 to vector<16x1xf32>
    %170 = arith.addf %166, %169 : vector<16x1xf32>
    %171 = math.rsqrt %170 : vector<16x1xf32>
    %172 = vector.broadcast %171 : vector<16x1xf32> to vector<16x32xf32>
    %173 = arith.mulf %168, %172 : vector<16x32xf32>
    %174 = vector.broadcast %154 : vector<1x32xf32> to vector<16x32xf32>
    %175 = arith.mulf %173, %174 : vector<16x32xf32>
    %176 = vector.broadcast %155 : vector<1x32xf32> to vector<16x32xf32>
    %177 = arith.addf %175, %176 : vector<16x32xf32>
    %178 = arith.truncf %177 : vector<16x32xf32> to vector<16x32xbf16>
    %c0_83 = arith.constant 0 : index
    %c0_84 = arith.constant 0 : index
    %179 = vector.load %arg22[%c0_83, %c0_84] : memref<32x64xbf16, #tpu.memory_space<vmem>>, vector<32x64xbf16>
    %cst_85 = arith.constant dense<0.000000e+00> : vector<16x64xf32>
    %180 = tpu.matmul %178, %179, %cst_85 {dimension_numbers = #tpu.dot_dimension_numbers<[1], [0], [0], [1], [0, 0, 1, 1], [], []>} : vector<16x32xbf16>, vector<32x64xbf16>, vector<16x64xf32> -> vector<16x64xf32>
    %c0_86 = arith.constant 0 : index
    %c0_87 = arith.constant 0 : index
    %181 = vector.load %arg23[%c0_86, %c0_87] : memref<1x64xf32, #tpu.memory_space<vmem>>, vector<1x64xf32>
    %182 = vector.broadcast %181 : vector<1x64xf32> to vector<16x64xf32>
    %183 = arith.addf %180, %182 : vector<16x64xf32>
    %184 = arith.negf %183 : vector<16x64xf32>
    %185 = math.exp %184 : vector<16x64xf32>
    %cst_88 = arith.constant 1.000000e+00 : f32
    %186 = vector.broadcast %cst_88 : f32 to vector<16x64xf32>
    %187 = arith.addf %186, %185 : vector<16x64xf32>
    %188 = arith.divf %186, %187 : vector<16x64xf32>
    %189 = arith.mulf %183, %188 : vector<16x64xf32>
    %190 = arith.truncf %189 : vector<16x64xf32> to vector<16x64xbf16>
    %c0_89 = arith.constant 0 : index
    %c0_90 = arith.constant 0 : index
    %191 = vector.load %arg24[%c0_89, %c0_90] : memref<64x32xbf16, #tpu.memory_space<vmem>>, vector<64x32xbf16>
    %cst_91 = arith.constant dense<0.000000e+00> : vector<16x32xf32>
    %192 = tpu.matmul %190, %191, %cst_91 {dimension_numbers = #tpu.dot_dimension_numbers<[1], [0], [0], [1], [0, 0, 1, 1], [], []>} : vector<16x64xbf16>, vector<64x32xbf16>, vector<16x32xf32> -> vector<16x32xf32>
    %c0_92 = arith.constant 0 : index
    %c0_93 = arith.constant 0 : index
    %193 = vector.load %arg25[%c0_92, %c0_93] : memref<1x32xf32, #tpu.memory_space<vmem>>, vector<1x32xf32>
    %194 = vector.broadcast %193 : vector<1x32xf32> to vector<16x32xf32>
    %195 = arith.addf %192, %194 : vector<16x32xf32>
    %196 = arith.addf %153, %195 : vector<16x32xf32>
    %197 = arith.truncf %196 : vector<16x32xf32> to vector<16x32xbf16>
    %c0_94 = arith.constant 0 : index
    %c0_95 = arith.constant 0 : index
    %c0_96 = arith.constant 0 : index
    %198 = vector.load %arg26[%c0_94, %c0_95, %c0_96] : memref<1x16x32xbf16, #tpu.memory_space<vmem>>, vector<1x16x32xbf16>
    %199 = vector.shape_cast %198 : vector<1x16x32xbf16> to vector<16x32xbf16>
    %200 = vector.shape_cast %197 : vector<16x32xbf16> to vector<1x16x32xbf16>
    tpu.vector_store %arg26[%c0_94, %c0_95, %c0_96], %200 {strides = array<i32>} : memref<1x16x32xbf16, #tpu.memory_space<vmem>>, vector<1x16x32xbf16>,
    return
  }
  func.func @transform_0(%arg0: i32) -> (i32, i32, i32) {
    %c0_i32 = arith.constant 0 : i32
    %c0_i32_0 = arith.constant 0 : i32
    %c0_i32_1 = arith.constant 0 : i32
    return %arg0, %c0_i32, %c0_i32_0 : i32, i32, i32
  }
  func.func @transform_1(%arg0: i32) -> (i32, i32, i32) {
    %c0_i32 = arith.constant 0 : i32
    %c0_i32_0 = arith.constant 0 : i32
    %c0_i32_1 = arith.constant 0 : i32
    return %arg0, %c0_i32, %c0_i32_0 : i32, i32, i32
  }
  func.func @transform_2(%arg0: i32) -> (i32, i32) {
    %c0_i32 = arith.constant 0 : i32
    %c0_i32_0 = arith.constant 0 : i32
    %c0_i32_1 = arith.constant 0 : i32
    return %c0_i32, %c0_i32_0 : i32, i32
  }
  func.func @transform_3(%arg0: i32) -> (i32, i32) {
    %c0_i32 = arith.constant 0 : i32
    %c0_i32_0 = arith.constant 0 : i32
    %c0_i32_1 = arith.constant 0 : i32
    return %c0_i32, %c0_i32_0 : i32, i32
  }
  func.func @transform_4(%arg0: i32) -> (i32, i32) {
    %c0_i32 = arith.constant 0 : i32
    %c0_i32_0 = arith.constant 0 : i32
    %c0_i32_1 = arith.constant 0 : i32
    return %c0_i32, %c0_i32_0 : i32, i32
  }
  func.func @transform_5(%arg0: i32) -> (i32, i32) {
    %c0_i32 = arith.constant 0 : i32
    %c0_i32_0 = arith.constant 0 : i32
    %c0_i32_1 = arith.constant 0 : i32
    return %c0_i32, %c0_i32_0 : i32, i32
  }
  func.func @transform_6(%arg0: i32) -> (i32, i32) {
    %c0_i32 = arith.constant 0 : i32
    %c0_i32_0 = arith.constant 0 : i32
    %c0_i32_1 = arith.constant 0 : i32
    return %c0_i32, %c0_i32_0 : i32, i32
  }
  func.func @transform_7(%arg0: i32) -> (i32, i32) {
    %c0_i32 = arith.constant 0 : i32
    %c0_i32_0 = arith.constant 0 : i32
    %c0_i32_1 = arith.constant 0 : i32
    return %c0_i32, %c0_i32_0 : i32, i32
  }
  func.func @transform_8(%arg0: i32) -> (i32, i32) {
    %c0_i32 = arith.constant 0 : i32
    %c0_i32_0 = arith.constant 0 : i32
    %c0_i32_1 = arith.constant 0 : i32
    return %c0_i32, %c0_i32_0 : i32, i32
  }
  func.func @transform_9(%arg0: i32) -> (i32, i32) {
    %c0_i32 = arith.constant 0 : i32
    %c0_i32_0 = arith.constant 0 : i32
    %c0_i32_1 = arith.constant 0 : i32
    return %c0_i32, %c0_i32_0 : i32, i32
  }
  func.func @transform_10(%arg0: i32) -> (i32, i32) {
    %c0_i32 = arith.constant 0 : i32
    %c0_i32_0 = arith.constant 0 : i32
    %c0_i32_1 = arith.constant 0 : i32
    return %c0_i32, %c0_i32_0 : i32, i32
  }
  func.func @transform_11(%arg0: i32) -> (i32, i32) {
    %c0_i32 = arith.constant 0 : i32
    %c0_i32_0 = arith.constant 0 : i32
    %c0_i32_1 = arith.constant 0 : i32
    return %c0_i32, %c0_i32_0 : i32, i32
  }
  func.func @transform_12(%arg0: i32) -> (i32, i32) {
    %c0_i32 = arith.constant 0 : i32
    %c0_i32_0 = arith.constant 0 : i32
    %c0_i32_1 = arith.constant 0 : i32
    return %c0_i32, %c0_i32_0 : i32, i32
  }
  func.func @transform_13(%arg0: i32) -> (i32, i32) {
    %c0_i32 = arith.constant 0 : i32
    %c0_i32_0 = arith.constant 0 : i32
    %c0_i32_1 = arith.constant 0 : i32
    return %c0_i32, %c0_i32_0 : i32, i32
  }
  func.func @transform_14(%arg0: i32) -> (i32, i32) {
    %c0_i32 = arith.constant 0 : i32
    %c0_i32_0 = arith.constant 0 : i32
    %c0_i32_1 = arith.constant 0 : i32
    return %c0_i32, %c0_i32_0 : i32, i32
  }
  func.func @transform_15(%arg0: i32) -> (i32, i32) {
    %c0_i32 = arith.constant 0 : i32
    %c0_i32_0 = arith.constant 0 : i32
    %c0_i32_1 = arith.constant 0 : i32
    return %c0_i32, %c0_i32_0 : i32, i32
  }
  func.func @transform_16(%arg0: i32) -> (i32, i32) {
    %c0_i32 = arith.constant 0 : i32
    %c0_i32_0 = arith.constant 0 : i32
    %c0_i32_1 = arith.constant 0 : i32
    return %c0_i32, %c0_i32_0 : i32, i32
  }
  func.func @transform_17(%arg0: i32) -> (i32, i32) {
    %c0_i32 = arith.constant 0 : i32
    %c0_i32_0 = arith.constant 0 : i32
    %c0_i32_1 = arith.constant 0 : i32
    return %c0_i32, %c0_i32_0 : i32, i32
  }
  func.func @transform_18(%arg0: i32) -> (i32, i32) {
    %c0_i32 = arith.constant 0 : i32
    %c0_i32_0 = arith.constant 0 : i32
    %c0_i32_1 = arith.constant 0 : i32
    return %c0_i32, %c0_i32_0 : i32, i32
  }
  func.func @transform_19(%arg0: i32) -> (i32, i32) {
    %c0_i32 = arith.constant 0 : i32
    %c0_i32_0 = arith.constant 0 : i32
    %c0_i32_1 = arith.constant 0 : i32
    return %c0_i32, %c0_i32_0 : i32, i32
  }
  func.func @transform_20(%arg0: i32) -> (i32, i32) {
    %c0_i32 = arith.constant 0 : i32
    %c0_i32_0 = arith.constant 0 : i32
    %c0_i32_1 = arith.constant 0 : i32
    return %c0_i32, %c0_i32_0 : i32, i32
  }
  func.func @transform_21(%arg0: i32) -> (i32, i32) {
    %c0_i32 = arith.constant 0 : i32
    %c0_i32_0 = arith.constant 0 : i32
    %c0_i32_1 = arith.constant 0 : i32
    return %c0_i32, %c0_i32_0 : i32, i32
  }
  func.func @transform_22(%arg0: i32) -> (i32, i32) {
    %c0_i32 = arith.constant 0 : i32
    %c0_i32_0 = arith.constant 0 : i32
    %c0_i32_1 = arith.constant 0 : i32
    return %c0_i32, %c0_i32_0 : i32, i32
  }
  func.func @transform_23(%arg0: i32) -> (i32, i32) {
    %c0_i32 = arith.constant 0 : i32
    %c0_i32_0 = arith.constant 0 : i32
    %c0_i32_1 = arith.constant 0 : i32
    return %c0_i32, %c0_i32_0 : i32, i32
  }
  func.func @transform_24(%arg0: i32) -> (i32, i32) {
    %c0_i32 = arith.constant 0 : i32
    %c0_i32_0 = arith.constant 0 : i32
    %c0_i32_1 = arith.constant 0 : i32
    return %c0_i32, %c0_i32_0 : i32, i32
  }
  func.func @transform_25(%arg0: i32) -> (i32, i32, i32) {
    %c0_i32 = arith.constant 0 : i32
    %c0_i32_0 = arith.constant 0 : i32
    %c0_i32_1 = arith.constant 0 : i32
    return %arg0, %c0_i32, %c0_i32_0 : i32, i32, i32
  }
}

module attributes {stable_mosaic.version = 11 : i64} {
  func.func @_ln_proj_silu_kernel(%arg0: i32, %arg1: memref<32x32xbf16, #tpu.memory_space<vmem>>, %arg2: memref<1x32xf32, #tpu.memory_space<vmem>>, %arg3: memref<1x32xf32, #tpu.memory_space<vmem>>, %arg4: memref<32x32xbf16, #tpu.memory_space<vmem>>, %arg5: memref<1x32xf32, #tpu.memory_space<vmem>>, %arg6: memref<32x32xf32, #tpu.memory_space<vmem>>) attributes {dimension_semantics = [#tpu.dimension_semantics<parallel>], iteration_bounds = array<i64: 1>, scalar_prefetch = 0 : i64, scratch_operands = 0 : i64, tpu.core_type = #tpu.core_type<tc>, window_params = [{transform_indices = @transform_0, window_bounds = array<i64: 32, 32>}, {pipeline_mode = #tpu.pipeline_mode<synchronous>, transform_indices = @transform_1, window_bounds = array<i64: 1, 32>}, {pipeline_mode = #tpu.pipeline_mode<synchronous>, transform_indices = @transform_2, window_bounds = array<i64: 1, 32>}, {pipeline_mode = #tpu.pipeline_mode<synchronous>, transform_indices = @transform_3, window_bounds = array<i64: 32, 32>}, {pipeline_mode = #tpu.pipeline_mode<synchronous>, transform_indices = @transform_4, window_bounds = array<i64: 1, 32>}, {transform_indices = @transform_5, window_bounds = array<i64: 32, 32>}]} {
    %c0 = arith.constant 0 : index
    %c0_0 = arith.constant 0 : index
    %0 = vector.load %arg1[%c0, %c0_0] : memref<32x32xbf16, #tpu.memory_space<vmem>>, vector<32x32xbf16>
    %1 = arith.extf %0 : vector<32x32xbf16> to vector<32x32xf32>
    %c0_1 = arith.constant 0 : index
    %c0_2 = arith.constant 0 : index
    %2 = vector.load %arg2[%c0_1, %c0_2] : memref<1x32xf32, #tpu.memory_space<vmem>>, vector<1x32xf32>
    %c0_3 = arith.constant 0 : index
    %c0_4 = arith.constant 0 : index
    %3 = vector.load %arg3[%c0_3, %c0_4] : memref<1x32xf32, #tpu.memory_space<vmem>>, vector<1x32xf32>
    %cst = arith.constant dense<0.000000e+00> : vector<32xf32>
    %4 = vector.multi_reduction <add>, %1, %cst [1] : vector<32x32xf32> to vector<32xf32>
    %5 = vector.shape_cast %4 : vector<32xf32> to vector<32x1xf32>
    %cst_5 = arith.constant 3.200000e+01 : f32
    %6 = vector.broadcast %cst_5 : f32 to vector<32x1xf32>
    %7 = arith.divf %5, %6 : vector<32x1xf32>
    %8 = vector.broadcast %7 : vector<32x1xf32> to vector<32x32xf32>
    %9 = arith.subf %1, %8 : vector<32x32xf32>
    %10 = arith.mulf %9, %9 : vector<32x32xf32>
    %cst_6 = arith.constant dense<0.000000e+00> : vector<32xf32>
    %11 = vector.multi_reduction <add>, %10, %cst_6 [1] : vector<32x32xf32> to vector<32xf32>
    %12 = vector.shape_cast %11 : vector<32xf32> to vector<32x1xf32>
    %cst_7 = arith.constant 3.200000e+01 : f32
    %13 = vector.broadcast %cst_7 : f32 to vector<32x1xf32>
    %14 = arith.divf %12, %13 : vector<32x1xf32>
    %15 = vector.broadcast %7 : vector<32x1xf32> to vector<32x32xf32>
    %16 = arith.subf %1, %15 : vector<32x32xf32>
    %cst_8 = arith.constant 9.99999974E-6 : f32
    %17 = vector.broadcast %cst_8 : f32 to vector<32x1xf32>
    %18 = arith.addf %14, %17 : vector<32x1xf32>
    %19 = math.rsqrt %18 : vector<32x1xf32>
    %20 = vector.broadcast %19 : vector<32x1xf32> to vector<32x32xf32>
    %21 = arith.mulf %16, %20 : vector<32x32xf32>
    %22 = vector.broadcast %2 : vector<1x32xf32> to vector<32x32xf32>
    %23 = arith.mulf %21, %22 : vector<32x32xf32>
    %24 = vector.broadcast %3 : vector<1x32xf32> to vector<32x32xf32>
    %25 = arith.addf %23, %24 : vector<32x32xf32>
    %26 = arith.truncf %25 : vector<32x32xf32> to vector<32x32xbf16>
    %c0_9 = arith.constant 0 : index
    %c0_10 = arith.constant 0 : index
    %27 = vector.load %arg4[%c0_9, %c0_10] : memref<32x32xbf16, #tpu.memory_space<vmem>>, vector<32x32xbf16>
    %cst_11 = arith.constant dense<0.000000e+00> : vector<32x32xf32>
    %28 = tpu.matmul %26, %27, %cst_11 {dimension_numbers = #tpu.dot_dimension_numbers<[1], [0], [0], [1], [0, 0, 1, 1], [], []>} : vector<32x32xbf16>, vector<32x32xbf16>, vector<32x32xf32> -> vector<32x32xf32>
    %c0_12 = arith.constant 0 : index
    %c0_13 = arith.constant 0 : index
    %29 = vector.load %arg5[%c0_12, %c0_13] : memref<1x32xf32, #tpu.memory_space<vmem>>, vector<1x32xf32>
    %30 = vector.broadcast %29 : vector<1x32xf32> to vector<32x32xf32>
    %31 = arith.addf %28, %30 : vector<32x32xf32>
    %32 = arith.negf %31 : vector<32x32xf32>
    %33 = math.exp %32 : vector<32x32xf32>
    %cst_14 = arith.constant 1.000000e+00 : f32
    %34 = vector.broadcast %cst_14 : f32 to vector<32x32xf32>
    %35 = arith.addf %34, %33 : vector<32x32xf32>
    %36 = arith.divf %34, %35 : vector<32x32xf32>
    %37 = arith.mulf %31, %36 : vector<32x32xf32>
    %c0_15 = arith.constant 0 : index
    %c0_16 = arith.constant 0 : index
    %38 = vector.load %arg6[%c0_15, %c0_16] : memref<32x32xf32, #tpu.memory_space<vmem>>, vector<32x32xf32>
    tpu.vector_store %arg6[%c0_15, %c0_16], %37 {strides = array<i32>} : memref<32x32xf32, #tpu.memory_space<vmem>>, vector<32x32xf32>,
    return
  }
  func.func @transform_0(%arg0: i32) -> (i32, i32) {
    %c0_i32 = arith.constant 0 : i32
    %c0_i32_0 = arith.constant 0 : i32
    return %arg0, %c0_i32 : i32, i32
  }
  func.func @transform_1(%arg0: i32) -> (i32, i32) {
    %c0_i32 = arith.constant 0 : i32
    %c0_i32_0 = arith.constant 0 : i32
    %c0_i32_1 = arith.constant 0 : i32
    return %c0_i32, %c0_i32_0 : i32, i32
  }
  func.func @transform_2(%arg0: i32) -> (i32, i32) {
    %c0_i32 = arith.constant 0 : i32
    %c0_i32_0 = arith.constant 0 : i32
    %c0_i32_1 = arith.constant 0 : i32
    return %c0_i32, %c0_i32_0 : i32, i32
  }
  func.func @transform_3(%arg0: i32) -> (i32, i32) {
    %c0_i32 = arith.constant 0 : i32
    %c0_i32_0 = arith.constant 0 : i32
    %c0_i32_1 = arith.constant 0 : i32
    return %c0_i32, %c0_i32_0 : i32, i32
  }
  func.func @transform_4(%arg0: i32) -> (i32, i32) {
    %c0_i32 = arith.constant 0 : i32
    %c0_i32_0 = arith.constant 0 : i32
    %c0_i32_1 = arith.constant 0 : i32
    return %c0_i32, %c0_i32_0 : i32, i32
  }
  func.func @transform_5(%arg0: i32) -> (i32, i32) {
    %c0_i32 = arith.constant 0 : i32
    %c0_i32_0 = arith.constant 0 : i32
    return %arg0, %c0_i32 : i32, i32
  }
}

</mosaic_0001>

<llo_original>
// kernel: tpu_custom_call.1
$region0: #{tpu_custom_call.1}
  #allocation0 [shape = 'u32[]', space=smem, size = 0x4, offset = 0x4, fixed_abs, tag = 'smem constant byte address 0x4 - core index']
  #allocation1 [shape = 'u32[72,128]{1,0:T(1,128)}', space=vmem, size = 0x9000, scoped, tag = 'internal scratch']
  %s0 = inlined_call_operand.hbm [shape: f32[8,128], index: 0, kind: input, shape index: {}]
  %s1 = inlined_call_operand.hbm [shape: f32[8,128], index: 1, kind: output, shape index: {}]
  %s2 = sld [smem:[#allocation0]]
  $region18: #{tpu_custom_call.1} parent=0
    _
  %s4 = ssub.s32 1, %s2
  %s5 = scalar_select 0, %s4, %s2
  $region1: #{tpu_custom_call.1} parent=0
    #allocation2 [shape = 'u8[4096]{0}', space=vmem, size = 0x1000, scoped, tag = 'input window, operand 0, single buffered']
    #allocation3 [shape = 's32[1]{0}', space=sflag, size = 0x4, scoped, tag = 'scoped memory for tpu_custom_call.1']
    #allocation4 [shape = 's32[1]{0}', space=sflag, size = 0x4, scoped, tag = 'scoped memory for tpu_custom_call.1']
    #allocation5 [shape = 'u8[4096]{0}', space=vmem, size = 0x1000, scoped, tag = 'output window, operand 0, single buffered']
    %6 = vsyncpa [#allocation3], 0
    %7 = vsyncpa [#allocation4], 0
    // Predicated region
    $region2: #{tpu_custom_call.1} parent=1 // pred_check
      _
    $region3: #{tpu_custom_call.1} parent=1 // pred_check_branch
      %9 = sbr.rel (0) target = $region5
    $region4: #{tpu_custom_call.1} parent=1 // pred_region
      %11 = vsyncadd [#allocation3], 0
      %s13 = sshll.u32 %s0, 4
      %s14 = int_to_ptr.hbm [resolvable:$true] %s13
      %s15 = sshll.u32 [#allocation2], 4
      %s16 = int_to_ptr.vmem [resolvable:$true] %s15
      %18 = dma.hbm_to_vmem [thread:$0]  %s14, 128, %s16, [#allocation3]
    $region5: #{tpu_custom_call.1} parent=1 // pred_fallthru
      _
    // Predicated region
    $region6: #{tpu_custom_call.1} parent=1 // pred_check
      _
    $region7: #{tpu_custom_call.1} parent=1 // pred_check_branch
      %20 = sbr.rel (0) target = $region9
    $region8: #{tpu_custom_call.1} parent=1 // pred_region
      %22 = dma.done [#allocation3], 128
    $region9: #{tpu_custom_call.1} parent=1 // pred_fallthru
      _
    %v23 = vld [vmem:[#allocation2] sm:$0xff]
    %v24 = vadd.f32 %v23, 1.0
    %25 = vst [vmem:[#allocation5] sm:$0xff] %v24
    // Predicated region
    $region10: #{tpu_custom_call.1} parent=1 // pred_check
      _
    $region11: #{tpu_custom_call.1} parent=1 // pred_check_branch
      %27 = sbr.rel (0) target = $region13
    $region12: #{tpu_custom_call.1} parent=1 // pred_region
      %29 = vsyncadd [#allocation4], 0
      %s31 = sshll.u32 [#allocation5], 4
      %s32 = int_to_ptr.vmem [resolvable:$true] %s31
      %s33 = sshll.u32 %s1, 4
      %s34 = int_to_ptr.hbm [resolvable:$true] %s33
      %36 = dma.vmem_to_hbm [thread:$0]  %s32, 128, %s34, [#allocation4]
    $region13: #{tpu_custom_call.1} parent=1 // pred_fallthru
      _
    // Predicated region
    $region14: #{tpu_custom_call.1} parent=1 // pred_check
      _
    $region15: #{tpu_custom_call.1} parent=1 // pred_check_branch
      %38 = sbr.rel (0) target = $region17
    $region16: #{tpu_custom_call.1} parent=1 // pred_region
      %40 = dma.done [#allocation4], 128
    $region17: #{tpu_custom_call.1} parent=1 // pred_fallthru
      _
    %41 = vsyncpa [#allocation3], 1
    %42 = vsyncpa [#allocation4], 1

// kernel: vision_mega_forward.4
$region0: #{vision_mega_forward.4}
  #allocation0 [shape = 'u32[]', space=smem, size = 0x4, offset = 0x4, fixed_abs, tag = 'smem constant byte address 0x4 - core index']
  #allocation1 [shape = 'u32[72,128]{1,0:T(1,128)}', space=vmem, size = 0x9000, scoped, tag = 'internal scratch']
  %s0 = inlined_call_operand.vmem [shape: f32[32,48], index: 0, kind: input, shape index: {}]
  %s1 = inlined_call_operand.vmem [shape: bf16[48,32], index: 1, kind: input, shape index: {}]
  %s2 = inlined_call_operand.vmem [shape: f32[1,32], index: 2, kind: input, shape index: {}]
  %s3 = inlined_call_operand.vmem [shape: f32[32,32], index: 3, kind: output, shape index: {}]
  %s4 = sld [smem:[#allocation0]]
  $region22: #{vision_mega_forward.4} parent=0
    _
  %s6 = ssub.s32 1, %s4
  %s7 = scalar_select 0, %s6, %s4
  // Predicated region
  $region2: #{vision_mega_forward.4} parent=0 // pred_check
    _
  $region3: #{vision_mega_forward.4} parent=0 // pred_check_branch
    %9 = sbr.rel (0) target = $region5
  $region4: #{vision_mega_forward.4} parent=0 // pred_region
    _
  $region5: #{vision_mega_forward.4} parent=0 // pred_fallthru
    _
  // Predicated region
  $region6: #{vision_mega_forward.4} parent=0 // pred_check
    _
  $region7: #{vision_mega_forward.4} parent=0 // pred_check_branch
    %11 = sbr.rel (0) target = $region9
  $region8: #{vision_mega_forward.4} parent=0 // pred_region
    _
  $region9: #{vision_mega_forward.4} parent=0 // pred_fallthru
    _
  // Predicated region
  $region10: #{vision_mega_forward.4} parent=0 // pred_check
    _
  $region11: #{vision_mega_forward.4} parent=0 // pred_check_branch
    %13 = sbr.rel (0) target = $region13
  $region12: #{vision_mega_forward.4} parent=0 // pred_region
    _
  $region13: #{vision_mega_forward.4} parent=0 // pred_fallthru
    _
  %v15 = vld [vmem:[%s0] sm:$0xff]
  %v16 = vld [vmem:[%s0 + $0x8] sm:$0xff]
  %v17 = vld [vmem:[%s0 + $0x10] sm:$0xff]
  %v18 = vld [vmem:[%s0 + $0x18] sm:$0xff]
  %v19 = vpack.c.bf16 %v16, %v15
  %v20 = vpack.c.bf16 %v18, %v17
  %v21 = vld [vmem:[%s1] sm:$0xf]
  %v22 = vld [vmem:[%s1 + $0x4] sm:$0xf]
  %v23 = vld [vmem:[%s1 + $0x8] sm:$0xf]
  %v24 = vld [vmem:[%s1 + $0xc] sm:$0xf]
  %v25 = vld [vmem:[%s1 + $0x10] sm:$0xf]
  %v26 = vld [vmem:[%s1 + $0x14] sm:$0xf]
  %v27 = vld [vmem:[%s2] sm:$0x1]
  %v29 = vperm.slane %v27, 0
  %v37 = vunpack.c.l.b16 %v21
  %v38 = vunpack.c.l.b16 %v22
  %v39 = vunpack.c.l.b16 %v23
  %v40 = vunpack.c.l.b16 %v24
  %v41 = vunpack.c.l.b16 %v25
  %v42 = vunpack.c.l.b16 %v26
  %v43 = vpack.c.b16 %v38, %v37
  %v44 = vpack.c.b16 %v40, %v39
  %v45 = vpack.c.b16 %v42, %v41
  %vm49 = vcmask 392192
  %v51 = vsel %vm49, %v19, 0
  %v54 = vsel %vm49, %v20, 0
  %56 = vmatpush.bf16.msra.mxu0 0
  %57 = vmatpush.bf16.msra.mxu0 0
  %58 = vmatpush.bf16.msra.mxu0 0
  %59 = vmatpush.bf16.msra.mxu0 0
  %60 = vmatpush.bf16.msra.mxu0 0
  %61 = vmatpush.bf16.msra.mxu0 %v45
  %62 = vmatpush.bf16.msra.mxu0 %v44
  %63 = vmatpush.bf16.msra.mxu0 %v43
  %64 = vmatmul.bf16.gmra.mxu0 %v51
  %v65 = vpop.f32.mrf.mxu0
  %v66 = vadd.f32 %v29, %v65
  %v67 = vpop.f32.mrf.mxu0
  %v68 = vadd.f32 %v29, %v67
  %69 = vmatmul.bf16.gmra.mxu0 %v54
  %v70 = vpop.f32.mrf.mxu0
  %v71 = vadd.f32 %v29, %v70
  %v72 = vpop.f32.mrf.mxu0
  %v73 = vadd.f32 %v29, %v72
  %74 = vdwg.mxu0
  %vm75 = vcmask 261120
  %76 = vst.msk [vmem:[%s3] sm:$0xff] %vm75, %v66
  %77 = vst.msk [vmem:[%s3 + $0x8] sm:$0xff] %vm75, %v68
  %78 = vst.msk [vmem:[%s3 + $0x10] sm:$0xff] %vm75, %v71
  %79 = vst.msk [vmem:[%s3 + $0x18] sm:$0xff] %vm75, %v73
  // Predicated region
  $region14: #{vision_mega_forward.4} parent=0 // pred_check
    _
  $region15: #{vision_mega_forward.4} parent=0 // pred_check_branch
    %81 = sbr.rel (0) target = $region17
  $region16: #{vision_mega_forward.4} parent=0 // pred_region
    _
  $region17: #{vision_mega_forward.4} parent=0 // pred_fallthru
    _
  // Predicated region
  $region18: #{vision_mega_forward.4} parent=0 // pred_check
    _
  $region19: #{vision_mega_forward.4} parent=0 // pred_check_branch
    %83 = sbr.rel (0) target = $region21
  $region20: #{vision_mega_forward.4} parent=0 // pred_region
    _
  $region21: #{vision_mega_forward.4} parent=0 // pred_fallthru
    _

// kernel: reverse.11
$region0: #{reverse.11}
  %s0 = inlined_call_operand.vmem [shape: f32[2,32,15], index: 0, kind: input, shape index: {}]
  %s1 = inlined_call_operand.vmem [shape: f32[2,32,15], index: 1, kind: output, shape index: {}]
  $region1: #{reverse.11} parent=0
    #allocation0 [shape = 'u8[24576]{0}', space=vmem, size = 0x6000, scoped, tag = 'operand span for operand 0']
    #allocation1 [shape = 'u8[16384]{0}', space=vmem, size = 0x4000, scoped, tag = 'operand span for operand 1']
    %s2 = scalar_lea.vmem [#allocation0], 8
    // Predicated region
    $region2: #{reverse.11} parent=1 // pred_check
      _
    $region3: #{reverse.11} parent=1 // pred_check_branch
      %4 = sbr.rel (0) target = $region5
    $region4: #{reverse.11} parent=1 // pred_region
      // Predicated region
      $region6: #{reverse.11} parent=4 // pred_check
        _
      $region7: #{reverse.11} parent=4 // pred_check_branch
        %6 = sbr.rel (0) target = $region9
      $region8: #{reverse.11} parent=4 // pred_region
        // Predicated region
        $region21: #{reverse.11} parent=8 // pred_check
          _
        $region22: #{reverse.11} parent=8 // pred_check_branch
          %28 = sbr.rel (0) target = $region24
        $region23: #{reverse.11} parent=8 // pred_region
          loop: start=0, step=1, limit=1
          $region25: #{reverse.11} parent=23 // loop_pre_header
            _
          $region26: #{reverse.11} parent=23 // loop_header
            %s30 = sphi 0, %s34
            %p31 = scmp.ge.s32.totalorder %s30, 1
            %s35 = sphi %s0, %s0
            %s36 = sphi %s2, %s2
          $region27: #{reverse.11} parent=23 // loop_header_branch
            %33 = sbr.rel (%p31) target = $region31
          $region28: #{reverse.11} parent=23 // loop_body
            %v37 = vld [vmem:[%s35] sm:$0xff]
            %38 = vst [vmem:[%s36] sm:$0xff] %v37
            %v39 = vld [vmem:[%s35 + $0x8] sm:$0xff]
            %40 = vst [vmem:[%s36 + $0x8] sm:$0xff] %v39
            %v41 = vld [vmem:[%s35 + $0x10] sm:$0xff]
            %42 = vst [vmem:[%s36 + $0x18] sm:$0xff] %v41
            %v43 = vld [vmem:[%s35 + $0x18] sm:$0xff]
            %44 = vst [vmem:[%s36 + $0x20] sm:$0xff] %v43
          $region29: #{reverse.11} parent=23 // loop_footer
            %s34 = sadd.s32 1, %s30
          $region30: #{reverse.11} parent=23 // loop_footer_branch
            %29 = sbr.rel target = $region26
          $region31: #{reverse.11} parent=23 // loop_exit
            _
        $region24: #{reverse.11} parent=8 // pred_fallthru
          _
        // Predicated region
        $region32: #{reverse.11} parent=8 // pred_check
          _
        $region33: #{reverse.11} parent=8 // pred_check_branch
          %46 = sbr.rel target = $region35
        $region34: #{reverse.11} parent=8 // pred_region
          _
        $region35: #{reverse.11} parent=8 // pred_fallthru
          _
      $region9: #{reverse.11} parent=4 // pred_fallthru
        _
      // Predicated region
      $region10: #{reverse.11} parent=4 // pred_check
        _
      $region11: #{reverse.11} parent=4 // pred_check_branch
        %8 = sbr.rel target = $region13
      $region12: #{reverse.11} parent=4 // pred_region
        %s10 = ssub.s32 256, 1
        loop: start=0, step=1, limit=1
        $region14: #{reverse.11} parent=12 // loop_pre_header
          _
        $region15: #{reverse.11} parent=12 // loop_header
          %s12 = sphi 0, %s16
          %p13 = scmp.ge.s32.totalorder %s12, 1
          %s17 = sphi %s0, %s0
          %s18 = sphi %s2, %s2
        $region16: #{reverse.11} parent=12 // loop_header_branch
          %15 = sbr.rel (%p13) target = $region20
        $region17: #{reverse.11} parent=12 // loop_body
          %v19 = vld [vmem:[%s17] sm:%s10]
          %20 = vst [vmem:[%s18] sm:%s10] %v19
          %v21 = vld [vmem:[%s17 + $0x8] sm:%s10]
          %22 = vst [vmem:[%s18 + $0x8] sm:%s10] %v21
          %v23 = vld [vmem:[%s17 + $0x10] sm:%s10]
          %24 = vst [vmem:[%s18 + $0x18] sm:%s10] %v23
          %v25 = vld [vmem:[%s17 + $0x18] sm:%s10]
          %26 = vst [vmem:[%s18 + $0x20] sm:%s10] %v25
        $region18: #{reverse.11} parent=12 // loop_footer
          %s16 = sadd.s32 1, %s12
        $region19: #{reverse.11} parent=12 // loop_footer_branch
          %11 = sbr.rel target = $region15
        $region20: #{reverse.11} parent=12 // loop_exit
          _
      $region13: #{reverse.11} parent=4 // pred_fallthru
        _
    $region5: #{reverse.11} parent=1 // pred_fallthru
      _
    %47 = vnop
    %s48 = scalar_lea.vmem [#allocation0], 8
    %s49 = scalar_lea.vmem %s48, 7 [#allocation0]
    %v50 = vld [vmem:[%s49] ss:$-1 sm:$0xff]
    %v51 = vrot.slane %v50, 1
    %52 = vst [vmem:[#allocation1] sm:$0xff] %v51
    %s53 = scalar_lea.vmem [#allocation0], 16
    %s54 = scalar_lea.vmem %s53, 7 [#allocation0]
    %v55 = vld [vmem:[%s54] ss:$-1 sm:$0xff]
    %v56 = vrot.slane %v55, 1
    %v57 = vlaneseq
    %v58 = vshrl.u32 %v57, 7
    %vm59 = vcmp.lt.s32.totalorder %v58, 7
    %60 = vst.msk [vmem:[#allocation1] sm:$0xff] %vm59, %v56
    %s61 = scalar_lea.vmem [#allocation1], 8
    %s62 = scalar_lea.vmem [#allocation0], 7
    %v63 = vld [vmem:[%s62] ss:$-1 sm:$0xff]
    %v64 = vrot.slane %v63, 1
    %65 = vst [vmem:[%s61] sm:$0xff] %v64
    %s66 = scalar_lea.vmem [#allocation0], 8
    %s67 = scalar_lea.vmem %s66, 7 [#allocation0]
    %v68 = vld [vmem:[%s67] ss:$-1 sm:$0xff]
    %v69 = vrot.slane %v68, 1
    %v70 = vlaneseq
    %v71 = vshrl.u32 %v70, 7
    %vm72 = vcmp.lt.s32.totalorder %v71, 7
    %73 = vst.msk [vmem:[%s61] sm:$0xff] %vm72, %v69
    %s74 = scalar_lea.vmem [#allocation1], 16
    %s75 = scalar_lea.vmem [#allocation0], 24
    %s76 = scalar_lea.vmem %s75, 8 [#allocation0]
    %s77 = scalar_lea.vmem %s76, 7 [#allocation0]
    %v78 = vld [vmem:[%s77] ss:$-1 sm:$0xff]
    %v79 = vrot.slane %v78, 1
    %80 = vst [vmem:[%s74] sm:$0xff] %v79
    %s81 = scalar_lea.vmem %s75, 16 [#allocation0]
    %s82 = scalar_lea.vmem %s81, 7 [#allocation0]
    %v83 = vld [vmem:[%s82] ss:$-1 sm:$0xff]
    %v84 = vrot.slane %v83, 1
    %v85 = vlaneseq
    %v86 = vshrl.u32 %v85, 7
    %vm87 = vcmp.lt.s32.totalorder %v86, 7
    %88 = vst.msk [vmem:[%s74] sm:$0xff] %vm87, %v84
    %s89 = scalar_lea.vmem %s74, 8 [#allocation1]
    %s90 = scalar_lea.vmem %s75, 7 [#allocation0]
    %v91 = vld [vmem:[%s90] ss:$-1 sm:$0xff]
    %v92 = vrot.slane %v91, 1
    %93 = vst [vmem:[%s89] sm:$0xff] %v92
    %s94 = scalar_lea.vmem %s75, 8 [#allocation0]
    %s95 = scalar_lea.vmem %s94, 7 [#allocation0]
    %v96 = vld [vmem:[%s95] ss:$-1 sm:$0xff]
    %v97 = vrot.slane %v96, 1
    %v98 = vlaneseq
    %v99 = vshrl.u32 %v98, 7
    %vm100 = vcmp.lt.s32.totalorder %v99, 7
    %101 = vst.msk [vmem:[%s89] sm:$0xff] %vm100, %v97
    // Predicated region
    $region36: #{reverse.11} parent=1 // pred_check
      _
    $region37: #{reverse.11} parent=1 // pred_check_branch
      %103 = sbr.rel (0) target = $region39
    $region38: #{reverse.11} parent=1 // pred_region
      // Predicated region
      $region40: #{reverse.11} parent=38 // pred_check
        _
      $region41: #{reverse.11} parent=38 // pred_check_branch
        %105 = sbr.rel (0) target = $region43
      $region42: #{reverse.11} parent=38 // pred_region
        // Predicated region
        $region55: #{reverse.11} parent=42 // pred_check
          _
        $region56: #{reverse.11} parent=42 // pred_check_branch
          %127 = sbr.rel (0) target = $region58
        $region57: #{reverse.11} parent=42 // pred_region
          loop: start=0, step=1, limit=1
          $region59: #{reverse.11} parent=57 // loop_pre_header
            _
          $region60: #{reverse.11} parent=57 // loop_header
            %s129 = sphi 0, %s133
            %p130 = scmp.ge.s32.totalorder %s129, 1
            %s134 = sphi [#allocation1], [#allocation1]
            %s135 = sphi %s1, %s1
          $region61: #{reverse.11} parent=57 // loop_header_branch
            %132 = sbr.rel (%p130) target = $region65
          $region62: #{reverse.11} parent=57 // loop_body
            %v136 = vld [vmem:[%s134] sm:$0xff]
            %137 = vst [vmem:[%s135] sm:$0xff] %v136
            %v138 = vld [vmem:[%s134 + $0x8] sm:$0xff]
            %139 = vst [vmem:[%s135 + $0x8] sm:$0xff] %v138
            %v140 = vld [vmem:[%s134 + $0x10] sm:$0xff]
            %141 = vst [vmem:[%s135 + $0x10] sm:$0xff] %v140
            %v142 = vld [vmem:[%s134 + $0x18] sm:$0xff]
            %143 = vst [vmem:[%s135 + $0x18] sm:$0xff] %v142
          $region63: #{reverse.11} parent=57 // loop_footer
            %s133 = sadd.s32 1, %s129
          $region64: #{reverse.11} parent=57 // loop_footer_branch
            %128 = sbr.rel target = $region60
          $region65: #{reverse.11} parent=57 // loop_exit
            _
        $region58: #{reverse.11} parent=42 // pred_fallthru
          _
        // Predicated region
        $region66: #{reverse.11} parent=42 // pred_check
          _
        $region67: #{reverse.11} parent=42 // pred_check_branch
          %145 = sbr.rel target = $region69
        $region68: #{reverse.11} parent=42 // pred_region
          _
        $region69: #{reverse.11} parent=42 // pred_fallthru
          _
      $region43: #{reverse.11} parent=38 // pred_fallthru
        _
      // Predicated region
      $region44: #{reverse.11} parent=38 // pred_check
        _
      $region45: #{reverse.11} parent=38 // pred_check_branch
        %107 = sbr.rel target = $region47
      $region46: #{reverse.11} parent=38 // pred_region
        %s109 = ssub.s32 256, 1
        loop: start=0, step=1, limit=1
        $region48: #{reverse.11} parent=46 // loop_pre_header
          _
        $region49: #{reverse.11} parent=46 // loop_header
          %s111 = sphi 0, %s115
          %p112 = scmp.ge.s32.totalorder %s111, 1
          %s116 = sphi [#allocation1], [#allocation1]
          %s117 = sphi %s1, %s1
        $region50: #{reverse.11} parent=46 // loop_header_branch
          %114 = sbr.rel (%p112) target = $region54
        $region51: #{reverse.11} parent=46 // loop_body
          %v118 = vld [vmem:[%s116] sm:%s109]
          %119 = vst [vmem:[%s117] sm:%s109] %v118
          %v120 = vld [vmem:[%s116 + $0x8] sm:%s109]
          %121 = vst [vmem:[%s117 + $0x8] sm:%s109] %v120
          %v122 = vld [vmem:[%s116 + $0x10] sm:%s109]
          %123 = vst [vmem:[%s117 + $0x10] sm:%s109] %v122
          %v124 = vld [vmem:[%s116 + $0x18] sm:%s109]
          %125 = vst [vmem:[%s117 + $0x18] sm:%s109] %v124
        $region52: #{reverse.11} parent=46 // loop_footer
          %s115 = sadd.s32 1, %s111
        $region53: #{reverse.11} parent=46 // loop_footer_branch
          %110 = sbr.rel target = $region49
        $region54: #{reverse.11} parent=46 // loop_exit
          _
      $region47: #{reverse.11} parent=38 // pred_fallthru
        _
    $region39: #{reverse.11} parent=1 // pred_fallthru
      _
    %146 = vnop

// kernel: vision_mega_forward.7
$region0: #{vision_mega_forward.7}
  #allocation0 [shape = 'u32[]', space=smem, size = 0x4, offset = 0x4, fixed_abs, tag = 'smem constant byte address 0x4 - core index']
  #allocation1 [shape = 'u32[72,128]{1,0:T(1,128)}', space=vmem, size = 0x9000, scoped, tag = 'internal scratch']
  %s0 = inlined_call_operand.vmem [shape: bf16[32,32], index: 0, kind: input, shape index: {}]
  %s1 = inlined_call_operand.vmem [shape: f32[1,32], index: 1, kind: input, shape index: {}]
  %s2 = inlined_call_operand.vmem [shape: f32[1,32], index: 2, kind: input, shape index: {}]
  %s3 = inlined_call_operand.vmem [shape: bf16[32,32], index: 3, kind: input, shape index: {}]
  %s4 = inlined_call_operand.vmem [shape: f32[1,32], index: 4, kind: input, shape index: {}]
  %s5 = inlined_call_operand.vmem [shape: f32[32,32], index: 5, kind: output, shape index: {}]
  %s6 = sld [smem:[#allocation0]]
  $region30: #{vision_mega_forward.7} parent=0
    _
  %s8 = ssub.s32 1, %s6
  %s9 = scalar_select 0, %s8, %s6
  // Predicated region
  $region2: #{vision_mega_forward.7} parent=0 // pred_check
    _
  $region3: #{vision_mega_forward.7} parent=0 // pred_check_branch
    %11 = sbr.rel (0) target = $region5
  $region4: #{vision_mega_forward.7} parent=0 // pred_region
    _
  $region5: #{vision_mega_forward.7} parent=0 // pred_fallthru
    _
  // Predicated region
  $region6: #{vision_mega_forward.7} parent=0 // pred_check
    _
  $region7: #{vision_mega_forward.7} parent=0 // pred_check_branch
    %13 = sbr.rel (0) target = $region9
  $region8: #{vision_mega_forward.7} parent=0 // pred_region
    _
  $region9: #{vision_mega_forward.7} parent=0 // pred_fallthru
    _
  // Predicated region
  $region10: #{vision_mega_forward.7} parent=0 // pred_check
    _
  $region11: #{vision_mega_forward.7} parent=0 // pred_check_branch
    %15 = sbr.rel (0) target = $region13
  $region12: #{vision_mega_forward.7} parent=0 // pred_region
    _
  $region13: #{vision_mega_forward.7} parent=0 // pred_fallthru
    _
  // Predicated region
  $region14: #{vision_mega_forward.7} parent=0 // pred_check
    _
  $region15: #{vision_mega_forward.7} parent=0 // pred_check_branch
    %17 = sbr.rel (0) target = $region17
  $region16: #{vision_mega_forward.7} parent=0 // pred_region
    _
  $region17: #{vision_mega_forward.7} parent=0 // pred_fallthru
    _
  // Predicated region
  $region18: #{vision_mega_forward.7} parent=0 // pred_check
    _
  $region19: #{vision_mega_forward.7} parent=0 // pred_check_branch
    %19 = sbr.rel (0) target = $region21
  $region20: #{vision_mega_forward.7} parent=0 // pred_region
    _
  $region21: #{vision_mega_forward.7} parent=0 // pred_fallthru
    _
  %v21 = vld [vmem:[%s0] sm:$0xf]
  %v22 = vld [vmem:[%s0 + $0x4] sm:$0xf]
  %v23 = vld [vmem:[%s0 + $0x8] sm:$0xf]
  %v24 = vld [vmem:[%s0 + $0xc] sm:$0xf]
  %v25 = vunpack.c.l.bf16 %v21
  %v26 = vunpack.c.l.bf16 %v22
  %v27 = vunpack.c.l.bf16 %v23
  %v28 = vunpack.c.l.bf16 %v24
  %v29 = vld [vmem:[%s1] sm:$0x1]
  %v30 = vld [vmem:[%s2] sm:$0x1]
  %vm31 = vcmask 261120
  %v32 = vsel %vm31, %v25, 0.0
  %33 = vadd.xlane.f32.xlu0 %v32
  %v34 = vpop.xlane.xlu0 %33
  %v35 = vsel %vm31, %v26, 0.0
  %36 = vadd.xlane.f32.xlu0 %v35
  %v37 = vpop.xlane.xlu0 %36
  %v38 = vsel %vm31, %v27, 0.0
  %39 = vadd.xlane.f32.xlu0 %v38
  %v40 = vpop.xlane.xlu0 %39
  %v41 = vsel %vm31, %v28, 0.0
  %42 = vadd.xlane.f32.xlu0 %v41
  %v43 = vpop.xlane.xlu0 %42
  %v44 = vrcp.pop 32.0
  %v45 = vmul.f32 32.0, %v44
  %v46 = vsub.f32 1.0, %v45
  %v47 = vmul.f32 %v44, %v46
  %v48 = vadd.f32 %v44, %v47
  %vm49 = vweird.f32 %v44
  %v50 = vsel %vm49, %v44, %v48
  %v51 = vmul.f32 %v34, %v50
  %v52 = vmul.f32 %v37, %v50
  %v53 = vmul.f32 %v40, %v50
  %v54 = vmul.f32 %v43, %v50
  %v55 = vsub.f32 %v25, %v51
  %v56 = vsub.f32 %v26, %v52
  %v57 = vsub.f32 %v27, %v53
  %v58 = vsub.f32 %v28, %v54
  %v59 = vmul.f32 %v55, %v55
  %v60 = vmul.f32 %v56, %v56
  %v61 = vmul.f32 %v57, %v57
  %v62 = vmul.f32 %v58, %v58
  %v63 = vsel %vm31, %v59, 0.0
  %64 = vadd.xlane.f32.xlu0 %v63
  %v65 = vpop.xlane.xlu0 %64
  %v66 = vsel %vm31, %v60, 0.0
  %67 = vadd.xlane.f32.xlu0 %v66
  %v68 = vpop.xlane.xlu0 %67
  %v69 = vsel %vm31, %v61, 0.0
  %70 = vadd.xlane.f32.xlu0 %v69
  %v71 = vpop.xlane.xlu0 %70
  %v72 = vsel %vm31, %v62, 0.0
  %73 = vadd.xlane.f32.xlu0 %v72
  %v74 = vpop.xlane.xlu0 %73
  %v75 = vmul.f32 %v65, %v50
  %v76 = vmul.f32 %v68, %v50
  %v77 = vmul.f32 %v71, %v50
  %v78 = vmul.f32 %v74, %v50
  %v79 = vadd.f32 %v75, 1e-05
  %v80 = vadd.f32 %v76, 1e-05
  %v81 = vadd.f32 %v77, 1e-05
  %v82 = vadd.f32 %v78, 1e-05
  %v83 = vrsqrt.pop %v79
  %v84 = vmul.f32 %v83, %v79
  %v85 = vmul.f32 %v84, %v83
  %v86 = vmul.f32 0.5, %v85
  %v87 = vsub.f32 1.5, %v86
  %v88 = vmul.f32 %v83, %v87
  %vm89 = vweird.f32 %v79
  %vm90 = vweird.f32 %v83
  %vm91 = vmor %vm89, %vm90
  %v92 = vsel %vm91, %v83, %v88
  %v93 = vrsqrt.pop %v80
  %v94 = vmul.f32 %v93, %v80
  %v95 = vmul.f32 %v94, %v93
  %v96 = vmul.f32 0.5, %v95
  %v97 = vsub.f32 1.5, %v96
  %v98 = vmul.f32 %v93, %v97
  %vm99 = vweird.f32 %v80
  %vm100 = vweird.f32 %v93
  %vm101 = vmor %vm99, %vm100
  %v102 = vsel %vm101, %v93, %v98
  %v103 = vrsqrt.pop %v81
  %v104 = vmul.f32 %v103, %v81
  %v105 = vmul.f32 %v104, %v103
  %v106 = vmul.f32 0.5, %v105
  %v107 = vsub.f32 1.5, %v106
  %v108 = vmul.f32 %v103, %v107
  %vm109 = vweird.f32 %v81
  %vm110 = vweird.f32 %v103
  %vm111 = vmor %vm109, %vm110
  %v112 = vsel %vm111, %v103, %v108
  %v113 = vrsqrt.pop %v82
  %v114 = vmul.f32 %v113, %v82
  %v115 = vmul.f32 %v114, %v113
  %v116 = vmul.f32 0.5, %v115
  %v117 = vsub.f32 1.5, %v116
  %v118 = vmul.f32 %v113, %v117
  %vm119 = vweird.f32 %v82
  %vm120 = vweird.f32 %v113
  %vm121 = vmor %vm119, %vm120
  %v122 = vsel %vm121, %v113, %v118
  %v123 = vmul.f32 %v55, %v92
  %v124 = vmul.f32 %v56, %v102
  %v125 = vmul.f32 %v57, %v112
  %v126 = vmul.f32 %v58, %v122
  %v128 = vperm.slane %v29, 0
  %v130 = vmul.f32 %v123, %v128
  %v131 = vmul.f32 %v124, %v128
  %v132 = vmul.f32 %v125, %v128
  %v133 = vmul.f32 %v126, %v128
  %v135 = vperm.slane %v30, 0
  %v137 = vadd.f32 %v130, %v135
  %v138 = vadd.f32 %v131, %v135
  %v139 = vadd.f32 %v132, %v135
  %v140 = vadd.f32 %v133, %v135
  %v141 = vpack.c.bf16 %v138, %v137
  %v142 = vpack.c.bf16 %v140, %v139
  %v143 = vld [vmem:[%s3] sm:$0xf]
  %v144 = vld [vmem:[%s3 + $0x4] sm:$0xf]
  %v145 = vld [vmem:[%s3 + $0x8] sm:$0xf]
  %v146 = vld [vmem:[%s3 + $0xc] sm:$0xf]
  %v147 = vld [vmem:[%s4] sm:$0x1]
  %v149 = vperm.slane %v147, 0
  %v155 = vunpack.c.l.b16 %v143
  %v156 = vunpack.c.l.b16 %v144
  %v157 = vunpack.c.l.b16 %v145
  %v158 = vunpack.c.l.b16 %v146
  %v159 = vpack.c.b16 %v156, %v155
  %v160 = vpack.c.b16 %v158, %v157
  %v164 = vsel %vm31, %v141, 0
  %v167 = vsel %vm31, %v142, 0
  %169 = vmatpush.bf16.msra.mxu0 0
  %170 = vmatpush.bf16.msra.mxu0 0
  %171 = vmatpush.bf16.msra.mxu0 0
  %172 = vmatpush.bf16.msra.mxu0 0
  %173 = vmatpush.bf16.msra.mxu0 0
  %174 = vmatpush.bf16.msra.mxu0 0
  %175 = vmatpush.bf16.msra.mxu0 %v160
  %176 = vmatpush.bf16.msra.mxu0 %v159
  %177 = vmatmul.bf16.gmra.mxu0 %v164
  %v178 = vpop.f32.mrf.mxu0
  %v179 = vadd.f32 %v149, %v178
  %v180 = vpop.f32.mrf.mxu0
  %v181 = vadd.f32 %v149, %v180
  %182 = vmatmul.bf16.gmra.mxu0 %v167
  %v183 = vpop.f32.mrf.mxu0
  %v184 = vadd.f32 %v149, %v183
  %v185 = vpop.f32.mrf.mxu0
  %v186 = vadd.f32 %v149, %v185
  %187 = vdwg.mxu0
  %v188 = vxor.u32 %v179, 2147483648
  %v189 = vxor.u32 %v181, 2147483648
  %v190 = vxor.u32 %v184, 2147483648
  %v191 = vxor.u32 %v186, 2147483648
  %v192 = vmul.f32 %v188, 1.442695
  %v193 = vpow.pop %v192
  %v194 = vmul.f32 %v189, 1.442695
  %v195 = vpow.pop %v194
  %v196 = vmul.f32 %v190, 1.442695
  %v197 = vpow.pop %v196
  %v198 = vmul.f32 %v191, 1.442695
  %v199 = vpow.pop %v198
  %v200 = vadd.f32 %v193, 1.0
  %v201 = vadd.f32 %v195, 1.0
  %v202 = vadd.f32 %v197, 1.0
  %v203 = vadd.f32 %v199, 1.0
  %v204 = vrcp.pop %v200
  %v205 = vmul.f32 %v200, %v204
  %v206 = vsub.f32 1.0, %v205
  %v207 = vmul.f32 %v204, %v206
  %v208 = vadd.f32 %v204, %v207
  %vm209 = vweird.f32 %v200
  %vm210 = vweird.f32 %v204
  %vm211 = vmor %vm209, %vm210
  %v212 = vsel %vm211, %v204, %v208
  %v213 = vand.u32 2147483647, %v200
  %vm214 = vcmp.eq.f32.partialorder %v213, 8.507059e+37
  %v215 = vand.u32 %v200, 2147483648
  %v216 = vor.u32 1.1754944e-38, %v215
  %v217 = vsel %vm214, %v216, %v212
  %v218 = vmul.f32 1.0, %v217
  %v219 = vrcp.pop %v201
  %v220 = vmul.f32 %v201, %v219
  %v221 = vsub.f32 1.0, %v220
  %v222 = vmul.f32 %v219, %v221
  %v223 = vadd.f32 %v219, %v222
  %vm224 = vweird.f32 %v201
  %vm225 = vweird.f32 %v219
  %vm226 = vmor %vm224, %vm225
  %v227 = vsel %vm226, %v219, %v223
  %v228 = vand.u32 2147483647, %v201
  %vm229 = vcmp.eq.f32.partialorder %v228, 8.507059e+37
  %v230 = vand.u32 %v201, 2147483648
  %v231 = vor.u32 1.1754944e-38, %v230
  %v232 = vsel %vm229, %v231, %v227
  %v233 = vmul.f32 1.0, %v232
  %v234 = vrcp.pop %v202
  %v235 = vmul.f32 %v202, %v234
  %v236 = vsub.f32 1.0, %v235
  %v237 = vmul.f32 %v234, %v236
  %v238 = vadd.f32 %v234, %v237
  %vm239 = vweird.f32 %v202
  %vm240 = vweird.f32 %v234
  %vm241 = vmor %vm239, %vm240
  %v242 = vsel %vm241, %v234, %v238
  %v243 = vand.u32 2147483647, %v202
  %vm244 = vcmp.eq.f32.partialorder %v243, 8.507059e+37
  %v245 = vand.u32 %v202, 2147483648
  %v246 = vor.u32 1.1754944e-38, %v245
  %v247 = vsel %vm244, %v246, %v242
  %v248 = vmul.f32 1.0, %v247
  %v249 = vrcp.pop %v203
  %v250 = vmul.f32 %v203, %v249
  %v251 = vsub.f32 1.0, %v250
  %v252 = vmul.f32 %v249, %v251
  %v253 = vadd.f32 %v249, %v252
  %vm254 = vweird.f32 %v203
  %vm255 = vweird.f32 %v249
  %vm256 = vmor %vm254, %vm255
  %v257 = vsel %vm256, %v249, %v253
  %v258 = vand.u32 2147483647, %v203
  %vm259 = vcmp.eq.f32.partialorder %v258, 8.507059e+37
  %v260 = vand.u32 %v203, 2147483648
  %v261 = vor.u32 1.1754944e-38, %v260
  %v262 = vsel %vm259, %v261, %v257
  %v263 = vmul.f32 1.0, %v262
  %v264 = vmul.f32 %v179, %v218
  %v265 = vmul.f32 %v181, %v233
  %v266 = vmul.f32 %v184, %v248
  %v267 = vmul.f32 %v186, %v263
  %268 = vst.msk [vmem:[%s5] sm:$0xff] %vm31, %v264
  %269 = vst.msk [vmem:[%s5 + $0x8] sm:$0xff] %vm31, %v265
  %270 = vst.msk [vmem:[%s5 + $0x10] sm:$0xff] %vm31, %v266
  %271 = vst.msk [vmem:[%s5 + $0x18] sm:$0xff] %vm31, %v267
  // Predicated region
  $region22: #{vision_mega_forward.7} parent=0 // pred_check
    _
  $region23: #{vision_mega_forward.7} parent=0 // pred_check_branch
    %273 = sbr.rel (0) target = $region25
  $region24: #{vision_mega_forward.7} parent=0 // pred_region
    _
  $region25: #{vision_mega_forward.7} parent=0 // pred_fallthru
    _
  // Predicated region
  $region26: #{vision_mega_forward.7} parent=0 // pred_check
    _
  $region27: #{vision_mega_forward.7} parent=0 // pred_check_branch
    %275 = sbr.rel (0) target = $region29
  $region28: #{vision_mega_forward.7} parent=0 // pred_region
    _
  $region29: #{vision_mega_forward.7} parent=0 // pred_fallthru
    _

// kernel: vision_mega_forward.5
$region0: #{vision_mega_forward.5}
  #allocation0 [shape = 'u32[]', space=smem, size = 0x4, offset = 0x4, fixed_abs, tag = 'smem constant byte address 0x4 - core index']
  #allocation1 [shape = 'u32[72,128]{1,0:T(1,128)}', space=vmem, size = 0x9000, scoped, tag = 'internal scratch']
  %s0 = inlined_call_operand.vmem [shape: bf16[2,16,32], index: 0, kind: input, shape index: {}]
  %s1 = inlined_call_operand.vmem [shape: bf16[2,16,32], index: 1, kind: input, shape index: {}]
  %s2 = inlined_call_operand.vmem [shape: f32[1,32], index: 2, kind: input, shape index: {}]
  %s3 = inlined_call_operand.vmem [shape: f32[1,32], index: 3, kind: input, shape index: {}]
  %s4 = inlined_call_operand.vmem [shape: bf16[32,64], index: 4, kind: input, shape index: {}]
  %s5 = inlined_call_operand.vmem [shape: f32[1,64], index: 5, kind: input, shape index: {}]
  %s6 = inlined_call_operand.vmem [shape: bf16[32,32], index: 6, kind: input, shape index: {}]
  %s7 = inlined_call_operand.vmem [shape: f32[1,32], index: 7, kind: input, shape index: {}]
  %s8 = inlined_call_operand.vmem [shape: bf16[32,16], index: 8, kind: input, shape index: {}]
  %s9 = inlined_call_operand.vmem [shape: f32[1,16], index: 9, kind: input, shape index: {}]
  %s10 = inlined_call_operand.vmem [shape: bf16[32,64], index: 10, kind: input, shape index: {}]
  %s11 = inlined_call_operand.vmem [shape: f32[1,64], index: 11, kind: input, shape index: {}]
  %s12 = inlined_call_operand.vmem [shape: bf16[32,32], index: 12, kind: input, shape index: {}]
  %s13 = inlined_call_operand.vmem [shape: f32[1,32], index: 13, kind: input, shape index: {}]
  %s14 = inlined_call_operand.vmem [shape: f32[2,16], index: 14, kind: input, shape index: {}]
  %s15 = inlined_call_operand.vmem [shape: f32[2,16], index: 15, kind: input, shape index: {}]
  %s16 = inlined_call_operand.vmem [shape: bf16[64,32], index: 16, kind: input, shape index: {}]
  %s17 = inlined_call_operand.vmem [shape: f32[1,32], index: 17, kind: input, shape index: {}]
  %s18 = inlined_call_operand.vmem [shape: bf16[16,16], index: 18, kind: input, shape index: {}]
  %s19 = inlined_call_operand.vmem [shape: f32[1,32], index: 19, kind: input, shape index: {}]
  %s20 = inlined_call_operand.vmem [shape: f32[1,32], index: 20, kind: input, shape index: {}]
  %s21 = inlined_call_operand.vmem [shape: bf16[32,64], index: 21, kind: input, shape index: {}]
  %s22 = inlined_call_operand.vmem [shape: f32[1,64], index: 22, kind: input, shape index: {}]
  %s23 = inlined_call_operand.vmem [shape: bf16[64,32], index: 23, kind: input, shape index: {}]
  %s24 = inlined_call_operand.vmem [shape: f32[1,32], index: 24, kind: input, shape index: {}]
  %s25 = inlined_call_operand.vmem [shape: bf16[2,16,32], index: 25, kind: output, shape index: {}]
  %s26 = sld [smem:[#allocation0]]
  $region133: #{vision_mega_forward.5} parent=0
    _
  %s28 = ssub.s32 1, %s26
  %s29 = scalar_select 0, %s28, %s26
  loop: start=0, step=1, limit=4
  $region2: #{vision_mega_forward.5} parent=0 // loop_pre_header
    _
  $region3: #{vision_mega_forward.5} parent=0 // loop_header
    %s31 = sphi 0, %s35
    %p32 = scmp.ge.s32.totalorder %s31, 4
    %s41 = sphi 0, %s43
    %s44 = sphi 0, %s41
    %s45 = sphi 0, %s44
    %s61 = sphi 0, %s45
    %s67 = sphi 0, %s69
    %s70 = sphi 0, %s67
    %s71 = sphi 0, %s70
    %s87 = sphi 0, %s71
    %s91 = sphi 0, %s91
    %s93 = sphi 0, %s91
    %s94 = sphi 0, %s93
    %s108 = sphi 0, %s94
    %s112 = sphi 0, %s112
    %s114 = sphi 0, %s112
    %s115 = sphi 0, %s114
    %s129 = sphi 0, %s115
    %s133 = sphi 0, %s133
    %s135 = sphi 0, %s133
    %s136 = sphi 0, %s135
    %s150 = sphi 0, %s136
    %s154 = sphi 0, %s154
    %s156 = sphi 0, %s154
    %s157 = sphi 0, %s156
    %s171 = sphi 0, %s157
    %s175 = sphi 0, %s175
    %s177 = sphi 0, %s175
    %s178 = sphi 0, %s177
    %s192 = sphi 0, %s178
    %s196 = sphi 0, %s196
    %s198 = sphi 0, %s196
    %s199 = sphi 0, %s198
    %s213 = sphi 0, %s199
    %s217 = sphi 0, %s217
    %s219 = sphi 0, %s217
    %s220 = sphi 0, %s219
    %s234 = sphi 0, %s220
    %s238 = sphi 0, %s238
    %s240 = sphi 0, %s238
    %s241 = sphi 0, %s240
    %s255 = sphi 0, %s241
    %s259 = sphi 0, %s259
    %s261 = sphi 0, %s259
    %s262 = sphi 0, %s261
    %s276 = sphi 0, %s262
    %s280 = sphi 0, %s280
    %s282 = sphi 0, %s280
    %s283 = sphi 0, %s282
    %s297 = sphi 0, %s283
    %s301 = sphi 0, %s301
    %s303 = sphi 0, %s301
    %s304 = sphi 0, %s303
    %s318 = sphi 0, %s304
    %s322 = sphi 0, %s322
    %s324 = sphi 0, %s322
    %s325 = sphi 0, %s324
    %s339 = sphi 0, %s325
    %s343 = sphi 0, %s343
    %s345 = sphi 0, %s343
    %s346 = sphi 0, %s345
    %s360 = sphi 0, %s346
    %s364 = sphi 0, %s364
    %s366 = sphi 0, %s364
    %s367 = sphi 0, %s366
    %s381 = sphi 0, %s367
    %s385 = sphi 0, %s385
    %s387 = sphi 0, %s385
    %s388 = sphi 0, %s387
    %s402 = sphi 0, %s388
    %s406 = sphi 0, %s406
    %s408 = sphi 0, %s406
    %s409 = sphi 0, %s408
    %s423 = sphi 0, %s409
    %s427 = sphi 0, %s427
    %s429 = sphi 0, %s427
    %s430 = sphi 0, %s429
    %s444 = sphi 0, %s430
    %s448 = sphi 0, %s448
    %s450 = sphi 0, %s448
    %s451 = sphi 0, %s450
    %s465 = sphi 0, %s451
    %s469 = sphi 0, %s469
    %s471 = sphi 0, %s469
    %s472 = sphi 0, %s471
    %s486 = sphi 0, %s472
    %s490 = sphi 0, %s490
    %s492 = sphi 0, %s490
    %s493 = sphi 0, %s492
    %s507 = sphi 0, %s493
    %s511 = sphi 0, %s511
    %s513 = sphi 0, %s511
    %s514 = sphi 0, %s513
    %s528 = sphi 0, %s514
    %s532 = sphi 0, %s532
    %s534 = sphi 0, %s532
    %s535 = sphi 0, %s534
    %s549 = sphi 0, %s535
    %s553 = sphi 0, %s553
    %s555 = sphi 0, %s553
    %s556 = sphi 0, %s555
    %s570 = sphi 0, %s556
    %s576 = sphi 0, %s578
    %s579 = sphi 0, %s576
    %s580 = sphi 0, %s579
    %s596 = sphi 0, %s580
  $region4: #{vision_mega_forward.5} parent=0 // loop_header_branch
    %34 = sbr.rel (%p32) target = $region8
  $region5: #{vision_mega_forward.5} parent=0 // loop_body
    %s36 = ssub.s32 %s31, 1
    %s37 = ssub.s32 %s31, 2
    %s38 = sadd.s32 %s31, 1
    %s39 = ssub.s32 %s31, %s38
    %p40 = scmp.eq.s32.totalorder %s39, 0
    %s42 = sadd.s32 %s41, 1
    %s43 = scalar_select %p40, %s41, %s42
    %p46 = pneg %p40
    %p47 = scmp.eq.s32.totalorder %s31, 1
    %p48 = por %p46, %p47
    %p49 = scmp.ne.s32.totalorder %s41, %s44
    %p50 = scmp.eq.s32.totalorder %s31, 0
    %p51 = por %p49, %p50
    %p52 = scmp.ne.s32.totalorder %s41, %s44
    %p53 = scmp.eq.s32.totalorder %s36, 1
    %p54 = por %p52, %p53
    %p55 = scmp.ne.s32.totalorder %s44, %s45
    %p56 = scmp.eq.s32.totalorder %s36, 0
    %p57 = por %p55, %p56
    %p58 = scmp.ne.s32.totalorder %s44, %s45
    %p59 = scmp.eq.s32.totalorder %s37, 1
    %p60 = por %p58, %p59
    %p62 = scmp.ne.s32.totalorder %s45, %s61
    %p63 = scmp.eq.s32.totalorder %s37, 0
    %p64 = por %p62, %p63
    %s65 = ssub.s32 %s31, %s38
    %p66 = scmp.eq.s32.totalorder %s65, 0
    %s68 = sadd.s32 %s67, 1
    %s69 = scalar_select %p66, %s67, %s68
    %p72 = pneg %p66
    %p73 = scmp.eq.s32.totalorder %s31, 1
    %p74 = por %p72, %p73
    %p75 = scmp.ne.s32.totalorder %s67, %s70
    %p76 = scmp.eq.s32.totalorder %s31, 0
    %p77 = por %p75, %p76
    %p78 = scmp.ne.s32.totalorder %s67, %s70
    %p79 = scmp.eq.s32.totalorder %s36, 1
    %p80 = por %p78, %p79
    %p81 = scmp.ne.s32.totalorder %s70, %s71
    %p82 = scmp.eq.s32.totalorder %s36, 0
    %p83 = por %p81, %p82
    %p84 = scmp.ne.s32.totalorder %s70, %s71
    %p85 = scmp.eq.s32.totalorder %s37, 1
    %p86 = por %p84, %p85
    %p88 = scmp.ne.s32.totalorder %s71, %s87
    %p89 = scmp.eq.s32.totalorder %s37, 0
    %p90 = por %p88, %p89
    %s92 = sadd.s32 %s91, 1
    %p95 = scmp.eq.s32.totalorder %s31, 1
    %p96 = scmp.ne.s32.totalorder %s91, %s93
    %p97 = scmp.eq.s32.totalorder %s31, 0
    %p98 = por %p96, %p97
    %p99 = scmp.ne.s32.totalorder %s91, %s93
    %p100 = scmp.eq.s32.totalorder %s36, 1
    %p101 = por %p99, %p100
    %p102 = scmp.ne.s32.totalorder %s93, %s94
    %p103 = scmp.eq.s32.totalorder %s36, 0
    %p104 = por %p102, %p103
    %p105 = scmp.ne.s32.totalorder %s93, %s94
    %p106 = scmp.eq.s32.totalorder %s37, 1
    %p107 = por %p105, %p106
    %p109 = scmp.ne.s32.totalorder %s94, %s108
    %p110 = scmp.eq.s32.totalorder %s37, 0
    %p111 = por %p109, %p110
    %s113 = sadd.s32 %s112, 1
    %p116 = scmp.eq.s32.totalorder %s31, 1
    %p117 = scmp.ne.s32.totalorder %s112, %s114
    %p118 = scmp.eq.s32.totalorder %s31, 0
    %p119 = por %p117, %p118
    %p120 = scmp.ne.s32.totalorder %s112, %s114
    %p121 = scmp.eq.s32.totalorder %s36, 1
    %p122 = por %p120, %p121
    %p123 = scmp.ne.s32.totalorder %s114, %s115
    %p124 = scmp.eq.s32.totalorder %s36, 0
    %p125 = por %p123, %p124
    %p126 = scmp.ne.s32.totalorder %s114, %s115
    %p127 = scmp.eq.s32.totalorder %s37, 1
    %p128 = por %p126, %p127
    %p130 = scmp.ne.s32.totalorder %s115, %s129
    %p131 = scmp.eq.s32.totalorder %s37, 0
    %p132 = por %p130, %p131
    %s134 = sadd.s32 %s133, 1
    %p137 = scmp.eq.s32.totalorder %s31, 1
    %p138 = scmp.ne.s32.totalorder %s133, %s135
    %p139 = scmp.eq.s32.totalorder %s31, 0
    %p140 = por %p138, %p139
    %p141 = scmp.ne.s32.totalorder %s133, %s135
    %p142 = scmp.eq.s32.totalorder %s36, 1
    %p143 = por %p141, %p142
    %p144 = scmp.ne.s32.totalorder %s135, %s136
    %p145 = scmp.eq.s32.totalorder %s36, 0
    %p146 = por %p144, %p145
    %p147 = scmp.ne.s32.totalorder %s135, %s136
    %p148 = scmp.eq.s32.totalorder %s37, 1
    %p149 = por %p147, %p148
    %p151 = scmp.ne.s32.totalorder %s136, %s150
    %p152 = scmp.eq.s32.totalorder %s37, 0
    %p153 = por %p151, %p152
    %s155 = sadd.s32 %s154, 1
    %p158 = scmp.eq.s32.totalorder %s31, 1
    %p159 = scmp.ne.s32.totalorder %s154, %s156
    %p160 = scmp.eq.s32.totalorder %s31, 0
    %p161 = por %p159, %p160
    %p162 = scmp.ne.s32.totalorder %s154, %s156
    %p163 = scmp.eq.s32.totalorder %s36, 1
    %p164 = por %p162, %p163
    %p165 = scmp.ne.s32.totalorder %s156, %s157
    %p166 = scmp.eq.s32.totalorder %s36, 0
    %p167 = por %p165, %p166
    %p168 = scmp.ne.s32.totalorder %s156, %s157
    %p169 = scmp.eq.s32.totalorder %s37, 1
    %p170 = por %p168, %p169
    %p172 = scmp.ne.s32.totalorder %s157, %s171
    %p173 = scmp.eq.s32.totalorder %s37, 0
    %p174 = por %p172, %p173
    %s176 = sadd.s32 %s175, 1
    %p179 = scmp.eq.s32.totalorder %s31, 1
    %p180 = scmp.ne.s32.totalorder %s175, %s177
    %p181 = scmp.eq.s32.totalorder %s31, 0
    %p182 = por %p180, %p181
    %p183 = scmp.ne.s32.totalorder %s175, %s177
    %p184 = scmp.eq.s32.totalorder %s36, 1
    %p185 = por %p183, %p184
    %p186 = scmp.ne.s32.totalorder %s177, %s178
    %p187 = scmp.eq.s32.totalorder %s36, 0
    %p188 = por %p186, %p187
    %p189 = scmp.ne.s32.totalorder %s177, %s178
    %p190 = scmp.eq.s32.totalorder %s37, 1
    %p191 = por %p189, %p190
    %p193 = scmp.ne.s32.totalorder %s178, %s192
    %p194 = scmp.eq.s32.totalorder %s37, 0
    %p195 = por %p193, %p194
    %s197 = sadd.s32 %s196, 1
    %p200 = scmp.eq.s32.totalorder %s31, 1
    %p201 = scmp.ne.s32.totalorder %s196, %s198
    %p202 = scmp.eq.s32.totalorder %s31, 0
    %p203 = por %p201, %p202
    %p204 = scmp.ne.s32.totalorder %s196, %s198
    %p205 = scmp.eq.s32.totalorder %s36, 1
    %p206 = por %p204, %p205
    %p207 = scmp.ne.s32.totalorder %s198, %s199
    %p208 = scmp.eq.s32.totalorder %s36, 0
    %p209 = por %p207, %p208
    %p210 = scmp.ne.s32.totalorder %s198, %s199
    %p211 = scmp.eq.s32.totalorder %s37, 1
    %p212 = por %p210, %p211
    %p214 = scmp.ne.s32.totalorder %s199, %s213
    %p215 = scmp.eq.s32.totalorder %s37, 0
    %p216 = por %p214, %p215
    %s218 = sadd.s32 %s217, 1
    %p221 = scmp.eq.s32.totalorder %s31, 1
    %p222 = scmp.ne.s32.totalorder %s217, %s219
    %p223 = scmp.eq.s32.totalorder %s31, 0
    %p224 = por %p222, %p223
    %p225 = scmp.ne.s32.totalorder %s217, %s219
    %p226 = scmp.eq.s32.totalorder %s36, 1
    %p227 = por %p225, %p226
    %p228 = scmp.ne.s32.totalorder %s219, %s220
    %p229 = scmp.eq.s32.totalorder %s36, 0
    %p230 = por %p228, %p229
    %p231 = scmp.ne.s32.totalorder %s219, %s220
    %p232 = scmp.eq.s32.totalorder %s37, 1
    %p233 = por %p231, %p232
    %p235 = scmp.ne.s32.totalorder %s220, %s234
    %p236 = scmp.eq.s32.totalorder %s37, 0
    %p237 = por %p235, %p236
    %s239 = sadd.s32 %s238, 1
    %p242 = scmp.eq.s32.totalorder %s31, 1
    %p243 = scmp.ne.s32.totalorder %s238, %s240
    %p244 = scmp.eq.s32.totalorder %s31, 0
    %p245 = por %p243, %p244
    %p246 = scmp.ne.s32.totalorder %s238, %s240
    %p247 = scmp.eq.s32.totalorder %s36, 1
    %p248 = por %p246, %p247
    %p249 = scmp.ne.s32.totalorder %s240, %s241
    %p250 = scmp.eq.s32.totalorder %s36, 0
    %p251 = por %p249, %p250
    %p252 = scmp.ne.s32.totalorder %s240, %s241
    %p253 = scmp.eq.s32.totalorder %s37, 1
    %p254 = por %p252, %p253
    %p256 = scmp.ne.s32.totalorder %s241, %s255
    %p257 = scmp.eq.s32.totalorder %s37, 0
    %p258 = por %p256, %p257
    %s260 = sadd.s32 %s259, 1
    %p263 = scmp.eq.s32.totalorder %s31, 1
    %p264 = scmp.ne.s32.totalorder %s259, %s261
    %p265 = scmp.eq.s32.totalorder %s31, 0
    %p266 = por %p264, %p265
    %p267 = scmp.ne.s32.totalorder %s259, %s261
    %p268 = scmp.eq.s32.totalorder %s36, 1
    %p269 = por %p267, %p268
    %p270 = scmp.ne.s32.totalorder %s261, %s262
    %p271 = scmp.eq.s32.totalorder %s36, 0
    %p272 = por %p270, %p271
    %p273 = scmp.ne.s32.totalorder %s261, %s262
    %p274 = scmp.eq.s32.totalorder %s37, 1
    %p275 = por %p273, %p274
    %p277 = scmp.ne.s32.totalorder %s262, %s276
    %p278 = scmp.eq.s32.totalorder %s37, 0
    %p279 = por %p277, %p278
    %s281 = sadd.s32 %s280, 1
    %p284 = scmp.eq.s32.totalorder %s31, 1
    %p285 = scmp.ne.s32.totalorder %s280, %s282
    %p286 = scmp.eq.s32.totalorder %s31, 0
    %p287 = por %p285, %p286
    %p288 = scmp.ne.s32.totalorder %s280, %s282
    %p289 = scmp.eq.s32.totalorder %s36, 1
    %p290 = por %p288, %p289
    %p291 = scmp.ne.s32.totalorder %s282, %s283
    %p292 = scmp.eq.s32.totalorder %s36, 0
    %p293 = por %p291, %p292
    %p294 = scmp.ne.s32.totalorder %s282, %s283
    %p295 = scmp.eq.s32.totalorder %s37, 1
    %p296 = por %p294, %p295
    %p298 = scmp.ne.s32.totalorder %s283, %s297
    %p299 = scmp.eq.s32.totalorder %s37, 0
    %p300 = por %p298, %p299
    %s302 = sadd.s32 %s301, 1
    %p305 = scmp.eq.s32.totalorder %s31, 1
    %p306 = scmp.ne.s32.totalorder %s301, %s303
    %p307 = scmp.eq.s32.totalorder %s31, 0
    %p308 = por %p306, %p307
    %p309 = scmp.ne.s32.totalorder %s301, %s303
    %p310 = scmp.eq.s32.totalorder %s36, 1
    %p311 = por %p309, %p310
    %p312 = scmp.ne.s32.totalorder %s303, %s304
    %p313 = scmp.eq.s32.totalorder %s36, 0
    %p314 = por %p312, %p313
    %p315 = scmp.ne.s32.totalorder %s303, %s304
    %p316 = scmp.eq.s32.totalorder %s37, 1
    %p317 = por %p315, %p316
    %p319 = scmp.ne.s32.totalorder %s304, %s318
    %p320 = scmp.eq.s32.totalorder %s37, 0
    %p321 = por %p319, %p320
    %s323 = sadd.s32 %s322, 1
    %p326 = scmp.eq.s32.totalorder %s31, 1
    %p327 = scmp.ne.s32.totalorder %s322, %s324
    %p328 = scmp.eq.s32.totalorder %s31, 0
    %p329 = por %p327, %p328
    %p330 = scmp.ne.s32.totalorder %s322, %s324
    %p331 = scmp.eq.s32.totalorder %s36, 1
    %p332 = por %p330, %p331
    %p333 = scmp.ne.s32.totalorder %s324, %s325
    %p334 = scmp.eq.s32.totalorder %s36, 0
    %p335 = por %p333, %p334
    %p336 = scmp.ne.s32.totalorder %s324, %s325
    %p337 = scmp.eq.s32.totalorder %s37, 1
    %p338 = por %p336, %p337
    %p340 = scmp.ne.s32.totalorder %s325, %s339
    %p341 = scmp.eq.s32.totalorder %s37, 0
    %p342 = por %p340, %p341
    %s344 = sadd.s32 %s343, 1
    %p347 = scmp.eq.s32.totalorder %s31, 1
    %p348 = scmp.ne.s32.totalorder %s343, %s345
    %p349 = scmp.eq.s32.totalorder %s31, 0
    %p350 = por %p348, %p349
    %p351 = scmp.ne.s32.totalorder %s343, %s345
    %p352 = scmp.eq.s32.totalorder %s36, 1
    %p353 = por %p351, %p352
    %p354 = scmp.ne.s32.totalorder %s345, %s346
    %p355 = scmp.eq.s32.totalorder %s36, 0
    %p356 = por %p354, %p355
    %p357 = scmp.ne.s32.totalorder %s345, %s346
    %p358 = scmp.eq.s32.totalorder %s37, 1
    %p359 = por %p357, %p358
    %p361 = scmp.ne.s32.totalorder %s346, %s360
    %p362 = scmp.eq.s32.totalorder %s37, 0
    %p363 = por %p361, %p362
    %s365 = sadd.s32 %s364, 1
    %p368 = scmp.eq.s32.totalorder %s31, 1
    %p369 = scmp.ne.s32.totalorder %s364, %s366
    %p370 = scmp.eq.s32.totalorder %s31, 0
    %p371 = por %p369, %p370
    %p372 = scmp.ne.s32.totalorder %s364, %s366
    %p373 = scmp.eq.s32.totalorder %s36, 1
    %p374 = por %p372, %p373
    %p375 = scmp.ne.s32.totalorder %s366, %s367
    %p376 = scmp.eq.s32.totalorder %s36, 0
    %p377 = por %p375, %p376
    %p378 = scmp.ne.s32.totalorder %s366, %s367
    %p379 = scmp.eq.s32.totalorder %s37, 1
    %p380 = por %p378, %p379
    %p382 = scmp.ne.s32.totalorder %s367, %s381
    %p383 = scmp.eq.s32.totalorder %s37, 0
    %p384 = por %p382, %p383
    %s386 = sadd.s32 %s385, 1
    %p389 = scmp.eq.s32.totalorder %s31, 1
    %p390 = scmp.ne.s32.totalorder %s385, %s387
    %p391 = scmp.eq.s32.totalorder %s31, 0
    %p392 = por %p390, %p391
    %p393 = scmp.ne.s32.totalorder %s385, %s387
    %p394 = scmp.eq.s32.totalorder %s36, 1
    %p395 = por %p393, %p394
    %p396 = scmp.ne.s32.totalorder %s387, %s388
    %p397 = scmp.eq.s32.totalorder %s36, 0
    %p398 = por %p396, %p397
    %p399 = scmp.ne.s32.totalorder %s387, %s388
    %p400 = scmp.eq.s32.totalorder %s37, 1
    %p401 = por %p399, %p400
    %p403 = scmp.ne.s32.totalorder %s388, %s402
    %p404 = scmp.eq.s32.totalorder %s37, 0
    %p405 = por %p403, %p404
    %s407 = sadd.s32 %s406, 1
    %p410 = scmp.eq.s32.totalorder %s31, 1
    %p411 = scmp.ne.s32.totalorder %s406, %s408
    %p412 = scmp.eq.s32.totalorder %s31, 0
    %p413 = por %p411, %p412
    %p414 = scmp.ne.s32.totalorder %s406, %s408
    %p415 = scmp.eq.s32.totalorder %s36, 1
    %p416 = por %p414, %p415
    %p417 = scmp.ne.s32.totalorder %s408, %s409
    %p418 = scmp.eq.s32.totalorder %s36, 0
    %p419 = por %p417, %p418
    %p420 = scmp.ne.s32.totalorder %s408, %s409
    %p421 = scmp.eq.s32.totalorder %s37, 1
    %p422 = por %p420, %p421
    %p424 = scmp.ne.s32.totalorder %s409, %s423
    %p425 = scmp.eq.s32.totalorder %s37, 0
    %p426 = por %p424, %p425
    %s428 = sadd.s32 %s427, 1
    %p431 = scmp.eq.s32.totalorder %s31, 1
    %p432 = scmp.ne.s32.totalorder %s427, %s429
    %p433 = scmp.eq.s32.totalorder %s31, 0
    %p434 = por %p432, %p433
    %p435 = scmp.ne.s32.totalorder %s427, %s429
    %p436 = scmp.eq.s32.totalorder %s36, 1
    %p437 = por %p435, %p436
    %p438 = scmp.ne.s32.totalorder %s429, %s430
    %p439 = scmp.eq.s32.totalorder %s36, 0
    %p440 = por %p438, %p439
    %p441 = scmp.ne.s32.totalorder %s429, %s430
    %p442 = scmp.eq.s32.totalorder %s37, 1
    %p443 = por %p441, %p442
    %p445 = scmp.ne.s32.totalorder %s430, %s444
    %p446 = scmp.eq.s32.totalorder %s37, 0
    %p447 = por %p445, %p446
    %s449 = sadd.s32 %s448, 1
    %p452 = scmp.eq.s32.totalorder %s31, 1
    %p453 = scmp.ne.s32.totalorder %s448, %s450
    %p454 = scmp.eq.s32.totalorder %s31, 0
    %p455 = por %p453, %p454
    %p456 = scmp.ne.s32.totalorder %s448, %s450
    %p457 = scmp.eq.s32.totalorder %s36, 1
    %p458 = por %p456, %p457
    %p459 = scmp.ne.s32.totalorder %s450, %s451
    %p460 = scmp.eq.s32.totalorder %s36, 0
    %p461 = por %p459, %p460
    %p462 = scmp.ne.s32.totalorder %s450, %s451
    %p463 = scmp.eq.s32.totalorder %s37, 1
    %p464 = por %p462, %p463
    %p466 = scmp.ne.s32.totalorder %s451, %s465
    %p467 = scmp.eq.s32.totalorder %s37, 0
    %p468 = por %p466, %p467
    %s470 = sadd.s32 %s469, 1
    %p473 = scmp.eq.s32.totalorder %s31, 1
    %p474 = scmp.ne.s32.totalorder %s469, %s471
    %p475 = scmp.eq.s32.totalorder %s31, 0
    %p476 = por %p474, %p475
    %p477 = scmp.ne.s32.totalorder %s469, %s471
    %p478 = scmp.eq.s32.totalorder %s36, 1
    %p479 = por %p477, %p478
    %p480 = scmp.ne.s32.totalorder %s471, %s472
    %p481 = scmp.eq.s32.totalorder %s36, 0
    %p482 = por %p480, %p481
    %p483 = scmp.ne.s32.totalorder %s471, %s472
    %p484 = scmp.eq.s32.totalorder %s37, 1
    %p485 = por %p483, %p484
    %p487 = scmp.ne.s32.totalorder %s472, %s486
    %p488 = scmp.eq.s32.totalorder %s37, 0
    %p489 = por %p487, %p488
    %s491 = sadd.s32 %s490, 1
    %p494 = scmp.eq.s32.totalorder %s31, 1
    %p495 = scmp.ne.s32.totalorder %s490, %s492
    %p496 = scmp.eq.s32.totalorder %s31, 0
    %p497 = por %p495, %p496
    %p498 = scmp.ne.s32.totalorder %s490, %s492
    %p499 = scmp.eq.s32.totalorder %s36, 1
    %p500 = por %p498, %p499
    %p501 = scmp.ne.s32.totalorder %s492, %s493
    %p502 = scmp.eq.s32.totalorder %s36, 0
    %p503 = por %p501, %p502
    %p504 = scmp.ne.s32.totalorder %s492, %s493
    %p505 = scmp.eq.s32.totalorder %s37, 1
    %p506 = por %p504, %p505
    %p508 = scmp.ne.s32.totalorder %s493, %s507
    %p509 = scmp.eq.s32.totalorder %s37, 0
    %p510 = por %p508, %p509
    %s512 = sadd.s32 %s511, 1
    %p515 = scmp.eq.s32.totalorder %s31, 1
    %p516 = scmp.ne.s32.totalorder %s511, %s513
    %p517 = scmp.eq.s32.totalorder %s31, 0
    %p518 = por %p516, %p517
    %p519 = scmp.ne.s32.totalorder %s511, %s513
    %p520 = scmp.eq.s32.totalorder %s36, 1
    %p521 = por %p519, %p520
    %p522 = scmp.ne.s32.totalorder %s513, %s514
    %p523 = scmp.eq.s32.totalorder %s36, 0
    %p524 = por %p522, %p523
    %p525 = scmp.ne.s32.totalorder %s513, %s514
    %p526 = scmp.eq.s32.totalorder %s37, 1
    %p527 = por %p525, %p526
    %p529 = scmp.ne.s32.totalorder %s514, %s528
    %p530 = scmp.eq.s32.totalorder %s37, 0
    %p531 = por %p529, %p530
    %s533 = sadd.s32 %s532, 1
    %p536 = scmp.eq.s32.totalorder %s31, 1
    %p537 = scmp.ne.s32.totalorder %s532, %s534
    %p538 = scmp.eq.s32.totalorder %s31, 0
    %p539 = por %p537, %p538
    %p540 = scmp.ne.s32.totalorder %s532, %s534
    %p541 = scmp.eq.s32.totalorder %s36, 1
    %p542 = por %p540, %p541
    %p543 = scmp.ne.s32.totalorder %s534, %s535
    %p544 = scmp.eq.s32.totalorder %s36, 0
    %p545 = por %p543, %p544
    %p546 = scmp.ne.s32.totalorder %s534, %s535
    %p547 = scmp.eq.s32.totalorder %s37, 1
    %p548 = por %p546, %p547
    %p550 = scmp.ne.s32.totalorder %s535, %s549
    %p551 = scmp.eq.s32.totalorder %s37, 0
    %p552 = por %p550, %p551
    %s554 = sadd.s32 %s553, 1
    %p557 = scmp.eq.s32.totalorder %s31, 1
    %p558 = scmp.ne.s32.totalorder %s553, %s555
    %p559 = scmp.eq.s32.totalorder %s31, 0
    %p560 = por %p558, %p559
    %p561 = scmp.ne.s32.totalorder %s553, %s555
    %p562 = scmp.eq.s32.totalorder %s36, 1
    %p563 = por %p561, %p562
    %p564 = scmp.ne.s32.totalorder %s555, %s556
    %p565 = scmp.eq.s32.totalorder %s36, 0
    %p566 = por %p564, %p565
    %p567 = scmp.ne.s32.totalorder %s555, %s556
    %p568 = scmp.eq.s32.totalorder %s37, 1
    %p569 = por %p567, %p568
    %p571 = scmp.ne.s32.totalorder %s556, %s570
    %p572 = scmp.eq.s32.totalorder %s37, 0
    %p573 = por %p571, %p572
    %s574 = ssub.s32 %s31, %s38
    %p575 = scmp.eq.s32.totalorder %s574, 0
    %s577 = sadd.s32 %s576, 1
    %s578 = scalar_select %p575, %s576, %s577
    %p581 = pneg %p575
    %p582 = scmp.eq.s32.totalorder %s31, 1
    %p583 = por %p581, %p582
    %p584 = scmp.ne.s32.totalorder %s576, %s579
    %p585 = scmp.eq.s32.totalorder %s31, 0
    %p586 = por %p584, %p585
    %p587 = scmp.ne.s32.totalorder %s576, %s579
    %p588 = scmp.eq.s32.totalorder %s36, 1
    %p589 = por %p587, %p588
    %p590 = scmp.ne.s32.totalorder %s579, %s580
    %p591 = scmp.eq.s32.totalorder %s36, 0
    %p592 = por %p590, %p591
    %p593 = scmp.ne.s32.totalorder %s579, %s580
    %p594 = scmp.eq.s32.totalorder %s37, 1
    %p595 = por %p593, %p594
    %p597 = scmp.ne.s32.totalorder %s580, %s596
    %p598 = scmp.eq.s32.totalorder %s37, 0
    %p599 = por %p597, %p598
    %p600 = scmp.le.s32.totalorder 1, %s31
    %p601 = scmp.lt.s32.totalorder %s31, 3
    %p602 = pnand %p600, %p601
    %p603 = pneg %p602
    // Predicated region
    $region9: #{vision_mega_forward.5} parent=5 // pred_check
      _
    $region10: #{vision_mega_forward.5} parent=5 // pred_check_branch
      %605 = sbr.rel (%p602) target = $region12
    $region11: #{vision_mega_forward.5} parent=5 // pred_region
      %s606 = ssub.s32 %s31, 1
      // Predicated region
      $region13: #{vision_mega_forward.5} parent=11 // pred_check
        %p607 = pneg %p104
      $region14: #{vision_mega_forward.5} parent=11 // pred_check_branch
        %609 = sbr.rel (%p607) target = $region16
      $region15: #{vision_mega_forward.5} parent=11 // pred_region
        _
      $region16: #{vision_mega_forward.5} parent=11 // pred_fallthru
        _
      // Predicated region
      $region17: #{vision_mega_forward.5} parent=11 // pred_check
        %p610 = pneg %p125
      $region18: #{vision_mega_forward.5} parent=11 // pred_check_branch
        %612 = sbr.rel (%p610) target = $region20
      $region19: #{vision_mega_forward.5} parent=11 // pred_region
        _
      $region20: #{vision_mega_forward.5} parent=11 // pred_fallthru
        _
      // Predicated region
      $region21: #{vision_mega_forward.5} parent=11 // pred_check
        %p613 = pneg %p146
      $region22: #{vision_mega_forward.5} parent=11 // pred_check_branch
        %615 = sbr.rel (%p613) target = $region24
      $region23: #{vision_mega_forward.5} parent=11 // pred_region
        _
      $region24: #{vision_mega_forward.5} parent=11 // pred_fallthru
        _
      // Predicated region
      $region25: #{vision_mega_forward.5} parent=11 // pred_check
        %p616 = pneg %p167
      $region26: #{vision_mega_forward.5} parent=11 // pred_check_branch
        %618 = sbr.rel (%p616) target = $region28
      $region27: #{vision_mega_forward.5} parent=11 // pred_region
        _
      $region28: #{vision_mega_forward.5} parent=11 // pred_fallthru
        _
      // Predicated region
      $region29: #{vision_mega_forward.5} parent=11 // pred_check
        %p619 = pneg %p188
      $region30: #{vision_mega_forward.5} parent=11 // pred_check_branch
        %621 = sbr.rel (%p619) target = $region32
      $region31: #{vision_mega_forward.5} parent=11 // pred_region
        _
      $region32: #{vision_mega_forward.5} parent=11 // pred_fallthru
        _
      // Predicated region
      $region33: #{vision_mega_forward.5} parent=11 // pred_check
        %p622 = pneg %p209
      $region34: #{vision_mega_forward.5} parent=11 // pred_check_branch
        %624 = sbr.rel (%p622) target = $region36
      $region35: #{vision_mega_forward.5} parent=11 // pred_region
        _
      $region36: #{vision_mega_forward.5} parent=11 // pred_fallthru
        _
      // Predicated region
      $region37: #{vision_mega_forward.5} parent=11 // pred_check
        %p625 = pneg %p230
      $region38: #{vision_mega_forward.5} parent=11 // pred_check_branch
        %627 = sbr.rel (%p625) target = $region40
      $region39: #{vision_mega_forward.5} parent=11 // pred_region
        _
      $region40: #{vision_mega_forward.5} parent=11 // pred_fallthru
        _
      // Predicated region
      $region41: #{vision_mega_forward.5} parent=11 // pred_check
        %p628 = pneg %p251
      $region42: #{vision_mega_forward.5} parent=11 // pred_check_branch
        %630 = sbr.rel (%p628) target = $region44
      $region43: #{vision_mega_forward.5} parent=11 // pred_region
        _
      $region44: #{vision_mega_forward.5} parent=11 // pred_fallthru
        _
      // Predicated region
      $region45: #{vision_mega_forward.5} parent=11 // pred_check
        %p631 = pneg %p272
      $region46: #{vision_mega_forward.5} parent=11 // pred_check_branch
        %633 = sbr.rel (%p631) target = $region48
      $region47: #{vision_mega_forward.5} parent=11 // pred_region
        _
      $region48: #{vision_mega_forward.5} parent=11 // pred_fallthru
        _
      // Predicated region
      $region49: #{vision_mega_forward.5} parent=11 // pred_check
        %p634 = pneg %p293
      $region50: #{vision_mega_forward.5} parent=11 // pred_check_branch
        %636 = sbr.rel (%p634) target = $region52
      $region51: #{vision_mega_forward.5} parent=11 // pred_region
        _
      $region52: #{vision_mega_forward.5} parent=11 // pred_fallthru
        _
      // Predicated region
      $region53: #{vision_mega_forward.5} parent=11 // pred_check
        %p637 = pneg %p314
      $region54: #{vision_mega_forward.5} parent=11 // pred_check_branch
        %639 = sbr.rel (%p637) target = $region56
      $region55: #{vision_mega_forward.5} parent=11 // pred_region
        _
      $region56: #{vision_mega_forward.5} parent=11 // pred_fallthru
        _
      // Predicated region
      $region57: #{vision_mega_forward.5} parent=11 // pred_check
        %p640 = pneg %p335
      $region58: #{vision_mega_forward.5} parent=11 // pred_check_branch
        %642 = sbr.rel (%p640) target = $region60
      $region59: #{vision_mega_forward.5} parent=11 // pred_region
        _
      $region60: #{vision_mega_forward.5} parent=11 // pred_fallthru
        _
      // Predicated region
      $region61: #{vision_mega_forward.5} parent=11 // pred_check
        %p643 = pneg %p356
      $region62: #{vision_mega_forward.5} parent=11 // pred_check_branch
        %645 = sbr.rel (%p643) target = $region64
      $region63: #{vision_mega_forward.5} parent=11 // pred_region
        _
      $region64: #{vision_mega_forward.5} parent=11 // pred_fallthru
        _
      // Predicated region
      $region65: #{vision_mega_forward.5} parent=11 // pred_check
        %p646 = pneg %p377
      $region66: #{vision_mega_forward.5} parent=11 // pred_check_branch
        %648 = sbr.rel (%p646) target = $region68
      $region67: #{vision_mega_forward.5} parent=11 // pred_region
        _
      $region68: #{vision_mega_forward.5} parent=11 // pred_fallthru
        _
      // Predicated region
      $region69: #{vision_mega_forward.5} parent=11 // pred_check
        %p649 = pneg %p398
      $region70: #{vision_mega_forward.5} parent=11 // pred_check_branch
        %651 = sbr.rel (%p649) target = $region72
      $region71: #{vision_mega_forward.5} parent=11 // pred_region
        _
      $region72: #{vision_mega_forward.5} parent=11 // pred_fallthru
        _
      // Predicated region
      $region73: #{vision_mega_forward.5} parent=11 // pred_check
        %p652 = pneg %p419
      $region74: #{vision_mega_forward.5} parent=11 // pred_check_branch
        %654 = sbr.rel (%p652) target = $region76
      $region75: #{vision_mega_forward.5} parent=11 // pred_region
        _
      $region76: #{vision_mega_forward.5} parent=11 // pred_fallthru
        _
      // Predicated region
      $region77: #{vision_mega_forward.5} parent=11 // pred_check
        %p655 = pneg %p440
      $region78: #{vision_mega_forward.5} parent=11 // pred_check_branch
        %657 = sbr.rel (%p655) target = $region80
      $region79: #{vision_mega_forward.5} parent=11 // pred_region
        _
      $region80: #{vision_mega_forward.5} parent=11 // pred_fallthru
        _
      // Predicated region
      $region81: #{vision_mega_forward.5} parent=11 // pred_check
        %p658 = pneg %p461
      $region82: #{vision_mega_forward.5} parent=11 // pred_check_branch
        %660 = sbr.rel (%p658) target = $region84
      $region83: #{vision_mega_forward.5} parent=11 // pred_region
        _
      $region84: #{vision_mega_forward.5} parent=11 // pred_fallthru
        _
      // Predicated region
      $region85: #{vision_mega_forward.5} parent=11 // pred_check
        %p661 = pneg %p482
      $region86: #{vision_mega_forward.5} parent=11 // pred_check_branch
        %663 = sbr.rel (%p661) target = $region88
      $region87: #{vision_mega_forward.5} parent=11 // pred_region
        _
      $region88: #{vision_mega_forward.5} parent=11 // pred_fallthru
        _
      // Predicated region
      $region89: #{vision_mega_forward.5} parent=11 // pred_check
        %p664 = pneg %p503
      $region90: #{vision_mega_forward.5} parent=11 // pred_check_branch
        %666 = sbr.rel (%p664) target = $region92
      $region91: #{vision_mega_forward.5} parent=11 // pred_region
        _
      $region92: #{vision_mega_forward.5} parent=11 // pred_fallthru
        _
      // Predicated region
      $region93: #{vision_mega_forward.5} parent=11 // pred_check
        %p667 = pneg %p524
      $region94: #{vision_mega_forward.5} parent=11 // pred_check_branch
        %669 = sbr.rel (%p667) target = $region96
      $region95: #{vision_mega_forward.5} parent=11 // pred_region
        _
      $region96: #{vision_mega_forward.5} parent=11 // pred_fallthru
        _
      // Predicated region
      $region97: #{vision_mega_forward.5} parent=11 // pred_check
        %p670 = pneg %p545
      $region98: #{vision_mega_forward.5} parent=11 // pred_check_branch
        %672 = sbr.rel (%p670) target = $region100
      $region99: #{vision_mega_forward.5} parent=11 // pred_region
        _
      $region100: #{vision_mega_forward.5} parent=11 // pred_fallthru
        _
      // Predicated region
      $region101: #{vision_mega_forward.5} parent=11 // pred_check
        %p673 = pneg %p566
      $region102: #{vision_mega_forward.5} parent=11 // pred_check_branch
        %675 = sbr.rel (%p673) target = $region104
      $region103: #{vision_mega_forward.5} parent=11 // pred_region
        _
      $region104: #{vision_mega_forward.5} parent=11 // pred_fallthru
        _
    $region12: #{vision_mega_forward.5} parent=5 // pred_fallthru
      _
    %p676 = scmp.lt.s32.totalorder %s31, 2
    // Predicated region
    $region105: #{vision_mega_forward.5} parent=5 // pred_check
      %p677 = pneg %p676
    $region106: #{vision_mega_forward.5} parent=5 // pred_check_branch
      %679 = sbr.rel (%p677) target = $region108
    $region107: #{vision_mega_forward.5} parent=5 // pred_region
      // Predicated region
      $region109: #{vision_mega_forward.5} parent=107 // pred_check
        %p680 = pneg %p51
      $region110: #{vision_mega_forward.5} parent=107 // pred_check_branch
        %682 = sbr.rel (%p680) target = $region112
      $region111: #{vision_mega_forward.5} parent=107 // pred_region
        %p683 = scmp.lt.s32.totalorder %s31, 1
        %s684 = scalar_select %p683, %s31, 1
        %s685 = smul.addr %s684, 2
        %s686 = smul.addr %s685, 4
        %s687 = scalar_lea.vmem %s0, %s686
      $region112: #{vision_mega_forward.5} parent=107 // pred_fallthru
        _
      // Predicated region
      $region113: #{vision_mega_forward.5} parent=107 // pred_check
        %p688 = pneg %p77
      $region114: #{vision_mega_forward.5} parent=107 // pred_check_branch
        %690 = sbr.rel (%p688) target = $region116
      $region115: #{vision_mega_forward.5} parent=107 // pred_region
        %p691 = scmp.lt.s32.totalorder %s31, 1
        %s692 = scalar_select %p691, %s31, 1
        %s693 = smul.addr %s692, 2
        %s694 = smul.addr %s693, 4
        %s695 = scalar_lea.vmem %s1, %s694
      $region116: #{vision_mega_forward.5} parent=107 // pred_fallthru
        _
    $region108: #{vision_mega_forward.5} parent=5 // pred_fallthru
      _
    %p696 = scmp.le.s32.totalorder 1, %s31
    %p697 = scmp.lt.s32.totalorder %s31, 3
    %p698 = pnand %p696, %p697
    %p699 = pneg %p698
    // Predicated region
    $region117: #{vision_mega_forward.5} parent=5 // pred_check
      _
    $region118: #{vision_mega_forward.5} parent=5 // pred_check_branch
      %701 = sbr.rel (%p698) target = $region120
    $region119: #{vision_mega_forward.5} parent=5 // pred_region
      %s702 = ssub.s32 %s31, 1
      %p703 = scmp.lt.s32.totalorder %s36, 1
      %s704 = scalar_select %p703, %s36, 1
      %s705 = smul.addr %s704, 2
      %s706 = smul.addr %s705, 4
      %s707 = scalar_lea.vmem %s0, %s706
      %p708 = pneg %p57
      %p709 = pneg %p54
      %p710 = scmp.lt.s32.totalorder %s36, 1
      %s711 = scalar_select %p710, %s36, 1
      %s712 = smul.addr %s711, 2
      %s713 = smul.addr %s712, 4
      %s714 = scalar_lea.vmem %s1, %s713
      %p715 = pneg %p83
      %p716 = pneg %p80
      %p717 = pneg %p104
      %p718 = pneg %p101
      %p719 = pneg %p125
      %p720 = pneg %p122
      %p721 = pneg %p146
      %p722 = pneg %p143
      %p723 = pneg %p167
      %p724 = pneg %p164
      %p725 = pneg %p188
      %p726 = pneg %p185
      %p727 = pneg %p209
      %p728 = pneg %p206
      %p729 = pneg %p230
      %p730 = pneg %p227
      %p731 = pneg %p251
      %p732 = pneg %p248
      %p733 = pneg %p272
      %p734 = pneg %p269
      %p735 = pneg %p293
      %p736 = pneg %p290
      %p737 = pneg %p314
      %p738 = pneg %p311
      %p739 = pneg %p335
      %p740 = pneg %p332
      %p741 = pneg %p356
      %p742 = pneg %p353
      %p743 = pneg %p377
      %p744 = pneg %p374
      %p745 = pneg %p398
      %p746 = pneg %p395
      %p747 = pneg %p419
      %p748 = pneg %p416
      %p749 = pneg %p440
      %p750 = pneg %p437
      %p751 = pneg %p461
      %p752 = pneg %p458
      %p753 = pneg %p482
      %p754 = pneg %p479
      %p755 = pneg %p503
      %p756 = pneg %p500
      %p757 = pneg %p524
      %p758 = pneg %p521
      %p759 = pneg %p545
      %p760 = pneg %p542
      %p761 = pneg %p566
      %p762 = pneg %p563
      %p763 = pneg %p592
      %p764 = pneg %p589
      %p765 = scmp.lt.s32.totalorder %s36, 1
      %s766 = scalar_select %p765, %s36, 1
      %s767 = smul.addr %s766, 2
      %s768 = smul.addr %s767, 4
      %s769 = scalar_lea.vmem %s25, %s768
      %p770 = scmp.lt.s32.totalorder %s36, 1
      %s771 = scalar_select %p770, %s36, 1
      %s772 = smul.addr %s771, 2
      %s773 = smul.addr %s772, 4
      %s774 = scalar_lea.vmem %s0, %s773
      %p775 = scmp.lt.s32.totalorder %s36, 1
      %s776 = scalar_select %p775, %s36, 1
      %s777 = smul.addr %s776, 2
      %s778 = smul.addr %s777, 4
      %s779 = scalar_lea.vmem %s1, %s778
      %p780 = scmp.lt.s32.totalorder %s36, 1
      %s781 = scalar_select %p780, %s36, 1
      %s782 = smul.addr %s781, 2
      %s783 = smul.addr %s782, 4
      %s784 = scalar_lea.vmem %s25, %s783
      %v786 = vld [vmem:[%s774] sm:$0xf]
      %v787 = vld [vmem:[%s774 + $0x4] sm:$0xf]
      %v788 = vunpack.c.l.bf16 %v786
      %v789 = vunpack.c.l.bf16 %v787
      %v790 = vld [vmem:[%s2] sm:$0x1]
      %v791 = vld [vmem:[%s3] sm:$0x1]
      %vm792 = vcmask 261120
      %v793 = vsel %vm792, %v788, 0.0
      %794 = vadd.xlane.f32.xlu0 %v793
      %v795 = vpop.xlane.xlu0 %794
      %v796 = vsel %vm792, %v789, 0.0
      %797 = vadd.xlane.f32.xlu0 %v796
      %v798 = vpop.xlane.xlu0 %797
      %v799 = vrcp.pop 32.0
      %v800 = vmul.f32 32.0, %v799
      %v801 = vsub.f32 1.0, %v800
      %v802 = vmul.f32 %v799, %v801
      %v803 = vadd.f32 %v799, %v802
      %vm804 = vweird.f32 %v799
      %v805 = vsel %vm804, %v799, %v803
      %v806 = vmul.f32 %v795, %v805
      %v807 = vmul.f32 %v798, %v805
      %v808 = vsub.f32 %v788, %v806
      %v809 = vsub.f32 %v789, %v807
      %v810 = vmul.f32 %v808, %v808
      %v811 = vmul.f32 %v809, %v809
      %v812 = vsel %vm792, %v810, 0.0
      %813 = vadd.xlane.f32.xlu0 %v812
      %v814 = vpop.xlane.xlu0 %813
      %v815 = vsel %vm792, %v811, 0.0
      %816 = vadd.xlane.f32.xlu0 %v815
      %v817 = vpop.xlane.xlu0 %816
      %v818 = vmul.f32 %v814, %v805
      %v819 = vmul.f32 %v817, %v805
      %v820 = vadd.f32 %v818, 1e-05
      %v821 = vadd.f32 %v819, 1e-05
      %v822 = vrsqrt.pop %v820
      %v823 = vmul.f32 %v822, %v820
      %v824 = vmul.f32 %v823, %v822
      %v825 = vmul.f32 0.5, %v824
      %v826 = vsub.f32 1.5, %v825
      %v827 = vmul.f32 %v822, %v826
      %vm828 = vweird.f32 %v820
      %vm829 = vweird.f32 %v822
      %vm830 = vmor %vm828, %vm829
      %v831 = vsel %vm830, %v822, %v827
      %v832 = vrsqrt.pop %v821
      %v833 = vmul.f32 %v832, %v821
      %v834 = vmul.f32 %v833, %v832
      %v835 = vmul.f32 0.5, %v834
      %v836 = vsub.f32 1.5, %v835
      %v837 = vmul.f32 %v832, %v836
      %vm838 = vweird.f32 %v821
      %vm839 = vweird.f32 %v832
      %vm840 = vmor %vm838, %vm839
      %v841 = vsel %vm840, %v832, %v837
      %v842 = vmul.f32 %v808, %v831
      %v843 = vmul.f32 %v809, %v841
      %v845 = vperm.slane %v790, 0
      %v847 = vmul.f32 %v842, %v845
      %v848 = vmul.f32 %v843, %v845
      %v850 = vperm.slane %v791, 0
      %v852 = vadd.f32 %v847, %v850
      %v853 = vadd.f32 %v848, %v850
      %v854 = vpack.c.bf16 %v853, %v852
      %v855 = vld [vmem:[%s779] sm:$0xf]
      %v856 = vld [vmem:[%s779 + $0x4] sm:$0xf]
      %v857 = vld [vmem:[%s4] sm:$0xf]
      %v858 = vld [vmem:[%s4 + $0x4] sm:$0xf]
      %v859 = vld [vmem:[%s4 + $0x8] sm:$0xf]
      %v860 = vld [vmem:[%s4 + $0xc] sm:$0xf]
      %v861 = vld [vmem:[%s5] sm:$0x1]
      %v863 = vperm.slane %v861, 0
      %v869 = vunpack.c.l.b16 %v857
      %v870 = vunpack.c.l.b16 %v858
      %v871 = vunpack.c.l.b16 %v859
      %v872 = vunpack.c.l.b16 %v860
      %v873 = vpack.c.b16 %v870, %v869
      %v874 = vpack.c.b16 %v872, %v871
      %v878 = vsel %vm792, %v854, 0
      %880 = vmatpush.bf16.msra.mxu0 0
      %881 = vmatpush.bf16.msra.mxu0 0
      %882 = vmatpush.bf16.msra.mxu0 0
      %883 = vmatpush.bf16.msra.mxu0 0
      %884 = vmatpush.bf16.msra.mxu0 0
      %885 = vmatpush.bf16.msra.mxu0 0
      %886 = vmatpush.bf16.msra.mxu0 %v874
      %887 = vmatpush.bf16.msra.mxu0 %v873
      %888 = vmatmul.bf16.gmra.mxu0 %v878
      %v889 = vpop.f32.mrf.mxu0
      %v890 = vadd.f32 %v863, %v889
      %v891 = vpop.f32.mrf.mxu0
      %v892 = vadd.f32 %v863, %v891
      %893 = vdwg.mxu0
      %v894 = vxor.u32 %v890, 2147483648
      %v895 = vxor.u32 %v892, 2147483648
      %v896 = vmul.f32 %v894, 1.442695
      %v897 = vpow.pop %v896
      %v898 = vmul.f32 %v895, 1.442695
      %v899 = vpow.pop %v898
      %v900 = vadd.f32 %v897, 1.0
      %v901 = vadd.f32 %v899, 1.0
      %v902 = vrcp.pop %v900
      %v903 = vmul.f32 %v900, %v902
      %v904 = vsub.f32 1.0, %v903
      %v905 = vmul.f32 %v902, %v904
      %v906 = vadd.f32 %v902, %v905
      %vm907 = vweird.f32 %v900
      %vm908 = vweird.f32 %v902
      %vm909 = vmor %vm907, %vm908
      %v910 = vsel %vm909, %v902, %v906
      %v911 = vand.u32 2147483647, %v900
      %vm912 = vcmp.eq.f32.partialorder %v911, 8.507059e+37
      %v913 = vand.u32 %v900, 2147483648
      %v914 = vor.u32 1.1754944e-38, %v913
      %v915 = vsel %vm912, %v914, %v910
      %v916 = vmul.f32 1.0, %v915
      %v917 = vrcp.pop %v901
      %v918 = vmul.f32 %v901, %v917
      %v919 = vsub.f32 1.0, %v918
      %v920 = vmul.f32 %v917, %v919
      %v921 = vadd.f32 %v917, %v920
      %vm922 = vweird.f32 %v901
      %vm923 = vweird.f32 %v917
      %vm924 = vmor %vm922, %vm923
      %v925 = vsel %vm924, %v917, %v921
      %v926 = vand.u32 2147483647, %v901
      %vm927 = vcmp.eq.f32.partialorder %v926, 8.507059e+37
      %v928 = vand.u32 %v901, 2147483648
      %v929 = vor.u32 1.1754944e-38, %v928
      %v930 = vsel %vm927, %v929, %v925
      %v931 = vmul.f32 1.0, %v930
      %v932 = vmul.f32 %v890, %v916
      %v933 = vmul.f32 %v892, %v931
      %v934 = vld [vmem:[%s6] sm:$0xf]
      %v935 = vld [vmem:[%s6 + $0x4] sm:$0xf]
      %v936 = vld [vmem:[%s6 + $0x8] sm:$0xf]
      %v937 = vld [vmem:[%s6 + $0xc] sm:$0xf]
      %v938 = vld [vmem:[%s7] sm:$0x1]
      %v940 = vperm.slane %v938, 0
      %v944 = vunpack.c.l.b16 %v855
      %v945 = vunpack.c.l.b16 %v856
      %v946 = vpack.c.b16 %v945, %v944
      %v951 = vunpack.c.l.b16 %v934
      %v952 = vunpack.c.l.b16 %v935
      %v953 = vunpack.c.l.b16 %v936
      %v954 = vunpack.c.l.b16 %v937
      %v955 = vpack.c.b16 %v952, %v951
      %v956 = vpack.c.b16 %v954, %v953
      %v960 = vsel %vm792, %v946, 0
      %962 = vmatpush.bf16.msra.mxu0 0
      %963 = vmatpush.bf16.msra.mxu0 0
      %964 = vmatpush.bf16.msra.mxu0 0
      %965 = vmatpush.bf16.msra.mxu0 0
      %966 = vmatpush.bf16.msra.mxu0 0
      %967 = vmatpush.bf16.msra.mxu0 0
      %968 = vmatpush.bf16.msra.mxu0 %v956
      %969 = vmatpush.bf16.msra.mxu0 %v955
      %970 = vmatmul.bf16.gmra.mxu0 %v960
      %v971 = vpop.f32.mrf.mxu0
      %v972 = vadd.f32 %v940, %v971
      %v973 = vpop.f32.mrf.mxu0
      %v974 = vadd.f32 %v940, %v973
      %975 = vdwg.mxu0
      %v976 = vxor.u32 %v972, 2147483648
      %v977 = vxor.u32 %v974, 2147483648
      %v978 = vmul.f32 %v976, 1.442695
      %v979 = vpow.pop %v978
      %v980 = vmul.f32 %v977, 1.442695
      %v981 = vpow.pop %v980
      %v982 = vadd.f32 %v979, 1.0
      %v983 = vadd.f32 %v981, 1.0
      %v984 = vrcp.pop %v982
      %v985 = vmul.f32 %v982, %v984
      %v986 = vsub.f32 1.0, %v985
      %v987 = vmul.f32 %v984, %v986
      %v988 = vadd.f32 %v984, %v987
      %vm989 = vweird.f32 %v982
      %vm990 = vweird.f32 %v984
      %vm991 = vmor %vm989, %vm990
      %v992 = vsel %vm991, %v984, %v988
      %v993 = vand.u32 2147483647, %v982
      %vm994 = vcmp.eq.f32.partialorder %v993, 8.507059e+37
      %v995 = vand.u32 %v982, 2147483648
      %v996 = vor.u32 1.1754944e-38, %v995
      %v997 = vsel %vm994, %v996, %v992
      %v998 = vmul.f32 1.0, %v997
      %v999 = vrcp.pop %v983
      %v1000 = vmul.f32 %v983, %v999
      %v1001 = vsub.f32 1.0, %v1000
      %v1002 = vmul.f32 %v999, %v1001
      %v1003 = vadd.f32 %v999, %v1002
      %vm1004 = vweird.f32 %v983
      %vm1005 = vweird.f32 %v999
      %vm1006 = vmor %vm1004, %vm1005
      %v1007 = vsel %vm1006, %v999, %v1003
      %v1008 = vand.u32 2147483647, %v983
      %vm1009 = vcmp.eq.f32.partialorder %v1008, 8.507059e+37
      %v1010 = vand.u32 %v983, 2147483648
      %v1011 = vor.u32 1.1754944e-38, %v1010
      %v1012 = vsel %vm1009, %v1011, %v1007
      %v1013 = vmul.f32 1.0, %v1012
      %v1014 = vld [vmem:[%s8] sm:$0xf]
      %v1015 = vld [vmem:[%s8 + $0x4] sm:$0xf]
      %v1016 = vld [vmem:[%s8 + $0x8] sm:$0xf]
      %v1017 = vld [vmem:[%s8 + $0xc] sm:$0xf]
      %v1018 = vld [vmem:[%s9] sm:$0x1]
      %v1020 = vperm.slane %v1018, 0
      %v1026 = vunpack.c.l.b16 %v1014
      %v1027 = vunpack.c.l.b16 %v1015
      %v1028 = vunpack.c.l.b16 %v1016
      %v1029 = vunpack.c.l.b16 %v1017
      %v1030 = vpack.c.b16 %v1027, %v1026
      %v1031 = vpack.c.b16 %v1029, %v1028
      %1034 = vmatpush.bf16.msra.mxu0 0
      %1035 = vmatpush.bf16.msra.mxu0 0
      %1036 = vmatpush.bf16.msra.mxu0 0
      %1037 = vmatpush.bf16.msra.mxu0 0
      %1038 = vmatpush.bf16.msra.mxu0 0
      %1039 = vmatpush.bf16.msra.mxu0 0
      %1040 = vmatpush.bf16.msra.mxu0 %v1031
      %1041 = vmatpush.bf16.msra.mxu0 %v1030
      %1042 = vmatmul.bf16.gmra.mxu0 %v960
      %v1043 = vpop.f32.mrf.mxu0
      %v1044 = vadd.f32 %v1020, %v1043
      %v1045 = vpop.f32.mrf.mxu0
      %v1046 = vadd.f32 %v1020, %v1045
      %1047 = vdwg.mxu0
      %v1048 = vxor.u32 %v1044, 2147483648
      %v1049 = vxor.u32 %v1046, 2147483648
      %v1050 = vmul.f32 %v1048, 1.442695
      %v1051 = vpow.pop %v1050
      %v1052 = vmul.f32 %v1049, 1.442695
      %v1053 = vpow.pop %v1052
      %v1054 = vadd.f32 %v1051, 1.0
      %v1055 = vadd.f32 %v1053, 1.0
      %v1056 = vrcp.pop %v1054
      %v1057 = vmul.f32 %v1054, %v1056
      %v1058 = vsub.f32 1.0, %v1057
      %v1059 = vmul.f32 %v1056, %v1058
      %v1060 = vadd.f32 %v1056, %v1059
      %vm1061 = vweird.f32 %v1054
      %vm1062 = vweird.f32 %v1056
      %vm1063 = vmor %vm1061, %vm1062
      %v1064 = vsel %vm1063, %v1056, %v1060
      %v1065 = vand.u32 2147483647, %v1054
      %vm1066 = vcmp.eq.f32.partialorder %v1065, 8.507059e+37
      %v1067 = vand.u32 %v1054, 2147483648
      %v1068 = vor.u32 1.1754944e-38, %v1067
      %v1069 = vsel %vm1066, %v1068, %v1064
      %v1070 = vmul.f32 1.0, %v1069
      %v1071 = vrcp.pop %v1055
      %v1072 = vmul.f32 %v1055, %v1071
      %v1073 = vsub.f32 1.0, %v1072
      %v1074 = vmul.f32 %v1071, %v1073
      %v1075 = vadd.f32 %v1071, %v1074
      %vm1076 = vweird.f32 %v1055
      %vm1077 = vweird.f32 %v1071
      %vm1078 = vmor %vm1076, %vm1077
      %v1079 = vsel %vm1078, %v1071, %v1075
      %v1080 = vand.u32 2147483647, %v1055
      %vm1081 = vcmp.eq.f32.partialorder %v1080, 8.507059e+37
      %v1082 = vand.u32 %v1055, 2147483648
      %v1083 = vor.u32 1.1754944e-38, %v1082
      %v1084 = vsel %vm1081, %v1083, %v1079
      %v1085 = vmul.f32 1.0, %v1084
      %v1086 = vmul.f32 %v1044, %v1070
      %v1087 = vmul.f32 %v1046, %v1085
      %v1088 = vld [vmem:[%s10] sm:$0xf]
      %v1089 = vld [vmem:[%s10 + $0x4] sm:$0xf]
      %v1090 = vld [vmem:[%s10 + $0x8] sm:$0xf]
      %v1091 = vld [vmem:[%s10 + $0xc] sm:$0xf]
      %v1092 = vld [vmem:[%s11] sm:$0x1]
      %v1094 = vperm.slane %v1092, 0
      %v1100 = vunpack.c.l.b16 %v1088
      %v1101 = vunpack.c.l.b16 %v1089
      %v1102 = vunpack.c.l.b16 %v1090
      %v1103 = vunpack.c.l.b16 %v1091
      %v1104 = vpack.c.b16 %v1101, %v1100
      %v1105 = vpack.c.b16 %v1103, %v1102
      %1108 = vmatpush.bf16.msra.mxu0 0
      %1109 = vmatpush.bf16.msra.mxu0 0
      %1110 = vmatpush.bf16.msra.mxu0 0
      %1111 = vmatpush.bf16.msra.mxu0 0
      %1112 = vmatpush.bf16.msra.mxu0 0
      %1113 = vmatpush.bf16.msra.mxu0 0
      %1114 = vmatpush.bf16.msra.mxu0 %v1105
      %1115 = vmatpush.bf16.msra.mxu0 %v1104
      %1116 = vmatmul.bf16.gmra.mxu0 %v960
      %v1117 = vpop.f32.mrf.mxu0
      %v1118 = vadd.f32 %v1094, %v1117
      %v1119 = vpop.f32.mrf.mxu0
      %v1120 = vadd.f32 %v1094, %v1119
      %1121 = vdwg.mxu0
      %v1122 = vxor.u32 %v1118, 2147483648
      %v1123 = vxor.u32 %v1120, 2147483648
      %v1124 = vmul.f32 %v1122, 1.442695
      %v1125 = vpow.pop %v1124
      %v1126 = vmul.f32 %v1123, 1.442695
      %v1127 = vpow.pop %v1126
      %v1128 = vadd.f32 %v1125, 1.0
      %v1129 = vadd.f32 %v1127, 1.0
      %v1130 = vrcp.pop %v1128
      %v1131 = vmul.f32 %v1128, %v1130
      %v1132 = vsub.f32 1.0, %v1131
      %v1133 = vmul.f32 %v1130, %v1132
      %v1134 = vadd.f32 %v1130, %v1133
      %vm1135 = vweird.f32 %v1128
      %vm1136 = vweird.f32 %v1130
      %vm1137 = vmor %vm1135, %vm1136
      %v1138 = vsel %vm1137, %v1130, %v1134
      %v1139 = vand.u32 2147483647, %v1128
      %vm1140 = vcmp.eq.f32.partialorder %v1139, 8.507059e+37
      %v1141 = vand.u32 %v1128, 2147483648
      %v1142 = vor.u32 1.1754944e-38, %v1141
      %v1143 = vsel %vm1140, %v1142, %v1138
      %v1144 = vmul.f32 1.0, %v1143
      %v1145 = vrcp.pop %v1129
      %v1146 = vmul.f32 %v1129, %v1145
      %v1147 = vsub.f32 1.0, %v1146
      %v1148 = vmul.f32 %v1145, %v1147
      %v1149 = vadd.f32 %v1145, %v1148
      %vm1150 = vweird.f32 %v1129
      %vm1151 = vweird.f32 %v1145
      %vm1152 = vmor %vm1150, %vm1151
      %v1153 = vsel %vm1152, %v1145, %v1149
      %v1154 = vand.u32 2147483647, %v1129
      %vm1155 = vcmp.eq.f32.partialorder %v1154, 8.507059e+37
      %v1156 = vand.u32 %v1129, 2147483648
      %v1157 = vor.u32 1.1754944e-38, %v1156
      %v1158 = vsel %vm1155, %v1157, %v1153
      %v1159 = vmul.f32 1.0, %v1158
      %v1160 = vmul.f32 %v1118, %v1144
      %v1161 = vmul.f32 %v1120, %v1159
      %v1162 = vld [vmem:[%s12] sm:$0xf]
      %v1163 = vld [vmem:[%s12 + $0x4] sm:$0xf]
      %v1164 = vld [vmem:[%s12 + $0x8] sm:$0xf]
      %v1165 = vld [vmem:[%s12 + $0xc] sm:$0xf]
      %v1166 = vld [vmem:[%s13] sm:$0x1]
      %v1168 = vperm.slane %v1166, 0
      %v1174 = vunpack.c.l.b16 %v1162
      %v1175 = vunpack.c.l.b16 %v1163
      %v1176 = vunpack.c.l.b16 %v1164
      %v1177 = vunpack.c.l.b16 %v1165
      %v1178 = vpack.c.b16 %v1175, %v1174
      %v1179 = vpack.c.b16 %v1177, %v1176
      %1182 = vmatpush.bf16.msra.mxu0 0
      %1183 = vmatpush.bf16.msra.mxu0 0
      %1184 = vmatpush.bf16.msra.mxu0 0
      %1185 = vmatpush.bf16.msra.mxu0 0
      %1186 = vmatpush.bf16.msra.mxu0 0
      %1187 = vmatpush.bf16.msra.mxu0 0
      %1188 = vmatpush.bf16.msra.mxu0 %v1179
      %1189 = vmatpush.bf16.msra.mxu0 %v1178
      %1190 = vmatmul.bf16.gmra.mxu0 %v960
      %v1191 = vpop.f32.mrf.mxu0
      %v1192 = vadd.f32 %v1168, %v1191
      %v1193 = vpop.f32.mrf.mxu0
      %v1194 = vadd.f32 %v1168, %v1193
      %1195 = vdwg.mxu0
      %v1196 = vld [vmem:[%s14] sm:$0x1]
      %v1197 = vperm.slane %v1196, 0
      %v1198 = vmul.f32 %v1086, %v1197
      %v1199 = vmul.f32 %v1087, %v1197
      %v1200 = vld [vmem:[%s15] sm:$0x1]
      %v1201 = vperm.slane %v1200, 0
      %v1202 = vadd.f32 %v1198, %v1201
      %v1203 = vadd.f32 %v1199, %v1201
      %v1204 = vld [vmem:[%s14 + $0x1] sm:$0x1]
      %v1205 = vperm.slane %v1204, 0
      %v1206 = vmul.f32 %v1086, %v1205
      %v1207 = vmul.f32 %v1087, %v1205
      %v1208 = vld [vmem:[%s15 + $0x1] sm:$0x1]
      %v1209 = vperm.slane %v1208, 0
      %v1210 = vadd.f32 %v1206, %v1209
      %v1211 = vadd.f32 %v1207, %v1209
      %v1212 = vpack.c.bf16 %v1203, %v1202
      %v1213 = vpack.c.bf16 %v1211, %v1210
      %v1214 = vld [vmem:[%s18] sm:$0xf]
      %v1215 = vld [vmem:[%s18 + $0x4] sm:$0xf]
      %v1216 = vunpack.c.l.bf16 %v1214
      %v1217 = vunpack.c.l.bf16 %v1215
      %vm1218 = vcmask 130048
      %v1220 = vsel %vm1218, %v1212, 0
      %v1223 = vsel %vm1218, %v1213, 0
      %1225 = vmatpush.bf16.xpose.msra.mxu0 0
      %1226 = vmatpush.bf16.xpose.msra.mxu0 0
      %1227 = vmatpush.bf16.xpose.msra.mxu0 0
      %1228 = vmatpush.bf16.xpose.msra.mxu0 0
      %1229 = vmatpush.bf16.xpose.msra.mxu0 0
      %1230 = vmatpush.bf16.xpose.msra.mxu0 0
      %1231 = vmatpush.bf16.xpose.msra.mxu0 0
      %1232 = vmatpush.bf16.xpose.msra.mxu0 %v1223
      %1233 = vmatmul.bf16.gmra.mxu0 %v1220
      %v1234 = vpop.f32.mrf.mxu0
      %v1235 = vadd.f32 %v1216, %v1234
      %v1236 = vpop.f32.mrf.mxu0
      %v1237 = vadd.f32 %v1217, %v1236
      %1238 = vdwg.mxu0
      %vm1239 = vcmp.ge.f32.partialorder %v1235, 0.0
      %vm1240 = vcmp.ge.f32.partialorder %v1237, 0.0
      %v1241 = vsel %vm1239, 1.0, -1.0
      %v1242 = vsel %vm1240, 1.0, -1.0
      %v1243 = vand.u32 2147483647, %v1235
      %v1244 = vand.u32 2147483647, %v1237
      %v1245 = vmul.f32 %v1243, 0.3275911
      %v1246 = vmul.f32 %v1244, 0.3275911
      %v1247 = vadd.f32 %v1245, 1.0
      %v1248 = vadd.f32 %v1246, 1.0
      %v1249 = vrcp.pop %v1247
      %v1250 = vmul.f32 %v1247, %v1249
      %v1251 = vsub.f32 1.0, %v1250
      %v1252 = vmul.f32 %v1249, %v1251
      %v1253 = vadd.f32 %v1249, %v1252
      %vm1254 = vweird.f32 %v1247
      %vm1255 = vweird.f32 %v1249
      %vm1256 = vmor %vm1254, %vm1255
      %v1257 = vsel %vm1256, %v1249, %v1253
      %v1258 = vand.u32 2147483647, %v1247
      %vm1259 = vcmp.eq.f32.partialorder %v1258, 8.507059e+37
      %v1260 = vand.u32 %v1247, 2147483648
      %v1261 = vor.u32 1.1754944e-38, %v1260
      %v1262 = vsel %vm1259, %v1261, %v1257
      %v1263 = vmul.f32 1.0, %v1262
      %v1264 = vrcp.pop %v1248
      %v1265 = vmul.f32 %v1248, %v1264
      %v1266 = vsub.f32 1.0, %v1265
      %v1267 = vmul.f32 %v1264, %v1266
      %v1268 = vadd.f32 %v1264, %v1267
      %vm1269 = vweird.f32 %v1248
      %vm1270 = vweird.f32 %v1264
      %vm1271 = vmor %vm1269, %vm1270
      %v1272 = vsel %vm1271, %v1264, %v1268
      %v1273 = vand.u32 2147483647, %v1248
      %vm1274 = vcmp.eq.f32.partialorder %v1273, 8.507059e+37
      %v1275 = vand.u32 %v1248, 2147483648
      %v1276 = vor.u32 1.1754944e-38, %v1275
      %v1277 = vsel %vm1274, %v1276, %v1272
      %v1278 = vmul.f32 1.0, %v1277
      %v1279 = vmul.f32 %v1263, 1.0614054
      %v1280 = vmul.f32 %v1278, 1.0614054
      %v1281 = vadd.f32 %v1279, -1.4531521
      %v1282 = vadd.f32 %v1280, -1.4531521
      %v1283 = vmul.f32 %v1281, %v1263
      %v1284 = vmul.f32 %v1282, %v1278
      %v1285 = vadd.f32 %v1283, 1.4214138
      %v1286 = vadd.f32 %v1284, 1.4214138
      %v1287 = vmul.f32 %v1285, %v1263
      %v1288 = vmul.f32 %v1286, %v1278
      %v1289 = vadd.f32 %v1287, -0.28449672
      %v1290 = vadd.f32 %v1288, -0.28449672
      %v1291 = vmul.f32 %v1289, %v1263
      %v1292 = vmul.f32 %v1290, %v1278
      %v1293 = vadd.f32 %v1291, 0.2548296
      %v1294 = vadd.f32 %v1292, 0.2548296
      %v1295 = vmul.f32 %v1293, %v1263
      %v1296 = vmul.f32 %v1294, %v1278
      %v1297 = vsub.f32 0.0, %v1243
      %v1298 = vsub.f32 0.0, %v1244
      %v1299 = vmul.f32 %v1297, %v1243
      %v1300 = vmul.f32 %v1298, %v1244
      %v1301 = vmul.f32 %v1299, 1.442695
      %v1302 = vpow.pop %v1301
      %v1303 = vmul.f32 %v1300, 1.442695
      %v1304 = vpow.pop %v1303
      %v1305 = vmul.f32 %v1295, %v1302
      %v1306 = vmul.f32 %v1296, %v1304
      %v1307 = vsub.f32 1.0, %v1305
      %v1308 = vsub.f32 1.0, %v1306
      %v1309 = vmul.f32 %v1241, %v1307
      %v1310 = vmul.f32 %v1242, %v1308
      %v1311 = vadd.f32 %v1309, 1.0
      %v1312 = vadd.f32 %v1310, 1.0
      %v1313 = vmul.f32 %v1311, 0.5
      %v1314 = vmul.f32 %v1312, 0.5
      %v1315 = vpack.c.bf16 %v1314, %v1313
      %v1316 = vpack.c.bf16 %v933, %v932
      %v1318 = vsel %vm1218, %v1315, 0
      %1320 = vmatpush.bf16.msra.mxu0 0
      %1321 = vmatpush.bf16.msra.mxu0 0
      %1322 = vmatpush.bf16.msra.mxu0 0
      %1323 = vmatpush.bf16.msra.mxu0 0
      %1324 = vmatpush.bf16.msra.mxu0 0
      %1325 = vmatpush.bf16.msra.mxu0 0
      %1326 = vmatpush.bf16.msra.mxu0 0
      %1327 = vmatpush.bf16.msra.mxu0 %v1316
      %1328 = vmatmul.bf16.gmra.mxu0 %v1318
      %v1329 = vpop.f32.mrf.mxu0
      %v1330 = vadd.f32 0.0, %v1329
      %v1331 = vpop.f32.mrf.mxu0
      %v1332 = vadd.f32 0.0, %v1331
      %1333 = vdwg.mxu0
      %v1334 = vmul.f32 %v1330, %v1160
      %v1335 = vmul.f32 %v1332, %v1161
      %v1336 = vpack.c.bf16 %v1335, %v1334
      %v1337 = vld [vmem:[%s16] sm:$0xf]
      %v1338 = vld [vmem:[%s16 + $0x4] sm:$0xf]
      %v1339 = vld [vmem:[%s16 + $0x8] sm:$0xf]
      %v1340 = vld [vmem:[%s16 + $0xc] sm:$0xf]
      %v1341 = vld [vmem:[%s16 + $0x10] sm:$0xf]
      %v1342 = vld [vmem:[%s16 + $0x14] sm:$0xf]
      %v1343 = vld [vmem:[%s16 + $0x18] sm:$0xf]
      %v1344 = vld [vmem:[%s16 + $0x1c] sm:$0xf]
      %v1345 = vld [vmem:[%s17] sm:$0x1]
      %v1347 = vperm.slane %v1345, 0
      %v1357 = vunpack.c.l.b16 %v1337
      %v1358 = vunpack.c.l.b16 %v1338
      %v1359 = vunpack.c.l.b16 %v1339
      %v1360 = vunpack.c.l.b16 %v1340
      %v1361 = vunpack.c.l.b16 %v1341
      %v1362 = vunpack.c.l.b16 %v1342
      %v1363 = vunpack.c.l.b16 %v1343
      %v1364 = vunpack.c.l.b16 %v1344
      %v1365 = vpack.c.b16 %v1358, %v1357
      %v1366 = vpack.c.b16 %v1360, %v1359
      %v1367 = vpack.c.b16 %v1362, %v1361
      %v1368 = vpack.c.b16 %v1364, %v1363
      %vm1373 = vcmask 523264
      %v1375 = vsel %vm1373, %v1336, 0
      %1377 = vmatpush.bf16.msra.mxu0 0
      %1378 = vmatpush.bf16.msra.mxu0 0
      %1379 = vmatpush.bf16.msra.mxu0 0
      %1380 = vmatpush.bf16.msra.mxu0 0
      %1381 = vmatpush.bf16.msra.mxu0 %v1368
      %1382 = vmatpush.bf16.msra.mxu0 %v1367
      %1383 = vmatpush.bf16.msra.mxu0 %v1366
      %1384 = vmatpush.bf16.msra.mxu0 %v1365
      %1385 = vmatmul.bf16.gmra.mxu0 %v1375
      %v1386 = vpop.f32.mrf.mxu0
      %v1387 = vadd.f32 %v1347, %v1386
      %v1388 = vpop.f32.mrf.mxu0
      %v1389 = vadd.f32 %v1347, %v1388
      %1390 = vdwg.mxu0
      %v1391 = vadd.f32 %v1192, %v1387
      %v1392 = vadd.f32 %v1194, %v1389
      %v1393 = vxor.u32 %v1391, 2147483648
      %v1394 = vxor.u32 %v1392, 2147483648
      %v1395 = vmul.f32 %v1393, 1.442695
      %v1396 = vpow.pop %v1395
      %v1397 = vmul.f32 %v1394, 1.442695
      %v1398 = vpow.pop %v1397
      %v1399 = vadd.f32 %v1396, 1.0
      %v1400 = vadd.f32 %v1398, 1.0
      %v1401 = vrcp.pop %v1399
      %v1402 = vmul.f32 %v1399, %v1401
      %v1403 = vsub.f32 1.0, %v1402
      %v1404 = vmul.f32 %v1401, %v1403
      %v1405 = vadd.f32 %v1401, %v1404
      %vm1406 = vweird.f32 %v1399
      %vm1407 = vweird.f32 %v1401
      %vm1408 = vmor %vm1406, %vm1407
      %v1409 = vsel %vm1408, %v1401, %v1405
      %v1410 = vand.u32 2147483647, %v1399
      %vm1411 = vcmp.eq.f32.partialorder %v1410, 8.507059e+37
      %v1412 = vand.u32 %v1399, 2147483648
      %v1413 = vor.u32 1.1754944e-38, %v1412
      %v1414 = vsel %vm1411, %v1413, %v1409
      %v1415 = vmul.f32 1.0, %v1414
      %v1416 = vrcp.pop %v1400
      %v1417 = vmul.f32 %v1400, %v1416
      %v1418 = vsub.f32 1.0, %v1417
      %v1419 = vmul.f32 %v1416, %v1418
      %v1420 = vadd.f32 %v1416, %v1419
      %vm1421 = vweird.f32 %v1400
      %vm1422 = vweird.f32 %v1416
      %vm1423 = vmor %vm1421, %vm1422
      %v1424 = vsel %vm1423, %v1416, %v1420
      %v1425 = vand.u32 2147483647, %v1400
      %vm1426 = vcmp.eq.f32.partialorder %v1425, 8.507059e+37
      %v1427 = vand.u32 %v1400, 2147483648
      %v1428 = vor.u32 1.1754944e-38, %v1427
      %v1429 = vsel %vm1426, %v1428, %v1424
      %v1430 = vmul.f32 1.0, %v1429
      %v1431 = vmul.f32 %v1391, %v1415
      %v1432 = vmul.f32 %v1392, %v1430
      %v1433 = vsub.f32 %v1431, %v788
      %v1434 = vsub.f32 %v1432, %v789
      %v1435 = vmul.f32 %v998, %v1433
      %v1436 = vmul.f32 %v1013, %v1434
      %v1437 = vadd.f32 %v788, %v1435
      %v1438 = vadd.f32 %v789, %v1436
      %v1439 = vld [vmem:[%s19] sm:$0x1]
      %v1440 = vld [vmem:[%s20] sm:$0x1]
      %v1441 = vsel %vm792, %v1437, 0.0
      %1442 = vadd.xlane.f32.xlu0 %v1441
      %v1443 = vpop.xlane.xlu0 %1442
      %v1444 = vsel %vm792, %v1438, 0.0
      %1445 = vadd.xlane.f32.xlu0 %v1444
      %v1446 = vpop.xlane.xlu0 %1445
      %v1447 = vmul.f32 %v1443, %v805
      %v1448 = vmul.f32 %v1446, %v805
      %v1449 = vsub.f32 %v1437, %v1447
      %v1450 = vsub.f32 %v1438, %v1448
      %v1451 = vmul.f32 %v1449, %v1449
      %v1452 = vmul.f32 %v1450, %v1450
      %v1453 = vsel %vm792, %v1451, 0.0
      %1454 = vadd.xlane.f32.xlu0 %v1453
      %v1455 = vpop.xlane.xlu0 %1454
      %v1456 = vsel %vm792, %v1452, 0.0
      %1457 = vadd.xlane.f32.xlu0 %v1456
      %v1458 = vpop.xlane.xlu0 %1457
      %v1459 = vmul.f32 %v1455, %v805
      %v1460 = vmul.f32 %v1458, %v805
      %v1461 = vadd.f32 %v1459, 1e-05
      %v1462 = vadd.f32 %v1460, 1e-05
      %v1463 = vrsqrt.pop %v1461
      %v1464 = vmul.f32 %v1463, %v1461
      %v1465 = vmul.f32 %v1464, %v1463
      %v1466 = vmul.f32 0.5, %v1465
      %v1467 = vsub.f32 1.5, %v1466
      %v1468 = vmul.f32 %v1463, %v1467
      %vm1469 = vweird.f32 %v1461
      %vm1470 = vweird.f32 %v1463
      %vm1471 = vmor %vm1469, %vm1470
      %v1472 = vsel %vm1471, %v1463, %v1468
      %v1473 = vrsqrt.pop %v1462
      %v1474 = vmul.f32 %v1473, %v1462
      %v1475 = vmul.f32 %v1474, %v1473
      %v1476 = vmul.f32 0.5, %v1475
      %v1477 = vsub.f32 1.5, %v1476
      %v1478 = vmul.f32 %v1473, %v1477
      %vm1479 = vweird.f32 %v1462
      %vm1480 = vweird.f32 %v1473
      %vm1481 = vmor %vm1479, %vm1480
      %v1482 = vsel %vm1481, %v1473, %v1478
      %v1483 = vmul.f32 %v1449, %v1472
      %v1484 = vmul.f32 %v1450, %v1482
      %v1486 = vperm.slane %v1439, 0
      %v1488 = vmul.f32 %v1483, %v1486
      %v1489 = vmul.f32 %v1484, %v1486
      %v1491 = vperm.slane %v1440, 0
      %v1493 = vadd.f32 %v1488, %v1491
      %v1494 = vadd.f32 %v1489, %v1491
      %v1495 = vpack.c.bf16 %v1494, %v1493
      %v1496 = vld [vmem:[%s21] sm:$0xf]
      %v1497 = vld [vmem:[%s21 + $0x4] sm:$0xf]
      %v1498 = vld [vmem:[%s21 + $0x8] sm:$0xf]
      %v1499 = vld [vmem:[%s21 + $0xc] sm:$0xf]
      %v1500 = vld [vmem:[%s22] sm:$0x1]
      %v1502 = vperm.slane %v1500, 0
      %v1508 = vunpack.c.l.b16 %v1496
      %v1509 = vunpack.c.l.b16 %v1497
      %v1510 = vunpack.c.l.b16 %v1498
      %v1511 = vunpack.c.l.b16 %v1499
      %v1512 = vpack.c.b16 %v1509, %v1508
      %v1513 = vpack.c.b16 %v1511, %v1510
      %v1517 = vsel %vm792, %v1495, 0
      %1519 = vmatpush.bf16.msra.mxu0 0
      %1520 = vmatpush.bf16.msra.mxu0 0
      %1521 = vmatpush.bf16.msra.mxu0 0
      %1522 = vmatpush.bf16.msra.mxu0 0
      %1523 = vmatpush.bf16.msra.mxu0 0
      %1524 = vmatpush.bf16.msra.mxu0 0
      %1525 = vmatpush.bf16.msra.mxu0 %v1513
      %1526 = vmatpush.bf16.msra.mxu0 %v1512
      %1527 = vmatmul.bf16.gmra.mxu0 %v1517
      %v1528 = vpop.f32.mrf.mxu0
      %v1529 = vadd.f32 %v1502, %v1528
      %v1530 = vpop.f32.mrf.mxu0
      %v1531 = vadd.f32 %v1502, %v1530
      %1532 = vdwg.mxu0
      %v1533 = vxor.u32 %v1529, 2147483648
      %v1534 = vxor.u32 %v1531, 2147483648
      %v1535 = vmul.f32 %v1533, 1.442695
      %v1536 = vpow.pop %v1535
      %v1537 = vmul.f32 %v1534, 1.442695
      %v1538 = vpow.pop %v1537
      %v1539 = vadd.f32 %v1536, 1.0
      %v1540 = vadd.f32 %v1538, 1.0
      %v1541 = vrcp.pop %v1539
      %v1542 = vmul.f32 %v1539, %v1541
      %v1543 = vsub.f32 1.0, %v1542
      %v1544 = vmul.f32 %v1541, %v1543
      %v1545 = vadd.f32 %v1541, %v1544
      %vm1546 = vweird.f32 %v1539
      %vm1547 = vweird.f32 %v1541
      %vm1548 = vmor %vm1546, %vm1547
      %v1549 = vsel %vm1548, %v1541, %v1545
      %v1550 = vand.u32 2147483647, %v1539
      %vm1551 = vcmp.eq.f32.partialorder %v1550, 8.507059e+37
      %v1552 = vand.u32 %v1539, 2147483648
      %v1553 = vor.u32 1.1754944e-38, %v1552
      %v1554 = vsel %vm1551, %v1553, %v1549
      %v1555 = vmul.f32 1.0, %v1554
      %v1556 = vrcp.pop %v1540
      %v1557 = vmul.f32 %v1540, %v1556
      %v1558 = vsub.f32 1.0, %v1557
      %v1559 = vmul.f32 %v1556, %v1558
      %v1560 = vadd.f32 %v1556, %v1559
      %vm1561 = vweird.f32 %v1540
      %vm1562 = vweird.f32 %v1556
      %vm1563 = vmor %vm1561, %vm1562
      %v1564 = vsel %vm1563, %v1556, %v1560
      %v1565 = vand.u32 2147483647, %v1540
      %vm1566 = vcmp.eq.f32.partialorder %v1565, 8.507059e+37
      %v1567 = vand.u32 %v1540, 2147483648
      %v1568 = vor.u32 1.1754944e-38, %v1567
      %v1569 = vsel %vm1566, %v1568, %v1564
      %v1570 = vmul.f32 1.0, %v1569
      %v1571 = vmul.f32 %v1529, %v1555
      %v1572 = vmul.f32 %v1531, %v1570
      %v1573 = vpack.c.bf16 %v1572, %v1571
      %v1574 = vld [vmem:[%s23] sm:$0xf]
      %v1575 = vld [vmem:[%s23 + $0x4] sm:$0xf]
      %v1576 = vld [vmem:[%s23 + $0x8] sm:$0xf]
      %v1577 = vld [vmem:[%s23 + $0xc] sm:$0xf]
      %v1578 = vld [vmem:[%s23 + $0x10] sm:$0xf]
      %v1579 = vld [vmem:[%s23 + $0x14] sm:$0xf]
      %v1580 = vld [vmem:[%s23 + $0x18] sm:$0xf]
      %v1581 = vld [vmem:[%s23 + $0x1c] sm:$0xf]
      %v1582 = vld [vmem:[%s24] sm:$0x1]
      %v1584 = vperm.slane %v1582, 0
      %v1594 = vunpack.c.l.b16 %v1574
      %v1595 = vunpack.c.l.b16 %v1575
      %v1596 = vunpack.c.l.b16 %v1576
      %v1597 = vunpack.c.l.b16 %v1577
      %v1598 = vunpack.c.l.b16 %v1578
      %v1599 = vunpack.c.l.b16 %v1579
      %v1600 = vunpack.c.l.b16 %v1580
      %v1601 = vunpack.c.l.b16 %v1581
      %v1602 = vpack.c.b16 %v1595, %v1594
      %v1603 = vpack.c.b16 %v1597, %v1596
      %v1604 = vpack.c.b16 %v1599, %v1598
      %v1605 = vpack.c.b16 %v1601, %v1600
      %v1611 = vsel %vm1373, %v1573, 0
      %1613 = vmatpush.bf16.msra.mxu0 0
      %1614 = vmatpush.bf16.msra.mxu0 0
      %1615 = vmatpush.bf16.msra.mxu0 0
      %1616 = vmatpush.bf16.msra.mxu0 0
      %1617 = vmatpush.bf16.msra.mxu0 %v1605
      %1618 = vmatpush.bf16.msra.mxu0 %v1604
      %1619 = vmatpush.bf16.msra.mxu0 %v1603
      %1620 = vmatpush.bf16.msra.mxu0 %v1602
      %1621 = vmatmul.bf16.gmra.mxu0 %v1611
      %v1622 = vpop.f32.mrf.mxu0
      %v1623 = vadd.f32 %v1584, %v1622
      %v1624 = vpop.f32.mrf.mxu0
      %v1625 = vadd.f32 %v1584, %v1624
      %1626 = vdwg.mxu0
      %v1627 = vadd.f32 %v1437, %v1623
      %v1628 = vadd.f32 %v1438, %v1625
      %v1629 = vpack.c.bf16 %v1627, %v1627
      %v1630 = vpack.c.bf16 %v1628, %v1628
      %vm1631 = vcmask 257024
      %1632 = vst.msk [vmem:[%s784] sm:$0xf] %vm1631, %v1629
      %1633 = vst.msk [vmem:[%s784 + $0x4] sm:$0xf] %vm1631, %v1630
      %p1634 = scmp.lt.s32.totalorder %s36, 1
      %s1635 = scalar_select %p1634, %s36, 1
      %s1636 = smul.addr %s1635, 2
      %s1637 = smul.addr %s1636, 4
      %s1638 = scalar_lea.vmem %s25, %s1637
      // Predicated region
      $region121: #{vision_mega_forward.5} parent=119 // pred_check
        %p1639 = pneg %p589
      $region122: #{vision_mega_forward.5} parent=119 // pred_check_branch
        %1641 = sbr.rel (%p1639) target = $region124
      $region123: #{vision_mega_forward.5} parent=119 // pred_region
        _
      $region124: #{vision_mega_forward.5} parent=119 // pred_fallthru
        _
    $region120: #{vision_mega_forward.5} parent=5 // pred_fallthru
      _
    %p1642 = scmp.le.s32.totalorder 2, %s31
    // Predicated region
    $region125: #{vision_mega_forward.5} parent=5 // pred_check
      %p1643 = pneg %p1642
    $region126: #{vision_mega_forward.5} parent=5 // pred_check_branch
      %1645 = sbr.rel (%p1643) target = $region128
    $region127: #{vision_mega_forward.5} parent=5 // pred_region
      %s1646 = ssub.s32 %s31, 2
      // Predicated region
      $region129: #{vision_mega_forward.5} parent=127 // pred_check
        %p1647 = pneg %p595
      $region130: #{vision_mega_forward.5} parent=127 // pred_check_branch
        %1649 = sbr.rel (%p1647) target = $region132
      $region131: #{vision_mega_forward.5} parent=127 // pred_region
        %p1650 = scmp.lt.s32.totalorder %s37, 1
        %s1651 = scalar_select %p1650, %s37, 1
        %s1652 = smul.addr %s1651, 2
        %s1653 = smul.addr %s1652, 4
        %s1654 = scalar_lea.vmem %s25, %s1653
      $region132: #{vision_mega_forward.5} parent=127 // pred_fallthru
        _
    $region128: #{vision_mega_forward.5} parent=5 // pred_fallthru
      _
  $region6: #{vision_mega_forward.5} parent=0 // loop_footer
    %s35 = sadd.s32 1, %s31
  $region7: #{vision_mega_forward.5} parent=0 // loop_footer_branch
    %30 = sbr.rel target = $region3
  $region8: #{vision_mega_forward.5} parent=0 // loop_exit
    _

</llo_original>
